<compile_context>
chip_gen: v7x
topology: tpu7x:2x2x1
jax: 0.10.0
libtpu: 0.0.40
codegen_flags: <defaults>
</compile_context>

<pallas_src>
import jax
import jax.numpy as jnp
from jax.experimental import pallas as pl
from jax.experimental.pallas import tpu as pltpu

IN_FEATURES = 2
H1 = 8
H2 = 8
OUT_FEATURES = 1

LANE_COLS = 512        # batch samples along the lane axis (multiple of 128)
SUB_R = 8              # sub-chunk rows  (one sublane group)
SUB_C = 256            # sub-chunk lanes (2 vregs per live value)
MIN_BLOCK_ROWS = 64    # >= 128 KiB of output per grid step (amortize ~0.35 us)
MAX_BLOCK_ROWS = 256   # 512 KiB out / 1 MiB in per step; x2 buffers ~= 3 MiB VMEM
TARGET_BLOCKS = 8      # >= 4 blocks per TensorCore on v7x megacore


def _round_up(a, b):
    return ((a + b - 1) // b) * b


def _choose_block_rows(rows):
    """rows is always a multiple of SUB_R; returned block_rows is too."""
    br = max(MIN_BLOCK_ROWS, _round_up(pl.cdiv(rows, TARGET_BLOCKS), SUB_R))
    return min(br, MAX_BLOCK_ROWS, rows)


def _make_kernel(block_rows):
    n_row_chunks = block_rows // SUB_R
    n_lane_chunks = LANE_COLS // SUB_C

    def kernel(w1_ref, b1_ref, w2_ref, b2_ref, w3_ref, b3_ref, u_ref, o_ref):
        # u_ref: (2, block_rows, LANE_COLS) fused [x; t] tile in VMEM.
        # o_ref: (block_rows, LANE_COLS) output tile.
        # Weight/bias refs live in SMEM; reads are scalar loads broadcast
        # over each sub-chunk (kept just-in-time next to their FMAs).
        @pl.loop(0, n_row_chunks)
        def _(rc):
            r0 = pl.multiple_of(rc * SUB_R, SUB_R)
            for c in range(n_lane_chunks):
                c0 = c * SUB_C
                xs = u_ref[0, pl.ds(r0, SUB_R), pl.ds(c0, SUB_C)]
                ts = u_ref[1, pl.ds(r0, SUB_R), pl.ds(c0, SUB_C)]

                # fc1 (2 -> 8) + tanh: VPU FMAs, tanh on the EUP.
                h1 = [
                    jnp.tanh(w1_ref[j, 0] * xs + w1_ref[j, 1] * ts + b1_ref[j])
                    for j in range(H1)
                ]

                # fc2 (8 -> 8) + tanh, fused with out (8 -> 1) so h2 values
                # never stay live (keeps the working set ~25 vregs).
                o = None
                for k in range(H2):
                    s = w2_ref[k, 0] * h1[0] + b2_ref[k]
                    for j in range(1, H1):
                        s = s + w2_ref[k, j] * h1[j]
                    hk = jnp.tanh(s)
                    contrib = w3_ref[0, k] * hk
                    o = contrib if o is None else o + contrib

                o_ref[pl.ds(r0, SUB_R), pl.ds(c0, SUB_C)] = o + b3_ref[0]

    return kernel


def mlp_forward(x, t, params):
    """x: (N, 1) float32, t: (N, 1) float32  ->  (N, 1) float32."""
    w1, b1, w2, b2, w3, b3 = params
    n = x.shape[0]

    # Flatten the batch onto (sublane, lane).  Pad only up to a multiple of
    # 8*LANE_COLS samples so `rows` is sublane-aligned; a non-divisible last
    # *grid* block is handled by Pallas' partial-block masking, so the only
    # wrapper-side copies are this tiny pad and the final [:n] slice, both of
    # which vanish when N is already aligned.
    n_pad = _round_up(n, SUB_R * LANE_COLS)
    rows = n_pad // LANE_COLS
    block_rows = _choose_block_rows(rows)
    num_blocks = pl.cdiv(rows, block_rows)

    xt = jnp.stack([x.reshape(-1), t.reshape(-1)]).astype(jnp.float32)   # (2, N)
    if n_pad != n:
        xt = jnp.pad(xt, ((0, 0), (0, n_pad - n)))
    u = xt.reshape(2, rows, LANE_COLS)

    smem_spec = pl.BlockSpec(memory_space=pltpu.MemorySpace.SMEM)
    u_spec = pl.BlockSpec((2, block_rows, LANE_COLS), lambda i: (0, i, 0))
    o_spec = pl.BlockSpec((block_rows, LANE_COLS), lambda i: (i, 0))

    out2 = pl.pallas_call(
        _make_kernel(block_rows),
        out_shape=jax.ShapeDtypeStruct((rows, LANE_COLS), jnp.float32),
        grid_spec=pltpu.PrefetchScalarGridSpec(
            num_scalar_prefetch=0,
            grid=(num_blocks,),
            in_specs=[smem_spec] * 6 + [u_spec],
            out_specs=o_spec,
        ),
        compiler_params=pltpu.CompilerParams(
            dimension_semantics=("parallel",),
        ),
        cost_estimate=pl.CostEstimate(
            flops=176 * n_pad,
            transcendentals=16 * n_pad,
            bytes_accessed=12 * n_pad,
        ),
    )(
        w1.astype(jnp.float32), b1.astype(jnp.float32),
        w2.astype(jnp.float32), b2.astype(jnp.float32),
        w3.astype(jnp.float32), b3.astype(jnp.float32),
        u,
    )

    return out2.reshape(-1)[:n, None]                                   # (N, 1)


def init_params(key):
    """Deterministic init matching nn.Linear shapes (W: (out, in), b: (out,))."""
    ks = jax.random.split(key, 6)

    def linear(kw, kb, fan_in, fan_out):
        bound = 1.0 / jnp.sqrt(fan_in)
        w = jax.random.uniform(kw, (fan_out, fan_in), jnp.float32, -bound, bound)
        b = jax.random.uniform(kb, (fan_out,), jnp.float32, -bound, bound)
        return w, b

    w1, b1 = linear(ks[0], ks[1], IN_FEATURES, H1)
    w2, b2 = linear(ks[2], ks[3], H1, H2)
    w3, b3 = linear(ks[4], ks[5], H2, OUT_FEATURES)
    return (w1, b1, w2, b2, w3, b3)


def reference_forward(x, t, params):
    w1, b1, w2, b2, w3, b3 = params
    u = jnp.concatenate([x, t], axis=1)
    u = jnp.tanh(u @ w1.T + b1)
    u = jnp.tanh(u @ w2.T + b2)
    return u @ w3.T + b3


if __name__ == "__main__":
    key = jax.random.PRNGKey(0)
    kp, kx, kt = jax.random.split(key, 3)

    params = init_params(kp)
    # N chosen so the run exercises: the ragged-tail pad path (70000 is not a
    # multiple of 4096), a multi-step grid (rows=144, block_rows=64 -> 3
    # blocks) and a partial last grid block (16 of 64 rows valid).
    N = 70000
    x = jax.random.normal(kx, (N, 1), jnp.float32)
    t = jax.random.normal(kt, (N, 1), jnp.float32)

    fwd = jax.jit(mlp_forward)
    out = fwd(x, t, params)
    out = jax.block_until_ready(out)

    ref = reference_forward(x, t, params)
    assert out.shape == (N, 1)
    assert jnp.allclose(out, ref, atol=1e-4, rtol=1e-4), "mismatch vs JAX reference"

    print("KERNEL_OK")
</pallas_src>

<mosaic_0001>
module attributes {stable_mosaic.version = 11 : i64} {
  func.func @kernel(%arg0: i32, %arg1: memref<8x2xf32, #tpu.memory_space<smem>>, %arg2: memref<8xf32, #tpu.memory_space<smem>>, %arg3: memref<8x8xf32, #tpu.memory_space<smem>>, %arg4: memref<8xf32, #tpu.memory_space<smem>>, %arg5: memref<1x8xf32, #tpu.memory_space<smem>>, %arg6: memref<1xf32, #tpu.memory_space<smem>>, %arg7: memref<2x64x512xf32, #tpu.memory_space<vmem>>, %arg8: memref<64x512xf32, #tpu.memory_space<vmem>>) attributes {dimension_semantics = [#tpu.dimension_semantics<parallel>], iteration_bounds = array<i64: 3>, scalar_prefetch = 0 : i64, scratch_operands = 0 : i64, tpu.core_type = #tpu.core_type<tc>, window_params = [{transform_indices = @transform_0, window_bounds = array<i64: 8, 2>}, {transform_indices = @transform_1, window_bounds = array<i64: 8>}, {transform_indices = @transform_2, window_bounds = array<i64: 8, 8>}, {transform_indices = @transform_3, window_bounds = array<i64: 8>}, {transform_indices = @transform_4, window_bounds = array<i64: 1, 8>}, {transform_indices = @transform_5, window_bounds = array<i64: 1>}, {transform_indices = @transform_6, window_bounds = array<i64: 2, 64, 512>}, {transform_indices = @transform_7, window_bounds = array<i64: 64, 512>}]} {
    %c0_i32 = arith.constant 0 : i32
    %c8_i32 = arith.constant 8 : i32
    %0 = arith.addi %c0_i32, %c8_i32 : i32
    %c1_i32 = arith.constant 1 : i32
    scf.for %arg9 = %c0_i32 to %0 step %c1_i32  : i32 {
      %c1_i32_1 = arith.constant 1 : i32
      %1 = arith.muli %arg9, %c1_i32_1 : i32
      %c0_i32_2 = arith.constant 0 : i32
      %2 = arith.addi %c0_i32_2, %1 : i32
      %c8_i32_3 = arith.constant 8 : i32
      %3 = arith.muli %2, %c8_i32_3 : i32
      %4 = tpu.assume_multiple %3, 8 : i32
      %c0 = arith.constant 0 : index
      %5 = arith.index_cast %4 : i32 to index
      %c0_4 = arith.constant 0 : index
      %6 = vector.load %arg7[%c0, %5, %c0_4] : memref<2x64x512xf32, #tpu.memory_space<vmem>>, vector<1x8x256xf32>
      %7 = vector.shape_cast %6 : vector<1x8x256xf32> to vector<8x256xf32>
      %c1 = arith.constant 1 : index
      %8 = arith.index_cast %4 : i32 to index
      %c0_5 = arith.constant 0 : index
      %9 = vector.load %arg7[%c1, %8, %c0_5] : memref<2x64x512xf32, #tpu.memory_space<vmem>>, vector<1x8x256xf32>
      %10 = vector.shape_cast %9 : vector<1x8x256xf32> to vector<8x256xf32>
      %c0_6 = arith.constant 0 : index
      %c0_7 = arith.constant 0 : index
      %11 = memref.load %arg1[%c0_6, %c0_7] : memref<8x2xf32, #tpu.memory_space<smem>>
      %12 = vector.broadcast %11 : f32 to vector<8x256xf32>
      %13 = arith.mulf %12, %7 : vector<8x256xf32>
      %c0_8 = arith.constant 0 : index
      %c1_9 = arith.constant 1 : index
      %14 = memref.load %arg1[%c0_8, %c1_9] : memref<8x2xf32, #tpu.memory_space<smem>>
      %15 = vector.broadcast %14 : f32 to vector<8x256xf32>
      %16 = arith.mulf %15, %10 : vector<8x256xf32>
      %17 = arith.addf %13, %16 : vector<8x256xf32>
      %c0_10 = arith.constant 0 : index
      %18 = memref.load %arg2[%c0_10] : memref<8xf32, #tpu.memory_space<smem>>
      %19 = vector.broadcast %18 : f32 to vector<8x256xf32>
      %20 = arith.addf %17, %19 : vector<8x256xf32>
      %21 = math.tanh %20 : vector<8x256xf32>
      %c1_11 = arith.constant 1 : index
      %c0_12 = arith.constant 0 : index
      %22 = memref.load %arg1[%c1_11, %c0_12] : memref<8x2xf32, #tpu.memory_space<smem>>
      %23 = vector.broadcast %22 : f32 to vector<8x256xf32>
      %24 = arith.mulf %23, %7 : vector<8x256xf32>
      %c1_13 = arith.constant 1 : index
      %c1_14 = arith.constant 1 : index
      %25 = memref.load %arg1[%c1_13, %c1_14] : memref<8x2xf32, #tpu.memory_space<smem>>
      %26 = vector.broadcast %25 : f32 to vector<8x256xf32>
      %27 = arith.mulf %26, %10 : vector<8x256xf32>
      %28 = arith.addf %24, %27 : vector<8x256xf32>
      %c1_15 = arith.constant 1 : index
      %29 = memref.load %arg2[%c1_15] : memref<8xf32, #tpu.memory_space<smem>>
      %30 = vector.broadcast %29 : f32 to vector<8x256xf32>
      %31 = arith.addf %28, %30 : vector<8x256xf32>
      %32 = math.tanh %31 : vector<8x256xf32>
      %c2 = arith.constant 2 : index
      %c0_16 = arith.constant 0 : index
      %33 = memref.load %arg1[%c2, %c0_16] : memref<8x2xf32, #tpu.memory_space<smem>>
      %34 = vector.broadcast %33 : f32 to vector<8x256xf32>
      %35 = arith.mulf %34, %7 : vector<8x256xf32>
      %c2_17 = arith.constant 2 : index
      %c1_18 = arith.constant 1 : index
      %36 = memref.load %arg1[%c2_17, %c1_18] : memref<8x2xf32, #tpu.memory_space<smem>>
      %37 = vector.broadcast %36 : f32 to vector<8x256xf32>
      %38 = arith.mulf %37, %10 : vector<8x256xf32>
      %39 = arith.addf %35, %38 : vector<8x256xf32>
      %c2_19 = arith.constant 2 : index
      %40 = memref.load %arg2[%c2_19] : memref<8xf32, #tpu.memory_space<smem>>
      %41 = vector.broadcast %40 : f32 to vector<8x256xf32>
      %42 = arith.addf %39, %41 : vector<8x256xf32>
      %43 = math.tanh %42 : vector<8x256xf32>
      %c3 = arith.constant 3 : index
      %c0_20 = arith.constant 0 : index
      %44 = memref.load %arg1[%c3, %c0_20] : memref<8x2xf32, #tpu.memory_space<smem>>
      %45 = vector.broadcast %44 : f32 to vector<8x256xf32>
      %46 = arith.mulf %45, %7 : vector<8x256xf32>
      %c3_21 = arith.constant 3 : index
      %c1_22 = arith.constant 1 : index
      %47 = memref.load %arg1[%c3_21, %c1_22] : memref<8x2xf32, #tpu.memory_space<smem>>
      %48 = vector.broadcast %47 : f32 to vector<8x256xf32>
      %49 = arith.mulf %48, %10 : vector<8x256xf32>
      %50 = arith.addf %46, %49 : vector<8x256xf32>
      %c3_23 = arith.constant 3 : index
      %51 = memref.load %arg2[%c3_23] : memref<8xf32, #tpu.memory_space<smem>>
      %52 = vector.broadcast %51 : f32 to vector<8x256xf32>
      %53 = arith.addf %50, %52 : vector<8x256xf32>
      %54 = math.tanh %53 : vector<8x256xf32>
      %c4 = arith.constant 4 : index
      %c0_24 = arith.constant 0 : index
      %55 = memref.load %arg1[%c4, %c0_24] : memref<8x2xf32, #tpu.memory_space<smem>>
      %56 = vector.broadcast %55 : f32 to vector<8x256xf32>
      %57 = arith.mulf %56, %7 : vector<8x256xf32>
      %c4_25 = arith.constant 4 : index
      %c1_26 = arith.constant 1 : index
      %58 = memref.load %arg1[%c4_25, %c1_26] : memref<8x2xf32, #tpu.memory_space<smem>>
      %59 = vector.broadcast %58 : f32 to vector<8x256xf32>
      %60 = arith.mulf %59, %10 : vector<8x256xf32>
      %61 = arith.addf %57, %60 : vector<8x256xf32>
      %c4_27 = arith.constant 4 : index
      %62 = memref.load %arg2[%c4_27] : memref<8xf32, #tpu.memory_space<smem>>
      %63 = vector.broadcast %62 : f32 to vector<8x256xf32>
      %64 = arith.addf %61, %63 : vector<8x256xf32>
      %65 = math.tanh %64 : vector<8x256xf32>
      %c5 = arith.constant 5 : index
      %c0_28 = arith.constant 0 : index
      %66 = memref.load %arg1[%c5, %c0_28] : memref<8x2xf32, #tpu.memory_space<smem>>
      %67 = vector.broadcast %66 : f32 to vector<8x256xf32>
      %68 = arith.mulf %67, %7 : vector<8x256xf32>
      %c5_29 = arith.constant 5 : index
      %c1_30 = arith.constant 1 : index
      %69 = memref.load %arg1[%c5_29, %c1_30] : memref<8x2xf32, #tpu.memory_space<smem>>
      %70 = vector.broadcast %69 : f32 to vector<8x256xf32>
      %71 = arith.mulf %70, %10 : vector<8x256xf32>
      %72 = arith.addf %68, %71 : vector<8x256xf32>
      %c5_31 = arith.constant 5 : index
      %73 = memref.load %arg2[%c5_31] : memref<8xf32, #tpu.memory_space<smem>>
      %74 = vector.broadcast %73 : f32 to vector<8x256xf32>
      %75 = arith.addf %72, %74 : vector<8x256xf32>
      %76 = math.tanh %75 : vector<8x256xf32>
      %c6 = arith.constant 6 : index
      %c0_32 = arith.constant 0 : index
      %77 = memref.load %arg1[%c6, %c0_32] : memref<8x2xf32, #tpu.memory_space<smem>>
      %78 = vector.broadcast %77 : f32 to vector<8x256xf32>
      %79 = arith.mulf %78, %7 : vector<8x256xf32>
      %c6_33 = arith.constant 6 : index
      %c1_34 = arith.constant 1 : index
      %80 = memref.load %arg1[%c6_33, %c1_34] : memref<8x2xf32, #tpu.memory_space<smem>>
      %81 = vector.broadcast %80 : f32 to vector<8x256xf32>
      %82 = arith.mulf %81, %10 : vector<8x256xf32>
      %83 = arith.addf %79, %82 : vector<8x256xf32>
      %c6_35 = arith.constant 6 : index
      %84 = memref.load %arg2[%c6_35] : memref<8xf32, #tpu.memory_space<smem>>
      %85 = vector.broadcast %84 : f32 to vector<8x256xf32>
      %86 = arith.addf %83, %85 : vector<8x256xf32>
      %87 = math.tanh %86 : vector<8x256xf32>
      %c7 = arith.constant 7 : index
      %c0_36 = arith.constant 0 : index
      %88 = memref.load %arg1[%c7, %c0_36] : memref<8x2xf32, #tpu.memory_space<smem>>
      %89 = vector.broadcast %88 : f32 to vector<8x256xf32>
      %90 = arith.mulf %89, %7 : vector<8x256xf32>
      %c7_37 = arith.constant 7 : index
      %c1_38 = arith.constant 1 : index
      %91 = memref.load %arg1[%c7_37, %c1_38] : memref<8x2xf32, #tpu.memory_space<smem>>
      %92 = vector.broadcast %91 : f32 to vector<8x256xf32>
      %93 = arith.mulf %92, %10 : vector<8x256xf32>
      %94 = arith.addf %90, %93 : vector<8x256xf32>
      %c7_39 = arith.constant 7 : index
      %95 = memref.load %arg2[%c7_39] : memref<8xf32, #tpu.memory_space<smem>>
      %96 = vector.broadcast %95 : f32 to vector<8x256xf32>
      %97 = arith.addf %94, %96 : vector<8x256xf32>
      %98 = math.tanh %97 : vector<8x256xf32>
      %c0_40 = arith.constant 0 : index
      %c0_41 = arith.constant 0 : index
      %99 = memref.load %arg3[%c0_40, %c0_41] : memref<8x8xf32, #tpu.memory_space<smem>>
      %100 = vector.broadcast %99 : f32 to vector<8x256xf32>
      %101 = arith.mulf %100, %21 : vector<8x256xf32>
      %c0_42 = arith.constant 0 : index
      %102 = memref.load %arg4[%c0_42] : memref<8xf32, #tpu.memory_space<smem>>
      %103 = vector.broadcast %102 : f32 to vector<8x256xf32>
      %104 = arith.addf %101, %103 : vector<8x256xf32>
      %c0_43 = arith.constant 0 : index
      %c1_44 = arith.constant 1 : index
      %105 = memref.load %arg3[%c0_43, %c1_44] : memref<8x8xf32, #tpu.memory_space<smem>>
      %106 = vector.broadcast %105 : f32 to vector<8x256xf32>
      %107 = arith.mulf %106, %32 : vector<8x256xf32>
      %108 = arith.addf %104, %107 : vector<8x256xf32>
      %c0_45 = arith.constant 0 : index
      %c2_46 = arith.constant 2 : index
      %109 = memref.load %arg3[%c0_45, %c2_46] : memref<8x8xf32, #tpu.memory_space<smem>>
      %110 = vector.broadcast %109 : f32 to vector<8x256xf32>
      %111 = arith.mulf %110, %43 : vector<8x256xf32>
      %112 = arith.addf %108, %111 : vector<8x256xf32>
      %c0_47 = arith.constant 0 : index
      %c3_48 = arith.constant 3 : index
      %113 = memref.load %arg3[%c0_47, %c3_48] : memref<8x8xf32, #tpu.memory_space<smem>>
      %114 = vector.broadcast %113 : f32 to vector<8x256xf32>
      %115 = arith.mulf %114, %54 : vector<8x256xf32>
      %116 = arith.addf %112, %115 : vector<8x256xf32>
      %c0_49 = arith.constant 0 : index
      %c4_50 = arith.constant 4 : index
      %117 = memref.load %arg3[%c0_49, %c4_50] : memref<8x8xf32, #tpu.memory_space<smem>>
      %118 = vector.broadcast %117 : f32 to vector<8x256xf32>
      %119 = arith.mulf %118, %65 : vector<8x256xf32>
      %120 = arith.addf %116, %119 : vector<8x256xf32>
      %c0_51 = arith.constant 0 : index
      %c5_52 = arith.constant 5 : index
      %121 = memref.load %arg3[%c0_51, %c5_52] : memref<8x8xf32, #tpu.memory_space<smem>>
      %122 = vector.broadcast %121 : f32 to vector<8x256xf32>
      %123 = arith.mulf %122, %76 : vector<8x256xf32>
      %124 = arith.addf %120, %123 : vector<8x256xf32>
      %c0_53 = arith.constant 0 : index
      %c6_54 = arith.constant 6 : index
      %125 = memref.load %arg3[%c0_53, %c6_54] : memref<8x8xf32, #tpu.memory_space<smem>>
      %126 = vector.broadcast %125 : f32 to vector<8x256xf32>
      %127 = arith.mulf %126, %87 : vector<8x256xf32>
      %128 = arith.addf %124, %127 : vector<8x256xf32>
      %c0_55 = arith.constant 0 : index
      %c7_56 = arith.constant 7 : index
      %129 = memref.load %arg3[%c0_55, %c7_56] : memref<8x8xf32, #tpu.memory_space<smem>>
      %130 = vector.broadcast %129 : f32 to vector<8x256xf32>
      %131 = arith.mulf %130, %98 : vector<8x256xf32>
      %132 = arith.addf %128, %131 : vector<8x256xf32>
      %133 = math.tanh %132 : vector<8x256xf32>
      %c0_57 = arith.constant 0 : index
      %c0_58 = arith.constant 0 : index
      %134 = memref.load %arg5[%c0_57, %c0_58] : memref<1x8xf32, #tpu.memory_space<smem>>
      %135 = vector.broadcast %134 : f32 to vector<8x256xf32>
      %136 = arith.mulf %135, %133 : vector<8x256xf32>
      %c1_59 = arith.constant 1 : index
      %c0_60 = arith.constant 0 : index
      %137 = memref.load %arg3[%c1_59, %c0_60] : memref<8x8xf32, #tpu.memory_space<smem>>
      %138 = vector.broadcast %137 : f32 to vector<8x256xf32>
      %139 = arith.mulf %138, %21 : vector<8x256xf32>
      %c1_61 = arith.constant 1 : index
      %140 = memref.load %arg4[%c1_61] : memref<8xf32, #tpu.memory_space<smem>>
      %141 = vector.broadcast %140 : f32 to vector<8x256xf32>
      %142 = arith.addf %139, %141 : vector<8x256xf32>
      %c1_62 = arith.constant 1 : index
      %c1_63 = arith.constant 1 : index
      %143 = memref.load %arg3[%c1_62, %c1_63] : memref<8x8xf32, #tpu.memory_space<smem>>
      %144 = vector.broadcast %143 : f32 to vector<8x256xf32>
      %145 = arith.mulf %144, %32 : vector<8x256xf32>
      %146 = arith.addf %142, %145 : vector<8x256xf32>
      %c1_64 = arith.constant 1 : index
      %c2_65 = arith.constant 2 : index
      %147 = memref.load %arg3[%c1_64, %c2_65] : memref<8x8xf32, #tpu.memory_space<smem>>
      %148 = vector.broadcast %147 : f32 to vector<8x256xf32>
      %149 = arith.mulf %148, %43 : vector<8x256xf32>
      %150 = arith.addf %146, %149 : vector<8x256xf32>
      %c1_66 = arith.constant 1 : index
      %c3_67 = arith.constant 3 : index
      %151 = memref.load %arg3[%c1_66, %c3_67] : memref<8x8xf32, #tpu.memory_space<smem>>
      %152 = vector.broadcast %151 : f32 to vector<8x256xf32>
      %153 = arith.mulf %152, %54 : vector<8x256xf32>
      %154 = arith.addf %150, %153 : vector<8x256xf32>
      %c1_68 = arith.constant 1 : index
      %c4_69 = arith.constant 4 : index
      %155 = memref.load %arg3[%c1_68, %c4_69] : memref<8x8xf32, #tpu.memory_space<smem>>
      %156 = vector.broadcast %155 : f32 to vector<8x256xf32>
      %157 = arith.mulf %156, %65 : vector<8x256xf32>
      %158 = arith.addf %154, %157 : vector<8x256xf32>
      %c1_70 = arith.constant 1 : index
      %c5_71 = arith.constant 5 : index
      %159 = memref.load %arg3[%c1_70, %c5_71] : memref<8x8xf32, #tpu.memory_space<smem>>
      %160 = vector.broadcast %159 : f32 to vector<8x256xf32>
      %161 = arith.mulf %160, %76 : vector<8x256xf32>
      %162 = arith.addf %158, %161 : vector<8x256xf32>
      %c1_72 = arith.constant 1 : index
      %c6_73 = arith.constant 6 : index
      %163 = memref.load %arg3[%c1_72, %c6_73] : memref<8x8xf32, #tpu.memory_space<smem>>
      %164 = vector.broadcast %163 : f32 to vector<8x256xf32>
      %165 = arith.mulf %164, %87 : vector<8x256xf32>
      %166 = arith.addf %162, %165 : vector<8x256xf32>
      %c1_74 = arith.constant 1 : index
      %c7_75 = arith.constant 7 : index
      %167 = memref.load %arg3[%c1_74, %c7_75] : memref<8x8xf32, #tpu.memory_space<smem>>
      %168 = vector.broadcast %167 : f32 to vector<8x256xf32>
      %169 = arith.mulf %168, %98 : vector<8x256xf32>
      %170 = arith.addf %166, %169 : vector<8x256xf32>
      %171 = math.tanh %170 : vector<8x256xf32>
      %c0_76 = arith.constant 0 : index
      %c1_77 = arith.constant 1 : index
      %172 = memref.load %arg5[%c0_76, %c1_77] : memref<1x8xf32, #tpu.memory_space<smem>>
      %173 = vector.broadcast %172 : f32 to vector<8x256xf32>
      %174 = arith.mulf %173, %171 : vector<8x256xf32>
      %175 = arith.addf %136, %174 : vector<8x256xf32>
      %c2_78 = arith.constant 2 : index
      %c0_79 = arith.constant 0 : index
      %176 = memref.load %arg3[%c2_78, %c0_79] : memref<8x8xf32, #tpu.memory_space<smem>>
      %177 = vector.broadcast %176 : f32 to vector<8x256xf32>
      %178 = arith.mulf %177, %21 : vector<8x256xf32>
      %c2_80 = arith.constant 2 : index
      %179 = memref.load %arg4[%c2_80] : memref<8xf32, #tpu.memory_space<smem>>
      %180 = vector.broadcast %179 : f32 to vector<8x256xf32>
      %181 = arith.addf %178, %180 : vector<8x256xf32>
      %c2_81 = arith.constant 2 : index
      %c1_82 = arith.constant 1 : index
      %182 = memref.load %arg3[%c2_81, %c1_82] : memref<8x8xf32, #tpu.memory_space<smem>>
      %183 = vector.broadcast %182 : f32 to vector<8x256xf32>
      %184 = arith.mulf %183, %32 : vector<8x256xf32>
      %185 = arith.addf %181, %184 : vector<8x256xf32>
      %c2_83 = arith.constant 2 : index
      %c2_84 = arith.constant 2 : index
      %186 = memref.load %arg3[%c2_83, %c2_84] : memref<8x8xf32, #tpu.memory_space<smem>>
      %187 = vector.broadcast %186 : f32 to vector<8x256xf32>
      %188 = arith.mulf %187, %43 : vector<8x256xf32>
      %189 = arith.addf %185, %188 : vector<8x256xf32>
      %c2_85 = arith.constant 2 : index
      %c3_86 = arith.constant 3 : index
      %190 = memref.load %arg3[%c2_85, %c3_86] : memref<8x8xf32, #tpu.memory_space<smem>>
      %191 = vector.broadcast %190 : f32 to vector<8x256xf32>
      %192 = arith.mulf %191, %54 : vector<8x256xf32>
      %193 = arith.addf %189, %192 : vector<8x256xf32>
      %c2_87 = arith.constant 2 : index
      %c4_88 = arith.constant 4 : index
      %194 = memref.load %arg3[%c2_87, %c4_88] : memref<8x8xf32, #tpu.memory_space<smem>>
      %195 = vector.broadcast %194 : f32 to vector<8x256xf32>
      %196 = arith.mulf %195, %65 : vector<8x256xf32>
      %197 = arith.addf %193, %196 : vector<8x256xf32>
      %c2_89 = arith.constant 2 : index
      %c5_90 = arith.constant 5 : index
      %198 = memref.load %arg3[%c2_89, %c5_90] : memref<8x8xf32, #tpu.memory_space<smem>>
      %199 = vector.broadcast %198 : f32 to vector<8x256xf32>
      %200 = arith.mulf %199, %76 : vector<8x256xf32>
      %201 = arith.addf %197, %200 : vector<8x256xf32>
      %c2_91 = arith.constant 2 : index
      %c6_92 = arith.constant 6 : index
      %202 = memref.load %arg3[%c2_91, %c6_92] : memref<8x8xf32, #tpu.memory_space<smem>>
      %203 = vector.broadcast %202 : f32 to vector<8x256xf32>
      %204 = arith.mulf %203, %87 : vector<8x256xf32>
      %205 = arith.addf %201, %204 : vector<8x256xf32>
      %c2_93 = arith.constant 2 : index
      %c7_94 = arith.constant 7 : index
      %206 = memref.load %arg3[%c2_93, %c7_94] : memref<8x8xf32, #tpu.memory_space<smem>>
      %207 = vector.broadcast %206 : f32 to vector<8x256xf32>
      %208 = arith.mulf %207, %98 : vector<8x256xf32>
      %209 = arith.addf %205, %208 : vector<8x256xf32>
      %210 = math.tanh %209 : vector<8x256xf32>
      %c0_95 = arith.constant 0 : index
      %c2_96 = arith.constant 2 : index
      %211 = memref.load %arg5[%c0_95, %c2_96] : memref<1x8xf32, #tpu.memory_space<smem>>
      %212 = vector.broadcast %211 : f32 to vector<8x256xf32>
      %213 = arith.mulf %212, %210 : vector<8x256xf32>
      %214 = arith.addf %175, %213 : vector<8x256xf32>
      %c3_97 = arith.constant 3 : index
      %c0_98 = arith.constant 0 : index
      %215 = memref.load %arg3[%c3_97, %c0_98] : memref<8x8xf32, #tpu.memory_space<smem>>
      %216 = vector.broadcast %215 : f32 to vector<8x256xf32>
      %217 = arith.mulf %216, %21 : vector<8x256xf32>
      %c3_99 = arith.constant 3 : index
      %218 = memref.load %arg4[%c3_99] : memref<8xf32, #tpu.memory_space<smem>>
      %219 = vector.broadcast %218 : f32 to vector<8x256xf32>
      %220 = arith.addf %217, %219 : vector<8x256xf32>
      %c3_100 = arith.constant 3 : index
      %c1_101 = arith.constant 1 : index
      %221 = memref.load %arg3[%c3_100, %c1_101] : memref<8x8xf32, #tpu.memory_space<smem>>
      %222 = vector.broadcast %221 : f32 to vector<8x256xf32>
      %223 = arith.mulf %222, %32 : vector<8x256xf32>
      %224 = arith.addf %220, %223 : vector<8x256xf32>
      %c3_102 = arith.constant 3 : index
      %c2_103 = arith.constant 2 : index
      %225 = memref.load %arg3[%c3_102, %c2_103] : memref<8x8xf32, #tpu.memory_space<smem>>
      %226 = vector.broadcast %225 : f32 to vector<8x256xf32>
      %227 = arith.mulf %226, %43 : vector<8x256xf32>
      %228 = arith.addf %224, %227 : vector<8x256xf32>
      %c3_104 = arith.constant 3 : index
      %c3_105 = arith.constant 3 : index
      %229 = memref.load %arg3[%c3_104, %c3_105] : memref<8x8xf32, #tpu.memory_space<smem>>
      %230 = vector.broadcast %229 : f32 to vector<8x256xf32>
      %231 = arith.mulf %230, %54 : vector<8x256xf32>
      %232 = arith.addf %228, %231 : vector<8x256xf32>
      %c3_106 = arith.constant 3 : index
      %c4_107 = arith.constant 4 : index
      %233 = memref.load %arg3[%c3_106, %c4_107] : memref<8x8xf32, #tpu.memory_space<smem>>
      %234 = vector.broadcast %233 : f32 to vector<8x256xf32>
      %235 = arith.mulf %234, %65 : vector<8x256xf32>
      %236 = arith.addf %232, %235 : vector<8x256xf32>
      %c3_108 = arith.constant 3 : index
      %c5_109 = arith.constant 5 : index
      %237 = memref.load %arg3[%c3_108, %c5_109] : memref<8x8xf32, #tpu.memory_space<smem>>
      %238 = vector.broadcast %237 : f32 to vector<8x256xf32>
      %239 = arith.mulf %238, %76 : vector<8x256xf32>
      %240 = arith.addf %236, %239 : vector<8x256xf32>
      %c3_110 = arith.constant 3 : index
      %c6_111 = arith.constant 6 : index
      %241 = memref.load %arg3[%c3_110, %c6_111] : memref<8x8xf32, #tpu.memory_space<smem>>
      %242 = vector.broadcast %241 : f32 to vector<8x256xf32>
      %243 = arith.mulf %242, %87 : vector<8x256xf32>
      %244 = arith.addf %240, %243 : vector<8x256xf32>
      %c3_112 = arith.constant 3 : index
      %c7_113 = arith.constant 7 : index
      %245 = memref.load %arg3[%c3_112, %c7_113] : memref<8x8xf32, #tpu.memory_space<smem>>
      %246 = vector.broadcast %245 : f32 to vector<8x256xf32>
      %247 = arith.mulf %246, %98 : vector<8x256xf32>
      %248 = arith.addf %244, %247 : vector<8x256xf32>
      %249 = math.tanh %248 : vector<8x256xf32>
      %c0_114 = arith.constant 0 : index
      %c3_115 = arith.constant 3 : index
      %250 = memref.load %arg5[%c0_114, %c3_115] : memref<1x8xf32, #tpu.memory_space<smem>>
      %251 = vector.broadcast %250 : f32 to vector<8x256xf32>
      %252 = arith.mulf %251, %249 : vector<8x256xf32>
      %253 = arith.addf %214, %252 : vector<8x256xf32>
      %c4_116 = arith.constant 4 : index
      %c0_117 = arith.constant 0 : index
      %254 = memref.load %arg3[%c4_116, %c0_117] : memref<8x8xf32, #tpu.memory_space<smem>>
      %255 = vector.broadcast %254 : f32 to vector<8x256xf32>
      %256 = arith.mulf %255, %21 : vector<8x256xf32>
      %c4_118 = arith.constant 4 : index
      %257 = memref.load %arg4[%c4_118] : memref<8xf32, #tpu.memory_space<smem>>
      %258 = vector.broadcast %257 : f32 to vector<8x256xf32>
      %259 = arith.addf %256, %258 : vector<8x256xf32>
      %c4_119 = arith.constant 4 : index
      %c1_120 = arith.constant 1 : index
      %260 = memref.load %arg3[%c4_119, %c1_120] : memref<8x8xf32, #tpu.memory_space<smem>>
      %261 = vector.broadcast %260 : f32 to vector<8x256xf32>
      %262 = arith.mulf %261, %32 : vector<8x256xf32>
      %263 = arith.addf %259, %262 : vector<8x256xf32>
      %c4_121 = arith.constant 4 : index
      %c2_122 = arith.constant 2 : index
      %264 = memref.load %arg3[%c4_121, %c2_122] : memref<8x8xf32, #tpu.memory_space<smem>>
      %265 = vector.broadcast %264 : f32 to vector<8x256xf32>
      %266 = arith.mulf %265, %43 : vector<8x256xf32>
      %267 = arith.addf %263, %266 : vector<8x256xf32>
      %c4_123 = arith.constant 4 : index
      %c3_124 = arith.constant 3 : index
      %268 = memref.load %arg3[%c4_123, %c3_124] : memref<8x8xf32, #tpu.memory_space<smem>>
      %269 = vector.broadcast %268 : f32 to vector<8x256xf32>
      %270 = arith.mulf %269, %54 : vector<8x256xf32>
      %271 = arith.addf %267, %270 : vector<8x256xf32>
      %c4_125 = arith.constant 4 : index
      %c4_126 = arith.constant 4 : index
      %272 = memref.load %arg3[%c4_125, %c4_126] : memref<8x8xf32, #tpu.memory_space<smem>>
      %273 = vector.broadcast %272 : f32 to vector<8x256xf32>
      %274 = arith.mulf %273, %65 : vector<8x256xf32>
      %275 = arith.addf %271, %274 : vector<8x256xf32>
      %c4_127 = arith.constant 4 : index
      %c5_128 = arith.constant 5 : index
      %276 = memref.load %arg3[%c4_127, %c5_128] : memref<8x8xf32, #tpu.memory_space<smem>>
      %277 = vector.broadcast %276 : f32 to vector<8x256xf32>
      %278 = arith.mulf %277, %76 : vector<8x256xf32>
      %279 = arith.addf %275, %278 : vector<8x256xf32>
      %c4_129 = arith.constant 4 : index
      %c6_130 = arith.constant 6 : index
      %280 = memref.load %arg3[%c4_129, %c6_130] : memref<8x8xf32, #tpu.memory_space<smem>>
      %281 = vector.broadcast %280 : f32 to vector<8x256xf32>
      %282 = arith.mulf %281, %87 : vector<8x256xf32>
      %283 = arith.addf %279, %282 : vector<8x256xf32>
      %c4_131 = arith.constant 4 : index
      %c7_132 = arith.constant 7 : index
      %284 = memref.load %arg3[%c4_131, %c7_132] : memref<8x8xf32, #tpu.memory_space<smem>>
      %285 = vector.broadcast %284 : f32 to vector<8x256xf32>
      %286 = arith.mulf %285, %98 : vector<8x256xf32>
      %287 = arith.addf %283, %286 : vector<8x256xf32>
      %288 = math.tanh %287 : vector<8x256xf32>
      %c0_133 = arith.constant 0 : index
      %c4_134 = arith.constant 4 : index
      %289 = memref.load %arg5[%c0_133, %c4_134] : memref<1x8xf32, #tpu.memory_space<smem>>
      %290 = vector.broadcast %289 : f32 to vector<8x256xf32>
      %291 = arith.mulf %290, %288 : vector<8x256xf32>
      %292 = arith.addf %253, %291 : vector<8x256xf32>
      %c5_135 = arith.constant 5 : index
      %c0_136 = arith.constant 0 : index
      %293 = memref.load %arg3[%c5_135, %c0_136] : memref<8x8xf32, #tpu.memory_space<smem>>
      %294 = vector.broadcast %293 : f32 to vector<8x256xf32>
      %295 = arith.mulf %294, %21 : vector<8x256xf32>
      %c5_137 = arith.constant 5 : index
      %296 = memref.load %arg4[%c5_137] : memref<8xf32, #tpu.memory_space<smem>>
      %297 = vector.broadcast %296 : f32 to vector<8x256xf32>
      %298 = arith.addf %295, %297 : vector<8x256xf32>
      %c5_138 = arith.constant 5 : index
      %c1_139 = arith.constant 1 : index
      %299 = memref.load %arg3[%c5_138, %c1_139] : memref<8x8xf32, #tpu.memory_space<smem>>
      %300 = vector.broadcast %299 : f32 to vector<8x256xf32>
      %301 = arith.mulf %300, %32 : vector<8x256xf32>
      %302 = arith.addf %298, %301 : vector<8x256xf32>
      %c5_140 = arith.constant 5 : index
      %c2_141 = arith.constant 2 : index
      %303 = memref.load %arg3[%c5_140, %c2_141] : memref<8x8xf32, #tpu.memory_space<smem>>
      %304 = vector.broadcast %303 : f32 to vector<8x256xf32>
      %305 = arith.mulf %304, %43 : vector<8x256xf32>
      %306 = arith.addf %302, %305 : vector<8x256xf32>
      %c5_142 = arith.constant 5 : index
      %c3_143 = arith.constant 3 : index
      %307 = memref.load %arg3[%c5_142, %c3_143] : memref<8x8xf32, #tpu.memory_space<smem>>
      %308 = vector.broadcast %307 : f32 to vector<8x256xf32>
      %309 = arith.mulf %308, %54 : vector<8x256xf32>
      %310 = arith.addf %306, %309 : vector<8x256xf32>
      %c5_144 = arith.constant 5 : index
      %c4_145 = arith.constant 4 : index
      %311 = memref.load %arg3[%c5_144, %c4_145] : memref<8x8xf32, #tpu.memory_space<smem>>
      %312 = vector.broadcast %311 : f32 to vector<8x256xf32>
      %313 = arith.mulf %312, %65 : vector<8x256xf32>
      %314 = arith.addf %310, %313 : vector<8x256xf32>
      %c5_146 = arith.constant 5 : index
      %c5_147 = arith.constant 5 : index
      %315 = memref.load %arg3[%c5_146, %c5_147] : memref<8x8xf32, #tpu.memory_space<smem>>
      %316 = vector.broadcast %315 : f32 to vector<8x256xf32>
      %317 = arith.mulf %316, %76 : vector<8x256xf32>
      %318 = arith.addf %314, %317 : vector<8x256xf32>
      %c5_148 = arith.constant 5 : index
      %c6_149 = arith.constant 6 : index
      %319 = memref.load %arg3[%c5_148, %c6_149] : memref<8x8xf32, #tpu.memory_space<smem>>
      %320 = vector.broadcast %319 : f32 to vector<8x256xf32>
      %321 = arith.mulf %320, %87 : vector<8x256xf32>
      %322 = arith.addf %318, %321 : vector<8x256xf32>
      %c5_150 = arith.constant 5 : index
      %c7_151 = arith.constant 7 : index
      %323 = memref.load %arg3[%c5_150, %c7_151] : memref<8x8xf32, #tpu.memory_space<smem>>
      %324 = vector.broadcast %323 : f32 to vector<8x256xf32>
      %325 = arith.mulf %324, %98 : vector<8x256xf32>
      %326 = arith.addf %322, %325 : vector<8x256xf32>
      %327 = math.tanh %326 : vector<8x256xf32>
      %c0_152 = arith.constant 0 : index
      %c5_153 = arith.constant 5 : index
      %328 = memref.load %arg5[%c0_152, %c5_153] : memref<1x8xf32, #tpu.memory_space<smem>>
      %329 = vector.broadcast %328 : f32 to vector<8x256xf32>
      %330 = arith.mulf %329, %327 : vector<8x256xf32>
      %331 = arith.addf %292, %330 : vector<8x256xf32>
      %c6_154 = arith.constant 6 : index
      %c0_155 = arith.constant 0 : index
      %332 = memref.load %arg3[%c6_154, %c0_155] : memref<8x8xf32, #tpu.memory_space<smem>>
      %333 = vector.broadcast %332 : f32 to vector<8x256xf32>
      %334 = arith.mulf %333, %21 : vector<8x256xf32>
      %c6_156 = arith.constant 6 : index
      %335 = memref.load %arg4[%c6_156] : memref<8xf32, #tpu.memory_space<smem>>
      %336 = vector.broadcast %335 : f32 to vector<8x256xf32>
      %337 = arith.addf %334, %336 : vector<8x256xf32>
      %c6_157 = arith.constant 6 : index
      %c1_158 = arith.constant 1 : index
      %338 = memref.load %arg3[%c6_157, %c1_158] : memref<8x8xf32, #tpu.memory_space<smem>>
      %339 = vector.broadcast %338 : f32 to vector<8x256xf32>
      %340 = arith.mulf %339, %32 : vector<8x256xf32>
      %341 = arith.addf %337, %340 : vector<8x256xf32>
      %c6_159 = arith.constant 6 : index
      %c2_160 = arith.constant 2 : index
      %342 = memref.load %arg3[%c6_159, %c2_160] : memref<8x8xf32, #tpu.memory_space<smem>>
      %343 = vector.broadcast %342 : f32 to vector<8x256xf32>
      %344 = arith.mulf %343, %43 : vector<8x256xf32>
      %345 = arith.addf %341, %344 : vector<8x256xf32>
      %c6_161 = arith.constant 6 : index
      %c3_162 = arith.constant 3 : index
      %346 = memref.load %arg3[%c6_161, %c3_162] : memref<8x8xf32, #tpu.memory_space<smem>>
      %347 = vector.broadcast %346 : f32 to vector<8x256xf32>
      %348 = arith.mulf %347, %54 : vector<8x256xf32>
      %349 = arith.addf %345, %348 : vector<8x256xf32>
      %c6_163 = arith.constant 6 : index
      %c4_164 = arith.constant 4 : index
      %350 = memref.load %arg3[%c6_163, %c4_164] : memref<8x8xf32, #tpu.memory_space<smem>>
      %351 = vector.broadcast %350 : f32 to vector<8x256xf32>
      %352 = arith.mulf %351, %65 : vector<8x256xf32>
      %353 = arith.addf %349, %352 : vector<8x256xf32>
      %c6_165 = arith.constant 6 : index
      %c5_166 = arith.constant 5 : index
      %354 = memref.load %arg3[%c6_165, %c5_166] : memref<8x8xf32, #tpu.memory_space<smem>>
      %355 = vector.broadcast %354 : f32 to vector<8x256xf32>
      %356 = arith.mulf %355, %76 : vector<8x256xf32>
      %357 = arith.addf %353, %356 : vector<8x256xf32>
      %c6_167 = arith.constant 6 : index
      %c6_168 = arith.constant 6 : index
      %358 = memref.load %arg3[%c6_167, %c6_168] : memref<8x8xf32, #tpu.memory_space<smem>>
      %359 = vector.broadcast %358 : f32 to vector<8x256xf32>
      %360 = arith.mulf %359, %87 : vector<8x256xf32>
      %361 = arith.addf %357, %360 : vector<8x256xf32>
      %c6_169 = arith.constant 6 : index
      %c7_170 = arith.constant 7 : index
      %362 = memref.load %arg3[%c6_169, %c7_170] : memref<8x8xf32, #tpu.memory_space<smem>>
      %363 = vector.broadcast %362 : f32 to vector<8x256xf32>
      %364 = arith.mulf %363, %98 : vector<8x256xf32>
      %365 = arith.addf %361, %364 : vector<8x256xf32>
      %366 = math.tanh %365 : vector<8x256xf32>
      %c0_171 = arith.constant 0 : index
      %c6_172 = arith.constant 6 : index
      %367 = memref.load %arg5[%c0_171, %c6_172] : memref<1x8xf32, #tpu.memory_space<smem>>
      %368 = vector.broadcast %367 : f32 to vector<8x256xf32>
      %369 = arith.mulf %368, %366 : vector<8x256xf32>
      %370 = arith.addf %331, %369 : vector<8x256xf32>
      %c7_173 = arith.constant 7 : index
      %c0_174 = arith.constant 0 : index
      %371 = memref.load %arg3[%c7_173, %c0_174] : memref<8x8xf32, #tpu.memory_space<smem>>
      %372 = vector.broadcast %371 : f32 to vector<8x256xf32>
      %373 = arith.mulf %372, %21 : vector<8x256xf32>
      %c7_175 = arith.constant 7 : index
      %374 = memref.load %arg4[%c7_175] : memref<8xf32, #tpu.memory_space<smem>>
      %375 = vector.broadcast %374 : f32 to vector<8x256xf32>
      %376 = arith.addf %373, %375 : vector<8x256xf32>
      %c7_176 = arith.constant 7 : index
      %c1_177 = arith.constant 1 : index
      %377 = memref.load %arg3[%c7_176, %c1_177] : memref<8x8xf32, #tpu.memory_space<smem>>
      %378 = vector.broadcast %377 : f32 to vector<8x256xf32>
      %379 = arith.mulf %378, %32 : vector<8x256xf32>
      %380 = arith.addf %376, %379 : vector<8x256xf32>
      %c7_178 = arith.constant 7 : index
      %c2_179 = arith.constant 2 : index
      %381 = memref.load %arg3[%c7_178, %c2_179] : memref<8x8xf32, #tpu.memory_space<smem>>
      %382 = vector.broadcast %381 : f32 to vector<8x256xf32>
      %383 = arith.mulf %382, %43 : vector<8x256xf32>
      %384 = arith.addf %380, %383 : vector<8x256xf32>
      %c7_180 = arith.constant 7 : index
      %c3_181 = arith.constant 3 : index
      %385 = memref.load %arg3[%c7_180, %c3_181] : memref<8x8xf32, #tpu.memory_space<smem>>
      %386 = vector.broadcast %385 : f32 to vector<8x256xf32>
      %387 = arith.mulf %386, %54 : vector<8x256xf32>
      %388 = arith.addf %384, %387 : vector<8x256xf32>
      %c7_182 = arith.constant 7 : index
      %c4_183 = arith.constant 4 : index
      %389 = memref.load %arg3[%c7_182, %c4_183] : memref<8x8xf32, #tpu.memory_space<smem>>
      %390 = vector.broadcast %389 : f32 to vector<8x256xf32>
      %391 = arith.mulf %390, %65 : vector<8x256xf32>
      %392 = arith.addf %388, %391 : vector<8x256xf32>
      %c7_184 = arith.constant 7 : index
      %c5_185 = arith.constant 5 : index
      %393 = memref.load %arg3[%c7_184, %c5_185] : memref<8x8xf32, #tpu.memory_space<smem>>
      %394 = vector.broadcast %393 : f32 to vector<8x256xf32>
      %395 = arith.mulf %394, %76 : vector<8x256xf32>
      %396 = arith.addf %392, %395 : vector<8x256xf32>
      %c7_186 = arith.constant 7 : index
      %c6_187 = arith.constant 6 : index
      %397 = memref.load %arg3[%c7_186, %c6_187] : memref<8x8xf32, #tpu.memory_space<smem>>
      %398 = vector.broadcast %397 : f32 to vector<8x256xf32>
      %399 = arith.mulf %398, %87 : vector<8x256xf32>
      %400 = arith.addf %396, %399 : vector<8x256xf32>
      %c7_188 = arith.constant 7 : index
      %c7_189 = arith.constant 7 : index
      %401 = memref.load %arg3[%c7_188, %c7_189] : memref<8x8xf32, #tpu.memory_space<smem>>
      %402 = vector.broadcast %401 : f32 to vector<8x256xf32>
      %403 = arith.mulf %402, %98 : vector<8x256xf32>
      %404 = arith.addf %400, %403 : vector<8x256xf32>
      %405 = math.tanh %404 : vector<8x256xf32>
      %c0_190 = arith.constant 0 : index
      %c7_191 = arith.constant 7 : index
      %406 = memref.load %arg5[%c0_190, %c7_191] : memref<1x8xf32, #tpu.memory_space<smem>>
      %407 = vector.broadcast %406 : f32 to vector<8x256xf32>
      %408 = arith.mulf %407, %405 : vector<8x256xf32>
      %409 = arith.addf %370, %408 : vector<8x256xf32>
      %c0_192 = arith.constant 0 : index
      %410 = memref.load %arg6[%c0_192] : memref<1xf32, #tpu.memory_space<smem>>
      %411 = vector.broadcast %410 : f32 to vector<8x256xf32>
      %412 = arith.addf %409, %411 : vector<8x256xf32>
      %413 = arith.index_cast %4 : i32 to index
      %c0_193 = arith.constant 0 : index
      %414 = vector.load %arg8[%413, %c0_193] : memref<64x512xf32, #tpu.memory_space<vmem>>, vector<8x256xf32>
      tpu.vector_store %arg8[%413, %c0_193], %412 {strides = array<i32>} : memref<64x512xf32, #tpu.memory_space<vmem>>, vector<8x256xf32>,
      %c0_194 = arith.constant 0 : index
      %415 = arith.index_cast %4 : i32 to index
      %c256 = arith.constant 256 : index
      %416 = vector.load %arg7[%c0_194, %415, %c256] : memref<2x64x512xf32, #tpu.memory_space<vmem>>, vector<1x8x256xf32>
      %417 = vector.shape_cast %416 : vector<1x8x256xf32> to vector<8x256xf32>
      %c1_195 = arith.constant 1 : index
      %418 = arith.index_cast %4 : i32 to index
      %c256_196 = arith.constant 256 : index
      %419 = vector.load %arg7[%c1_195, %418, %c256_196] : memref<2x64x512xf32, #tpu.memory_space<vmem>>, vector<1x8x256xf32>
      %420 = vector.shape_cast %419 : vector<1x8x256xf32> to vector<8x256xf32>
      %c0_197 = arith.constant 0 : index
      %c0_198 = arith.constant 0 : index
      %421 = memref.load %arg1[%c0_197, %c0_198] : memref<8x2xf32, #tpu.memory_space<smem>>
      %422 = vector.broadcast %421 : f32 to vector<8x256xf32>
      %423 = arith.mulf %422, %417 : vector<8x256xf32>
      %c0_199 = arith.constant 0 : index
      %c1_200 = arith.constant 1 : index
      %424 = memref.load %arg1[%c0_199, %c1_200] : memref<8x2xf32, #tpu.memory_space<smem>>
      %425 = vector.broadcast %424 : f32 to vector<8x256xf32>
      %426 = arith.mulf %425, %420 : vector<8x256xf32>
      %427 = arith.addf %423, %426 : vector<8x256xf32>
      %c0_201 = arith.constant 0 : index
      %428 = memref.load %arg2[%c0_201] : memref<8xf32, #tpu.memory_space<smem>>
      %429 = vector.broadcast %428 : f32 to vector<8x256xf32>
      %430 = arith.addf %427, %429 : vector<8x256xf32>
      %431 = math.tanh %430 : vector<8x256xf32>
      %c1_202 = arith.constant 1 : index
      %c0_203 = arith.constant 0 : index
      %432 = memref.load %arg1[%c1_202, %c0_203] : memref<8x2xf32, #tpu.memory_space<smem>>
      %433 = vector.broadcast %432 : f32 to vector<8x256xf32>
      %434 = arith.mulf %433, %417 : vector<8x256xf32>
      %c1_204 = arith.constant 1 : index
      %c1_205 = arith.constant 1 : index
      %435 = memref.load %arg1[%c1_204, %c1_205] : memref<8x2xf32, #tpu.memory_space<smem>>
      %436 = vector.broadcast %435 : f32 to vector<8x256xf32>
      %437 = arith.mulf %436, %420 : vector<8x256xf32>
      %438 = arith.addf %434, %437 : vector<8x256xf32>
      %c1_206 = arith.constant 1 : index
      %439 = memref.load %arg2[%c1_206] : memref<8xf32, #tpu.memory_space<smem>>
      %440 = vector.broadcast %439 : f32 to vector<8x256xf32>
      %441 = arith.addf %438, %440 : vector<8x256xf32>
      %442 = math.tanh %441 : vector<8x256xf32>
      %c2_207 = arith.constant 2 : index
      %c0_208 = arith.constant 0 : index
      %443 = memref.load %arg1[%c2_207, %c0_208] : memref<8x2xf32, #tpu.memory_space<smem>>
      %444 = vector.broadcast %443 : f32 to vector<8x256xf32>
      %445 = arith.mulf %444, %417 : vector<8x256xf32>
      %c2_209 = arith.constant 2 : index
      %c1_210 = arith.constant 1 : index
      %446 = memref.load %arg1[%c2_209, %c1_210] : memref<8x2xf32, #tpu.memory_space<smem>>
      %447 = vector.broadcast %446 : f32 to vector<8x256xf32>
      %448 = arith.mulf %447, %420 : vector<8x256xf32>
      %449 = arith.addf %445, %448 : vector<8x256xf32>
      %c2_211 = arith.constant 2 : index
      %450 = memref.load %arg2[%c2_211] : memref<8xf32, #tpu.memory_space<smem>>
      %451 = vector.broadcast %450 : f32 to vector<8x256xf32>
      %452 = arith.addf %449, %451 : vector<8x256xf32>
      %453 = math.tanh %452 : vector<8x256xf32>
      %c3_212 = arith.constant 3 : index
      %c0_213 = arith.constant 0 : index
      %454 = memref.load %arg1[%c3_212, %c0_213] : memref<8x2xf32, #tpu.memory_space<smem>>
      %455 = vector.broadcast %454 : f32 to vector<8x256xf32>
      %456 = arith.mulf %455, %417 : vector<8x256xf32>
      %c3_214 = arith.constant 3 : index
      %c1_215 = arith.constant 1 : index
      %457 = memref.load %arg1[%c3_214, %c1_215] : memref<8x2xf32, #tpu.memory_space<smem>>
      %458 = vector.broadcast %457 : f32 to vector<8x256xf32>
      %459 = arith.mulf %458, %420 : vector<8x256xf32>
      %460 = arith.addf %456, %459 : vector<8x256xf32>
      %c3_216 = arith.constant 3 : index
      %461 = memref.load %arg2[%c3_216] : memref<8xf32, #tpu.memory_space<smem>>
      %462 = vector.broadcast %461 : f32 to vector<8x256xf32>
      %463 = arith.addf %460, %462 : vector<8x256xf32>
      %464 = math.tanh %463 : vector<8x256xf32>
      %c4_217 = arith.constant 4 : index
      %c0_218 = arith.constant 0 : index
      %465 = memref.load %arg1[%c4_217, %c0_218] : memref<8x2xf32, #tpu.memory_space<smem>>
      %466 = vector.broadcast %465 : f32 to vector<8x256xf32>
      %467 = arith.mulf %466, %417 : vector<8x256xf32>
      %c4_219 = arith.constant 4 : index
      %c1_220 = arith.constant 1 : index
      %468 = memref.load %arg1[%c4_219, %c1_220] : memref<8x2xf32, #tpu.memory_space<smem>>
      %469 = vector.broadcast %468 : f32 to vector<8x256xf32>
      %470 = arith.mulf %469, %420 : vector<8x256xf32>
      %471 = arith.addf %467, %470 : vector<8x256xf32>
      %c4_221 = arith.constant 4 : index
      %472 = memref.load %arg2[%c4_221] : memref<8xf32, #tpu.memory_space<smem>>
      %473 = vector.broadcast %472 : f32 to vector<8x256xf32>
      %474 = arith.addf %471, %473 : vector<8x256xf32>
      %475 = math.tanh %474 : vector<8x256xf32>
      %c5_222 = arith.constant 5 : index
      %c0_223 = arith.constant 0 : index
      %476 = memref.load %arg1[%c5_222, %c0_223] : memref<8x2xf32, #tpu.memory_space<smem>>
      %477 = vector.broadcast %476 : f32 to vector<8x256xf32>
      %478 = arith.mulf %477, %417 : vector<8x256xf32>
      %c5_224 = arith.constant 5 : index
      %c1_225 = arith.constant 1 : index
      %479 = memref.load %arg1[%c5_224, %c1_225] : memref<8x2xf32, #tpu.memory_space<smem>>
      %480 = vector.broadcast %479 : f32 to vector<8x256xf32>
      %481 = arith.mulf %480, %420 : vector<8x256xf32>
      %482 = arith.addf %478, %481 : vector<8x256xf32>
      %c5_226 = arith.constant 5 : index
      %483 = memref.load %arg2[%c5_226] : memref<8xf32, #tpu.memory_space<smem>>
      %484 = vector.broadcast %483 : f32 to vector<8x256xf32>
      %485 = arith.addf %482, %484 : vector<8x256xf32>
      %486 = math.tanh %485 : vector<8x256xf32>
      %c6_227 = arith.constant 6 : index
      %c0_228 = arith.constant 0 : index
      %487 = memref.load %arg1[%c6_227, %c0_228] : memref<8x2xf32, #tpu.memory_space<smem>>
      %488 = vector.broadcast %487 : f32 to vector<8x256xf32>
      %489 = arith.mulf %488, %417 : vector<8x256xf32>
      %c6_229 = arith.constant 6 : index
      %c1_230 = arith.constant 1 : index
      %490 = memref.load %arg1[%c6_229, %c1_230] : memref<8x2xf32, #tpu.memory_space<smem>>
      %491 = vector.broadcast %490 : f32 to vector<8x256xf32>
      %492 = arith.mulf %491, %420 : vector<8x256xf32>
      %493 = arith.addf %489, %492 : vector<8x256xf32>
      %c6_231 = arith.constant 6 : index
      %494 = memref.load %arg2[%c6_231] : memref<8xf32, #tpu.memory_space<smem>>
      %495 = vector.broadcast %494 : f32 to vector<8x256xf32>
      %496 = arith.addf %493, %495 : vector<8x256xf32>
      %497 = math.tanh %496 : vector<8x256xf32>
      %c7_232 = arith.constant 7 : index
      %c0_233 = arith.constant 0 : index
      %498 = memref.load %arg1[%c7_232, %c0_233] : memref<8x2xf32, #tpu.memory_space<smem>>
      %499 = vector.broadcast %498 : f32 to vector<8x256xf32>
      %500 = arith.mulf %499, %417 : vector<8x256xf32>
      %c7_234 = arith.constant 7 : index
      %c1_235 = arith.constant 1 : index
      %501 = memref.load %arg1[%c7_234, %c1_235] : memref<8x2xf32, #tpu.memory_space<smem>>
      %502 = vector.broadcast %501 : f32 to vector<8x256xf32>
      %503 = arith.mulf %502, %420 : vector<8x256xf32>
      %504 = arith.addf %500, %503 : vector<8x256xf32>
      %c7_236 = arith.constant 7 : index
      %505 = memref.load %arg2[%c7_236] : memref<8xf32, #tpu.memory_space<smem>>
      %506 = vector.broadcast %505 : f32 to vector<8x256xf32>
      %507 = arith.addf %504, %506 : vector<8x256xf32>
      %508 = math.tanh %507 : vector<8x256xf32>
      %c0_237 = arith.constant 0 : index
      %c0_238 = arith.constant 0 : index
      %509 = memref.load %arg3[%c0_237, %c0_238] : memref<8x8xf32, #tpu.memory_space<smem>>
      %510 = vector.broadcast %509 : f32 to vector<8x256xf32>
      %511 = arith.mulf %510, %431 : vector<8x256xf32>
      %c0_239 = arith.constant 0 : index
      %512 = memref.load %arg4[%c0_239] : memref<8xf32, #tpu.memory_space<smem>>
      %513 = vector.broadcast %512 : f32 to vector<8x256xf32>
      %514 = arith.addf %511, %513 : vector<8x256xf32>
      %c0_240 = arith.constant 0 : index
      %c1_241 = arith.constant 1 : index
      %515 = memref.load %arg3[%c0_240, %c1_241] : memref<8x8xf32, #tpu.memory_space<smem>>
      %516 = vector.broadcast %515 : f32 to vector<8x256xf32>
      %517 = arith.mulf %516, %442 : vector<8x256xf32>
      %518 = arith.addf %514, %517 : vector<8x256xf32>
      %c0_242 = arith.constant 0 : index
      %c2_243 = arith.constant 2 : index
      %519 = memref.load %arg3[%c0_242, %c2_243] : memref<8x8xf32, #tpu.memory_space<smem>>
      %520 = vector.broadcast %519 : f32 to vector<8x256xf32>
      %521 = arith.mulf %520, %453 : vector<8x256xf32>
      %522 = arith.addf %518, %521 : vector<8x256xf32>
      %c0_244 = arith.constant 0 : index
      %c3_245 = arith.constant 3 : index
      %523 = memref.load %arg3[%c0_244, %c3_245] : memref<8x8xf32, #tpu.memory_space<smem>>
      %524 = vector.broadcast %523 : f32 to vector<8x256xf32>
      %525 = arith.mulf %524, %464 : vector<8x256xf32>
      %526 = arith.addf %522, %525 : vector<8x256xf32>
      %c0_246 = arith.constant 0 : index
      %c4_247 = arith.constant 4 : index
      %527 = memref.load %arg3[%c0_246, %c4_247] : memref<8x8xf32, #tpu.memory_space<smem>>
      %528 = vector.broadcast %527 : f32 to vector<8x256xf32>
      %529 = arith.mulf %528, %475 : vector<8x256xf32>
      %530 = arith.addf %526, %529 : vector<8x256xf32>
      %c0_248 = arith.constant 0 : index
      %c5_249 = arith.constant 5 : index
      %531 = memref.load %arg3[%c0_248, %c5_249] : memref<8x8xf32, #tpu.memory_space<smem>>
      %532 = vector.broadcast %531 : f32 to vector<8x256xf32>
      %533 = arith.mulf %532, %486 : vector<8x256xf32>
      %534 = arith.addf %530, %533 : vector<8x256xf32>
      %c0_250 = arith.constant 0 : index
      %c6_251 = arith.constant 6 : index
      %535 = memref.load %arg3[%c0_250, %c6_251] : memref<8x8xf32, #tpu.memory_space<smem>>
      %536 = vector.broadcast %535 : f32 to vector<8x256xf32>
      %537 = arith.mulf %536, %497 : vector<8x256xf32>
      %538 = arith.addf %534, %537 : vector<8x256xf32>
      %c0_252 = arith.constant 0 : index
      %c7_253 = arith.constant 7 : index
      %539 = memref.load %arg3[%c0_252, %c7_253] : memref<8x8xf32, #tpu.memory_space<smem>>
      %540 = vector.broadcast %539 : f32 to vector<8x256xf32>
      %541 = arith.mulf %540, %508 : vector<8x256xf32>
      %542 = arith.addf %538, %541 : vector<8x256xf32>
      %543 = math.tanh %542 : vector<8x256xf32>
      %c0_254 = arith.constant 0 : index
      %c0_255 = arith.constant 0 : index
      %544 = memref.load %arg5[%c0_254, %c0_255] : memref<1x8xf32, #tpu.memory_space<smem>>
      %545 = vector.broadcast %544 : f32 to vector<8x256xf32>
      %546 = arith.mulf %545, %543 : vector<8x256xf32>
      %c1_256 = arith.constant 1 : index
      %c0_257 = arith.constant 0 : index
      %547 = memref.load %arg3[%c1_256, %c0_257] : memref<8x8xf32, #tpu.memory_space<smem>>
      %548 = vector.broadcast %547 : f32 to vector<8x256xf32>
      %549 = arith.mulf %548, %431 : vector<8x256xf32>
      %c1_258 = arith.constant 1 : index
      %550 = memref.load %arg4[%c1_258] : memref<8xf32, #tpu.memory_space<smem>>
      %551 = vector.broadcast %550 : f32 to vector<8x256xf32>
      %552 = arith.addf %549, %551 : vector<8x256xf32>
      %c1_259 = arith.constant 1 : index
      %c1_260 = arith.constant 1 : index
      %553 = memref.load %arg3[%c1_259, %c1_260] : memref<8x8xf32, #tpu.memory_space<smem>>
      %554 = vector.broadcast %553 : f32 to vector<8x256xf32>
      %555 = arith.mulf %554, %442 : vector<8x256xf32>
      %556 = arith.addf %552, %555 : vector<8x256xf32>
      %c1_261 = arith.constant 1 : index
      %c2_262 = arith.constant 2 : index
      %557 = memref.load %arg3[%c1_261, %c2_262] : memref<8x8xf32, #tpu.memory_space<smem>>
      %558 = vector.broadcast %557 : f32 to vector<8x256xf32>
      %559 = arith.mulf %558, %453 : vector<8x256xf32>
      %560 = arith.addf %556, %559 : vector<8x256xf32>
      %c1_263 = arith.constant 1 : index
      %c3_264 = arith.constant 3 : index
      %561 = memref.load %arg3[%c1_263, %c3_264] : memref<8x8xf32, #tpu.memory_space<smem>>
      %562 = vector.broadcast %561 : f32 to vector<8x256xf32>
      %563 = arith.mulf %562, %464 : vector<8x256xf32>
      %564 = arith.addf %560, %563 : vector<8x256xf32>
      %c1_265 = arith.constant 1 : index
      %c4_266 = arith.constant 4 : index
      %565 = memref.load %arg3[%c1_265, %c4_266] : memref<8x8xf32, #tpu.memory_space<smem>>
      %566 = vector.broadcast %565 : f32 to vector<8x256xf32>
      %567 = arith.mulf %566, %475 : vector<8x256xf32>
      %568 = arith.addf %564, %567 : vector<8x256xf32>
      %c1_267 = arith.constant 1 : index
      %c5_268 = arith.constant 5 : index
      %569 = memref.load %arg3[%c1_267, %c5_268] : memref<8x8xf32, #tpu.memory_space<smem>>
      %570 = vector.broadcast %569 : f32 to vector<8x256xf32>
      %571 = arith.mulf %570, %486 : vector<8x256xf32>
      %572 = arith.addf %568, %571 : vector<8x256xf32>
      %c1_269 = arith.constant 1 : index
      %c6_270 = arith.constant 6 : index
      %573 = memref.load %arg3[%c1_269, %c6_270] : memref<8x8xf32, #tpu.memory_space<smem>>
      %574 = vector.broadcast %573 : f32 to vector<8x256xf32>
      %575 = arith.mulf %574, %497 : vector<8x256xf32>
      %576 = arith.addf %572, %575 : vector<8x256xf32>
      %c1_271 = arith.constant 1 : index
      %c7_272 = arith.constant 7 : index
      %577 = memref.load %arg3[%c1_271, %c7_272] : memref<8x8xf32, #tpu.memory_space<smem>>
      %578 = vector.broadcast %577 : f32 to vector<8x256xf32>
      %579 = arith.mulf %578, %508 : vector<8x256xf32>
      %580 = arith.addf %576, %579 : vector<8x256xf32>
      %581 = math.tanh %580 : vector<8x256xf32>
      %c0_273 = arith.constant 0 : index
      %c1_274 = arith.constant 1 : index
      %582 = memref.load %arg5[%c0_273, %c1_274] : memref<1x8xf32, #tpu.memory_space<smem>>
      %583 = vector.broadcast %582 : f32 to vector<8x256xf32>
      %584 = arith.mulf %583, %581 : vector<8x256xf32>
      %585 = arith.addf %546, %584 : vector<8x256xf32>
      %c2_275 = arith.constant 2 : index
      %c0_276 = arith.constant 0 : index
      %586 = memref.load %arg3[%c2_275, %c0_276] : memref<8x8xf32, #tpu.memory_space<smem>>
      %587 = vector.broadcast %586 : f32 to vector<8x256xf32>
      %588 = arith.mulf %587, %431 : vector<8x256xf32>
      %c2_277 = arith.constant 2 : index
      %589 = memref.load %arg4[%c2_277] : memref<8xf32, #tpu.memory_space<smem>>
      %590 = vector.broadcast %589 : f32 to vector<8x256xf32>
      %591 = arith.addf %588, %590 : vector<8x256xf32>
      %c2_278 = arith.constant 2 : index
      %c1_279 = arith.constant 1 : index
      %592 = memref.load %arg3[%c2_278, %c1_279] : memref<8x8xf32, #tpu.memory_space<smem>>
      %593 = vector.broadcast %592 : f32 to vector<8x256xf32>
      %594 = arith.mulf %593, %442 : vector<8x256xf32>
      %595 = arith.addf %591, %594 : vector<8x256xf32>
      %c2_280 = arith.constant 2 : index
      %c2_281 = arith.constant 2 : index
      %596 = memref.load %arg3[%c2_280, %c2_281] : memref<8x8xf32, #tpu.memory_space<smem>>
      %597 = vector.broadcast %596 : f32 to vector<8x256xf32>
      %598 = arith.mulf %597, %453 : vector<8x256xf32>
      %599 = arith.addf %595, %598 : vector<8x256xf32>
      %c2_282 = arith.constant 2 : index
      %c3_283 = arith.constant 3 : index
      %600 = memref.load %arg3[%c2_282, %c3_283] : memref<8x8xf32, #tpu.memory_space<smem>>
      %601 = vector.broadcast %600 : f32 to vector<8x256xf32>
      %602 = arith.mulf %601, %464 : vector<8x256xf32>
      %603 = arith.addf %599, %602 : vector<8x256xf32>
      %c2_284 = arith.constant 2 : index
      %c4_285 = arith.constant 4 : index
      %604 = memref.load %arg3[%c2_284, %c4_285] : memref<8x8xf32, #tpu.memory_space<smem>>
      %605 = vector.broadcast %604 : f32 to vector<8x256xf32>
      %606 = arith.mulf %605, %475 : vector<8x256xf32>
      %607 = arith.addf %603, %606 : vector<8x256xf32>
      %c2_286 = arith.constant 2 : index
      %c5_287 = arith.constant 5 : index
      %608 = memref.load %arg3[%c2_286, %c5_287] : memref<8x8xf32, #tpu.memory_space<smem>>
      %609 = vector.broadcast %608 : f32 to vector<8x256xf32>
      %610 = arith.mulf %609, %486 : vector<8x256xf32>
      %611 = arith.addf %607, %610 : vector<8x256xf32>
      %c2_288 = arith.constant 2 : index
      %c6_289 = arith.constant 6 : index
      %612 = memref.load %arg3[%c2_288, %c6_289] : memref<8x8xf32, #tpu.memory_space<smem>>
      %613 = vector.broadcast %612 : f32 to vector<8x256xf32>
      %614 = arith.mulf %613, %497 : vector<8x256xf32>
      %615 = arith.addf %611, %614 : vector<8x256xf32>
      %c2_290 = arith.constant 2 : index
      %c7_291 = arith.constant 7 : index
      %616 = memref.load %arg3[%c2_290, %c7_291] : memref<8x8xf32, #tpu.memory_space<smem>>
      %617 = vector.broadcast %616 : f32 to vector<8x256xf32>
      %618 = arith.mulf %617, %508 : vector<8x256xf32>
      %619 = arith.addf %615, %618 : vector<8x256xf32>
      %620 = math.tanh %619 : vector<8x256xf32>
      %c0_292 = arith.constant 0 : index
      %c2_293 = arith.constant 2 : index
      %621 = memref.load %arg5[%c0_292, %c2_293] : memref<1x8xf32, #tpu.memory_space<smem>>
      %622 = vector.broadcast %621 : f32 to vector<8x256xf32>
      %623 = arith.mulf %622, %620 : vector<8x256xf32>
      %624 = arith.addf %585, %623 : vector<8x256xf32>
      %c3_294 = arith.constant 3 : index
      %c0_295 = arith.constant 0 : index
      %625 = memref.load %arg3[%c3_294, %c0_295] : memref<8x8xf32, #tpu.memory_space<smem>>
      %626 = vector.broadcast %625 : f32 to vector<8x256xf32>
      %627 = arith.mulf %626, %431 : vector<8x256xf32>
      %c3_296 = arith.constant 3 : index
      %628 = memref.load %arg4[%c3_296] : memref<8xf32, #tpu.memory_space<smem>>
      %629 = vector.broadcast %628 : f32 to vector<8x256xf32>
      %630 = arith.addf %627, %629 : vector<8x256xf32>
      %c3_297 = arith.constant 3 : index
      %c1_298 = arith.constant 1 : index
      %631 = memref.load %arg3[%c3_297, %c1_298] : memref<8x8xf32, #tpu.memory_space<smem>>
      %632 = vector.broadcast %631 : f32 to vector<8x256xf32>
      %633 = arith.mulf %632, %442 : vector<8x256xf32>
      %634 = arith.addf %630, %633 : vector<8x256xf32>
      %c3_299 = arith.constant 3 : index
      %c2_300 = arith.constant 2 : index
      %635 = memref.load %arg3[%c3_299, %c2_300] : memref<8x8xf32, #tpu.memory_space<smem>>
      %636 = vector.broadcast %635 : f32 to vector<8x256xf32>
      %637 = arith.mulf %636, %453 : vector<8x256xf32>
      %638 = arith.addf %634, %637 : vector<8x256xf32>
      %c3_301 = arith.constant 3 : index
      %c3_302 = arith.constant 3 : index
      %639 = memref.load %arg3[%c3_301, %c3_302] : memref<8x8xf32, #tpu.memory_space<smem>>
      %640 = vector.broadcast %639 : f32 to vector<8x256xf32>
      %641 = arith.mulf %640, %464 : vector<8x256xf32>
      %642 = arith.addf %638, %641 : vector<8x256xf32>
      %c3_303 = arith.constant 3 : index
      %c4_304 = arith.constant 4 : index
      %643 = memref.load %arg3[%c3_303, %c4_304] : memref<8x8xf32, #tpu.memory_space<smem>>
      %644 = vector.broadcast %643 : f32 to vector<8x256xf32>
      %645 = arith.mulf %644, %475 : vector<8x256xf32>
      %646 = arith.addf %642, %645 : vector<8x256xf32>
      %c3_305 = arith.constant 3 : index
      %c5_306 = arith.constant 5 : index
      %647 = memref.load %arg3[%c3_305, %c5_306] : memref<8x8xf32, #tpu.memory_space<smem>>
      %648 = vector.broadcast %647 : f32 to vector<8x256xf32>
      %649 = arith.mulf %648, %486 : vector<8x256xf32>
      %650 = arith.addf %646, %649 : vector<8x256xf32>
      %c3_307 = arith.constant 3 : index
      %c6_308 = arith.constant 6 : index
      %651 = memref.load %arg3[%c3_307, %c6_308] : memref<8x8xf32, #tpu.memory_space<smem>>
      %652 = vector.broadcast %651 : f32 to vector<8x256xf32>
      %653 = arith.mulf %652, %497 : vector<8x256xf32>
      %654 = arith.addf %650, %653 : vector<8x256xf32>
      %c3_309 = arith.constant 3 : index
      %c7_310 = arith.constant 7 : index
      %655 = memref.load %arg3[%c3_309, %c7_310] : memref<8x8xf32, #tpu.memory_space<smem>>
      %656 = vector.broadcast %655 : f32 to vector<8x256xf32>
      %657 = arith.mulf %656, %508 : vector<8x256xf32>
      %658 = arith.addf %654, %657 : vector<8x256xf32>
      %659 = math.tanh %658 : vector<8x256xf32>
      %c0_311 = arith.constant 0 : index
      %c3_312 = arith.constant 3 : index
      %660 = memref.load %arg5[%c0_311, %c3_312] : memref<1x8xf32, #tpu.memory_space<smem>>
      %661 = vector.broadcast %660 : f32 to vector<8x256xf32>
      %662 = arith.mulf %661, %659 : vector<8x256xf32>
      %663 = arith.addf %624, %662 : vector<8x256xf32>
      %c4_313 = arith.constant 4 : index
      %c0_314 = arith.constant 0 : index
      %664 = memref.load %arg3[%c4_313, %c0_314] : memref<8x8xf32, #tpu.memory_space<smem>>
      %665 = vector.broadcast %664 : f32 to vector<8x256xf32>
      %666 = arith.mulf %665, %431 : vector<8x256xf32>
      %c4_315 = arith.constant 4 : index
      %667 = memref.load %arg4[%c4_315] : memref<8xf32, #tpu.memory_space<smem>>
      %668 = vector.broadcast %667 : f32 to vector<8x256xf32>
      %669 = arith.addf %666, %668 : vector<8x256xf32>
      %c4_316 = arith.constant 4 : index
      %c1_317 = arith.constant 1 : index
      %670 = memref.load %arg3[%c4_316, %c1_317] : memref<8x8xf32, #tpu.memory_space<smem>>
      %671 = vector.broadcast %670 : f32 to vector<8x256xf32>
      %672 = arith.mulf %671, %442 : vector<8x256xf32>
      %673 = arith.addf %669, %672 : vector<8x256xf32>
      %c4_318 = arith.constant 4 : index
      %c2_319 = arith.constant 2 : index
      %674 = memref.load %arg3[%c4_318, %c2_319] : memref<8x8xf32, #tpu.memory_space<smem>>
      %675 = vector.broadcast %674 : f32 to vector<8x256xf32>
      %676 = arith.mulf %675, %453 : vector<8x256xf32>
      %677 = arith.addf %673, %676 : vector<8x256xf32>
      %c4_320 = arith.constant 4 : index
      %c3_321 = arith.constant 3 : index
      %678 = memref.load %arg3[%c4_320, %c3_321] : memref<8x8xf32, #tpu.memory_space<smem>>
      %679 = vector.broadcast %678 : f32 to vector<8x256xf32>
      %680 = arith.mulf %679, %464 : vector<8x256xf32>
      %681 = arith.addf %677, %680 : vector<8x256xf32>
      %c4_322 = arith.constant 4 : index
      %c4_323 = arith.constant 4 : index
      %682 = memref.load %arg3[%c4_322, %c4_323] : memref<8x8xf32, #tpu.memory_space<smem>>
      %683 = vector.broadcast %682 : f32 to vector<8x256xf32>
      %684 = arith.mulf %683, %475 : vector<8x256xf32>
      %685 = arith.addf %681, %684 : vector<8x256xf32>
      %c4_324 = arith.constant 4 : index
      %c5_325 = arith.constant 5 : index
      %686 = memref.load %arg3[%c4_324, %c5_325] : memref<8x8xf32, #tpu.memory_space<smem>>
      %687 = vector.broadcast %686 : f32 to vector<8x256xf32>
      %688 = arith.mulf %687, %486 : vector<8x256xf32>
      %689 = arith.addf %685, %688 : vector<8x256xf32>
      %c4_326 = arith.constant 4 : index
      %c6_327 = arith.constant 6 : index
      %690 = memref.load %arg3[%c4_326, %c6_327] : memref<8x8xf32, #tpu.memory_space<smem>>
      %691 = vector.broadcast %690 : f32 to vector<8x256xf32>
      %692 = arith.mulf %691, %497 : vector<8x256xf32>
      %693 = arith.addf %689, %692 : vector<8x256xf32>
      %c4_328 = arith.constant 4 : index
      %c7_329 = arith.constant 7 : index
      %694 = memref.load %arg3[%c4_328, %c7_329] : memref<8x8xf32, #tpu.memory_space<smem>>
      %695 = vector.broadcast %694 : f32 to vector<8x256xf32>
      %696 = arith.mulf %695, %508 : vector<8x256xf32>
      %697 = arith.addf %693, %696 : vector<8x256xf32>
      %698 = math.tanh %697 : vector<8x256xf32>
      %c0_330 = arith.constant 0 : index
      %c4_331 = arith.constant 4 : index
      %699 = memref.load %arg5[%c0_330, %c4_331] : memref<1x8xf32, #tpu.memory_space<smem>>
      %700 = vector.broadcast %699 : f32 to vector<8x256xf32>
      %701 = arith.mulf %700, %698 : vector<8x256xf32>
      %702 = arith.addf %663, %701 : vector<8x256xf32>
      %c5_332 = arith.constant 5 : index
      %c0_333 = arith.constant 0 : index
      %703 = memref.load %arg3[%c5_332, %c0_333] : memref<8x8xf32, #tpu.memory_space<smem>>
      %704 = vector.broadcast %703 : f32 to vector<8x256xf32>
      %705 = arith.mulf %704, %431 : vector<8x256xf32>
      %c5_334 = arith.constant 5 : index
      %706 = memref.load %arg4[%c5_334] : memref<8xf32, #tpu.memory_space<smem>>
      %707 = vector.broadcast %706 : f32 to vector<8x256xf32>
      %708 = arith.addf %705, %707 : vector<8x256xf32>
      %c5_335 = arith.constant 5 : index
      %c1_336 = arith.constant 1 : index
      %709 = memref.load %arg3[%c5_335, %c1_336] : memref<8x8xf32, #tpu.memory_space<smem>>
      %710 = vector.broadcast %709 : f32 to vector<8x256xf32>
      %711 = arith.mulf %710, %442 : vector<8x256xf32>
      %712 = arith.addf %708, %711 : vector<8x256xf32>
      %c5_337 = arith.constant 5 : index
      %c2_338 = arith.constant 2 : index
      %713 = memref.load %arg3[%c5_337, %c2_338] : memref<8x8xf32, #tpu.memory_space<smem>>
      %714 = vector.broadcast %713 : f32 to vector<8x256xf32>
      %715 = arith.mulf %714, %453 : vector<8x256xf32>
      %716 = arith.addf %712, %715 : vector<8x256xf32>
      %c5_339 = arith.constant 5 : index
      %c3_340 = arith.constant 3 : index
      %717 = memref.load %arg3[%c5_339, %c3_340] : memref<8x8xf32, #tpu.memory_space<smem>>
      %718 = vector.broadcast %717 : f32 to vector<8x256xf32>
      %719 = arith.mulf %718, %464 : vector<8x256xf32>
      %720 = arith.addf %716, %719 : vector<8x256xf32>
      %c5_341 = arith.constant 5 : index
      %c4_342 = arith.constant 4 : index
      %721 = memref.load %arg3[%c5_341, %c4_342] : memref<8x8xf32, #tpu.memory_space<smem>>
      %722 = vector.broadcast %721 : f32 to vector<8x256xf32>
      %723 = arith.mulf %722, %475 : vector<8x256xf32>
      %724 = arith.addf %720, %723 : vector<8x256xf32>
      %c5_343 = arith.constant 5 : index
      %c5_344 = arith.constant 5 : index
      %725 = memref.load %arg3[%c5_343, %c5_344] : memref<8x8xf32, #tpu.memory_space<smem>>
      %726 = vector.broadcast %725 : f32 to vector<8x256xf32>
      %727 = arith.mulf %726, %486 : vector<8x256xf32>
      %728 = arith.addf %724, %727 : vector<8x256xf32>
      %c5_345 = arith.constant 5 : index
      %c6_346 = arith.constant 6 : index
      %729 = memref.load %arg3[%c5_345, %c6_346] : memref<8x8xf32, #tpu.memory_space<smem>>
      %730 = vector.broadcast %729 : f32 to vector<8x256xf32>
      %731 = arith.mulf %730, %497 : vector<8x256xf32>
      %732 = arith.addf %728, %731 : vector<8x256xf32>
      %c5_347 = arith.constant 5 : index
      %c7_348 = arith.constant 7 : index
      %733 = memref.load %arg3[%c5_347, %c7_348] : memref<8x8xf32, #tpu.memory_space<smem>>
      %734 = vector.broadcast %733 : f32 to vector<8x256xf32>
      %735 = arith.mulf %734, %508 : vector<8x256xf32>
      %736 = arith.addf %732, %735 : vector<8x256xf32>
      %737 = math.tanh %736 : vector<8x256xf32>
      %c0_349 = arith.constant 0 : index
      %c5_350 = arith.constant 5 : index
      %738 = memref.load %arg5[%c0_349, %c5_350] : memref<1x8xf32, #tpu.memory_space<smem>>
      %739 = vector.broadcast %738 : f32 to vector<8x256xf32>
      %740 = arith.mulf %739, %737 : vector<8x256xf32>
      %741 = arith.addf %702, %740 : vector<8x256xf32>
      %c6_351 = arith.constant 6 : index
      %c0_352 = arith.constant 0 : index
      %742 = memref.load %arg3[%c6_351, %c0_352] : memref<8x8xf32, #tpu.memory_space<smem>>
      %743 = vector.broadcast %742 : f32 to vector<8x256xf32>
      %744 = arith.mulf %743, %431 : vector<8x256xf32>
      %c6_353 = arith.constant 6 : index
      %745 = memref.load %arg4[%c6_353] : memref<8xf32, #tpu.memory_space<smem>>
      %746 = vector.broadcast %745 : f32 to vector<8x256xf32>
      %747 = arith.addf %744, %746 : vector<8x256xf32>
      %c6_354 = arith.constant 6 : index
      %c1_355 = arith.constant 1 : index
      %748 = memref.load %arg3[%c6_354, %c1_355] : memref<8x8xf32, #tpu.memory_space<smem>>
      %749 = vector.broadcast %748 : f32 to vector<8x256xf32>
      %750 = arith.mulf %749, %442 : vector<8x256xf32>
      %751 = arith.addf %747, %750 : vector<8x256xf32>
      %c6_356 = arith.constant 6 : index
      %c2_357 = arith.constant 2 : index
      %752 = memref.load %arg3[%c6_356, %c2_357] : memref<8x8xf32, #tpu.memory_space<smem>>
      %753 = vector.broadcast %752 : f32 to vector<8x256xf32>
      %754 = arith.mulf %753, %453 : vector<8x256xf32>
      %755 = arith.addf %751, %754 : vector<8x256xf32>
      %c6_358 = arith.constant 6 : index
      %c3_359 = arith.constant 3 : index
      %756 = memref.load %arg3[%c6_358, %c3_359] : memref<8x8xf32, #tpu.memory_space<smem>>
      %757 = vector.broadcast %756 : f32 to vector<8x256xf32>
      %758 = arith.mulf %757, %464 : vector<8x256xf32>
      %759 = arith.addf %755, %758 : vector<8x256xf32>
      %c6_360 = arith.constant 6 : index
      %c4_361 = arith.constant 4 : index
      %760 = memref.load %arg3[%c6_360, %c4_361] : memref<8x8xf32, #tpu.memory_space<smem>>
      %761 = vector.broadcast %760 : f32 to vector<8x256xf32>
      %762 = arith.mulf %761, %475 : vector<8x256xf32>
      %763 = arith.addf %759, %762 : vector<8x256xf32>
      %c6_362 = arith.constant 6 : index
      %c5_363 = arith.constant 5 : index
      %764 = memref.load %arg3[%c6_362, %c5_363] : memref<8x8xf32, #tpu.memory_space<smem>>
      %765 = vector.broadcast %764 : f32 to vector<8x256xf32>
      %766 = arith.mulf %765, %486 : vector<8x256xf32>
      %767 = arith.addf %763, %766 : vector<8x256xf32>
      %c6_364 = arith.constant 6 : index
      %c6_365 = arith.constant 6 : index
      %768 = memref.load %arg3[%c6_364, %c6_365] : memref<8x8xf32, #tpu.memory_space<smem>>
      %769 = vector.broadcast %768 : f32 to vector<8x256xf32>
      %770 = arith.mulf %769, %497 : vector<8x256xf32>
      %771 = arith.addf %767, %770 : vector<8x256xf32>
      %c6_366 = arith.constant 6 : index
      %c7_367 = arith.constant 7 : index
      %772 = memref.load %arg3[%c6_366, %c7_367] : memref<8x8xf32, #tpu.memory_space<smem>>
      %773 = vector.broadcast %772 : f32 to vector<8x256xf32>
      %774 = arith.mulf %773, %508 : vector<8x256xf32>
      %775 = arith.addf %771, %774 : vector<8x256xf32>
      %776 = math.tanh %775 : vector<8x256xf32>
      %c0_368 = arith.constant 0 : index
      %c6_369 = arith.constant 6 : index
      %777 = memref.load %arg5[%c0_368, %c6_369] : memref<1x8xf32, #tpu.memory_space<smem>>
      %778 = vector.broadcast %777 : f32 to vector<8x256xf32>
      %779 = arith.mulf %778, %776 : vector<8x256xf32>
      %780 = arith.addf %741, %779 : vector<8x256xf32>
      %c7_370 = arith.constant 7 : index
      %c0_371 = arith.constant 0 : index
      %781 = memref.load %arg3[%c7_370, %c0_371] : memref<8x8xf32, #tpu.memory_space<smem>>
      %782 = vector.broadcast %781 : f32 to vector<8x256xf32>
      %783 = arith.mulf %782, %431 : vector<8x256xf32>
      %c7_372 = arith.constant 7 : index
      %784 = memref.load %arg4[%c7_372] : memref<8xf32, #tpu.memory_space<smem>>
      %785 = vector.broadcast %784 : f32 to vector<8x256xf32>
      %786 = arith.addf %783, %785 : vector<8x256xf32>
      %c7_373 = arith.constant 7 : index
      %c1_374 = arith.constant 1 : index
      %787 = memref.load %arg3[%c7_373, %c1_374] : memref<8x8xf32, #tpu.memory_space<smem>>
      %788 = vector.broadcast %787 : f32 to vector<8x256xf32>
      %789 = arith.mulf %788, %442 : vector<8x256xf32>
      %790 = arith.addf %786, %789 : vector<8x256xf32>
      %c7_375 = arith.constant 7 : index
      %c2_376 = arith.constant 2 : index
      %791 = memref.load %arg3[%c7_375, %c2_376] : memref<8x8xf32, #tpu.memory_space<smem>>
      %792 = vector.broadcast %791 : f32 to vector<8x256xf32>
      %793 = arith.mulf %792, %453 : vector<8x256xf32>
      %794 = arith.addf %790, %793 : vector<8x256xf32>
      %c7_377 = arith.constant 7 : index
      %c3_378 = arith.constant 3 : index
      %795 = memref.load %arg3[%c7_377, %c3_378] : memref<8x8xf32, #tpu.memory_space<smem>>
      %796 = vector.broadcast %795 : f32 to vector<8x256xf32>
      %797 = arith.mulf %796, %464 : vector<8x256xf32>
      %798 = arith.addf %794, %797 : vector<8x256xf32>
      %c7_379 = arith.constant 7 : index
      %c4_380 = arith.constant 4 : index
      %799 = memref.load %arg3[%c7_379, %c4_380] : memref<8x8xf32, #tpu.memory_space<smem>>
      %800 = vector.broadcast %799 : f32 to vector<8x256xf32>
      %801 = arith.mulf %800, %475 : vector<8x256xf32>
      %802 = arith.addf %798, %801 : vector<8x256xf32>
      %c7_381 = arith.constant 7 : index
      %c5_382 = arith.constant 5 : index
      %803 = memref.load %arg3[%c7_381, %c5_382] : memref<8x8xf32, #tpu.memory_space<smem>>
      %804 = vector.broadcast %803 : f32 to vector<8x256xf32>
      %805 = arith.mulf %804, %486 : vector<8x256xf32>
      %806 = arith.addf %802, %805 : vector<8x256xf32>
      %c7_383 = arith.constant 7 : index
      %c6_384 = arith.constant 6 : index
      %807 = memref.load %arg3[%c7_383, %c6_384] : memref<8x8xf32, #tpu.memory_space<smem>>
      %808 = vector.broadcast %807 : f32 to vector<8x256xf32>
      %809 = arith.mulf %808, %497 : vector<8x256xf32>
      %810 = arith.addf %806, %809 : vector<8x256xf32>
      %c7_385 = arith.constant 7 : index
      %c7_386 = arith.constant 7 : index
      %811 = memref.load %arg3[%c7_385, %c7_386] : memref<8x8xf32, #tpu.memory_space<smem>>
      %812 = vector.broadcast %811 : f32 to vector<8x256xf32>
      %813 = arith.mulf %812, %508 : vector<8x256xf32>
      %814 = arith.addf %810, %813 : vector<8x256xf32>
      %815 = math.tanh %814 : vector<8x256xf32>
      %c0_387 = arith.constant 0 : index
      %c7_388 = arith.constant 7 : index
      %816 = memref.load %arg5[%c0_387, %c7_388] : memref<1x8xf32, #tpu.memory_space<smem>>
      %817 = vector.broadcast %816 : f32 to vector<8x256xf32>
      %818 = arith.mulf %817, %815 : vector<8x256xf32>
      %819 = arith.addf %780, %818 : vector<8x256xf32>
      %c0_389 = arith.constant 0 : index
      %820 = memref.load %arg6[%c0_389] : memref<1xf32, #tpu.memory_space<smem>>
      %821 = vector.broadcast %820 : f32 to vector<8x256xf32>
      %822 = arith.addf %819, %821 : vector<8x256xf32>
      %823 = arith.index_cast %4 : i32 to index
      %c256_390 = arith.constant 256 : index
      %824 = vector.load %arg8[%823, %c256_390] : memref<64x512xf32, #tpu.memory_space<vmem>>, vector<8x256xf32>
      tpu.vector_store %arg8[%823, %c256_390], %822 {strides = array<i32>} : memref<64x512xf32, #tpu.memory_space<vmem>>, vector<8x256xf32>,
    }
    %c8_i32_0 = arith.constant 8 : i32
    return
  }
  func.func @transform_0(%arg0: i32) -> (i32, i32) {
    %c0_i32 = arith.constant 0 : i32
    %c0_i32_0 = arith.constant 0 : i32
    %c0_i32_1 = arith.constant 0 : i32
    return %c0_i32, %c0_i32_0 : i32, i32
  }
  func.func @transform_1(%arg0: i32) -> i32 {
    %c0_i32 = arith.constant 0 : i32
    %c0_i32_0 = arith.constant 0 : i32
    return %c0_i32 : i32
  }
  func.func @transform_2(%arg0: i32) -> (i32, i32) {
    %c0_i32 = arith.constant 0 : i32
    %c0_i32_0 = arith.constant 0 : i32
    %c0_i32_1 = arith.constant 0 : i32
    return %c0_i32, %c0_i32_0 : i32, i32
  }
  func.func @transform_3(%arg0: i32) -> i32 {
    %c0_i32 = arith.constant 0 : i32
    %c0_i32_0 = arith.constant 0 : i32
    return %c0_i32 : i32
  }
  func.func @transform_4(%arg0: i32) -> (i32, i32) {
    %c0_i32 = arith.constant 0 : i32
    %c0_i32_0 = arith.constant 0 : i32
    %c0_i32_1 = arith.constant 0 : i32
    return %c0_i32, %c0_i32_0 : i32, i32
  }
  func.func @transform_5(%arg0: i32) -> i32 {
    %c0_i32 = arith.constant 0 : i32
    %c0_i32_0 = arith.constant 0 : i32
    return %c0_i32 : i32
  }
  func.func @transform_6(%arg0: i32) -> (i32, i32, i32) {
    %c0_i32 = arith.constant 0 : i32
    %c0_i32_0 = arith.constant 0 : i32
    %c0_i32_1 = arith.constant 0 : i32
    return %c0_i32, %arg0, %c0_i32_0 : i32, i32, i32
  }
  func.func @transform_7(%arg0: i32) -> (i32, i32) {
    %c0_i32 = arith.constant 0 : i32
    %c0_i32_0 = arith.constant 0 : i32
    return %arg0, %c0_i32 : i32, i32
  }
}

</mosaic_0001>

<llo_original>
// kernel: mlp_forward.1
$region0: #{mlp_forward.1}
  #allocation0 [shape = 'u32[]', space=smem, size = 0x4, offset = 0x4, fixed_abs, tag = 'smem constant byte address 0x4 - core index']
  #allocation1 [shape = 'u32[144,128]{1,0:T(1,128)}', space=vmem, size = 0x12000, scoped, tag = 'internal scratch']
  #allocation2 [shape = 'f32[1]{0:T(128)S(6)}', space=smem, size = 0x200, scoped, tag = 'scoped memory for mlp_forward.1']
  %s0 = inlined_call_operand.vmem [shape: f32[8,2], index: 0, kind: input, shape index: {}]
  %s1 = inlined_call_operand.vmem [shape: f32[8], index: 1, kind: input, shape index: {}]
  %s2 = inlined_call_operand.vmem [shape: f32[8,8], index: 2, kind: input, shape index: {}]
  %s3 = inlined_call_operand.vmem [shape: f32[8], index: 3, kind: input, shape index: {}]
  %s4 = inlined_call_operand.vmem [shape: f32[1,8], index: 4, kind: input, shape index: {}]
  %s5 = inlined_call_operand.<no memory space> [shape: f32[1], index: 5, kind: input, shape index: {}]
  %s6 = inlined_call_operand.vmem [shape: f32[2,144,512], index: 6, kind: input, shape index: {}]
  %s7 = inlined_call_operand.vmem [shape: f32[144,512], index: 7, kind: output, shape index: {}]
  %s8 = sld [smem:[#allocation0]]
  $region144: #{mlp_forward.1} parent=0
    _
  %s10 = ssub.s32 1, %s8
  %s11 = scalar_select 0, %s10, %s8
  %12 = sst [smem:[#allocation2]] %s5
  $region1: #{mlp_forward.1} parent=0
    #allocation3 [shape = 'u8[4096]{0}', space=smem, size = 0x1000, scoped, tag = 'input window, operand 0, single buffered']
    #allocation4 [shape = 's32[2]{0}', space=sflag, size = 0x8, scoped, tag = 'scoped memory for mlp_forward.1']
    #allocation5 [shape = 'u8[512]{0}', space=smem, size = 0x200, scoped, tag = 'input window, operand 1, single buffered']
    #allocation6 [shape = 's32[1]{0}', space=sflag, size = 0x4, scoped, tag = 'scoped memory for mlp_forward.1']
    #allocation7 [shape = 'u8[4096]{0}', space=smem, size = 0x1000, scoped, tag = 'input window, operand 2, single buffered']
    #allocation8 [shape = 'u8[512]{0}', space=smem, size = 0x200, scoped, tag = 'input window, operand 3, single buffered']
    #allocation9 [shape = 's32[1]{0}', space=sflag, size = 0x4, scoped, tag = 'scoped memory for mlp_forward.1']
    #allocation10 [shape = 'u8[512]{0}', space=smem, size = 0x200, scoped, tag = 'input window, operand 4, single buffered']
    #allocation11 [shape = 'u8[524288]{0}', space=vmem, size = 0x80000, scoped, tag = 'input window, operand 6']
    #allocation12 [shape = 'u8[262144]{0}', space=vmem, size = 0x40000, scoped, tag = 'output window, operand 0']
    %13 = vsyncpa [#allocation4], 0
    %14 = vsyncpa [#allocation6], 0
    %15 = vsyncpa [#allocation9], 0
    loop: start=0, step=1, limit=5
    $region2: #{mlp_forward.1} parent=1 // loop_pre_header
      _
    $region3: #{mlp_forward.1} parent=1 // loop_header
      %s17 = sphi 0, %s21
      %p18 = scmp.ge.s32.totalorder %s17, 5
      %s25 = sphi 0, %s25
      %s27 = sphi 0, %s25
      %s28 = sphi 0, %s27
      %s42 = sphi 0, %s28
      %s46 = sphi 0, %s46
      %s48 = sphi 0, %s46
      %s49 = sphi 0, %s48
      %s63 = sphi 0, %s49
      %s67 = sphi 0, %s67
      %s69 = sphi 0, %s67
      %s70 = sphi 0, %s69
      %s84 = sphi 0, %s70
      %s88 = sphi 0, %s88
      %s90 = sphi 0, %s88
      %s91 = sphi 0, %s90
      %s105 = sphi 0, %s91
      %s109 = sphi 0, %s109
      %s111 = sphi 0, %s109
      %s112 = sphi 0, %s111
      %s126 = sphi 0, %s112
      %s130 = sphi 0, %s130
      %s132 = sphi 0, %s130
      %s133 = sphi 0, %s132
      %s147 = sphi 0, %s133
      %s153 = sphi 0, %s155
      %s156 = sphi 0, %s153
      %s157 = sphi 0, %s156
      %s173 = sphi 0, %s157
      %s179 = sphi 0, %s181
      %s182 = sphi 0, %s179
      %s183 = sphi 0, %s182
      %s199 = sphi 0, %s183
    $region4: #{mlp_forward.1} parent=1 // loop_header_branch
      %20 = sbr.rel (%p18) target = $region8
    $region5: #{mlp_forward.1} parent=1 // loop_body
      %s22 = ssub.s32 %s17, 1
      %s23 = ssub.s32 %s17, 2
      %s24 = sadd.s32 %s17, 1
      %s26 = sadd.s32 %s25, 1
      %p29 = scmp.eq.s32.totalorder %s17, 2
      %p30 = scmp.ne.s32.totalorder %s25, %s27
      %p31 = scmp.eq.s32.totalorder %s17, 0
      %p32 = por %p30, %p31
      %p33 = scmp.ne.s32.totalorder %s25, %s27
      %p34 = scmp.eq.s32.totalorder %s22, 2
      %p35 = por %p33, %p34
      %p36 = scmp.ne.s32.totalorder %s27, %s28
      %p37 = scmp.eq.s32.totalorder %s22, 0
      %p38 = por %p36, %p37
      %p39 = scmp.ne.s32.totalorder %s27, %s28
      %p40 = scmp.eq.s32.totalorder %s23, 2
      %p41 = por %p39, %p40
      %p43 = scmp.ne.s32.totalorder %s28, %s42
      %p44 = scmp.eq.s32.totalorder %s23, 0
      %p45 = por %p43, %p44
      %s47 = sadd.s32 %s46, 1
      %p50 = scmp.eq.s32.totalorder %s17, 2
      %p51 = scmp.ne.s32.totalorder %s46, %s48
      %p52 = scmp.eq.s32.totalorder %s17, 0
      %p53 = por %p51, %p52
      %p54 = scmp.ne.s32.totalorder %s46, %s48
      %p55 = scmp.eq.s32.totalorder %s22, 2
      %p56 = por %p54, %p55
      %p57 = scmp.ne.s32.totalorder %s48, %s49
      %p58 = scmp.eq.s32.totalorder %s22, 0
      %p59 = por %p57, %p58
      %p60 = scmp.ne.s32.totalorder %s48, %s49
      %p61 = scmp.eq.s32.totalorder %s23, 2
      %p62 = por %p60, %p61
      %p64 = scmp.ne.s32.totalorder %s49, %s63
      %p65 = scmp.eq.s32.totalorder %s23, 0
      %p66 = por %p64, %p65
      %s68 = sadd.s32 %s67, 1
      %p71 = scmp.eq.s32.totalorder %s17, 2
      %p72 = scmp.ne.s32.totalorder %s67, %s69
      %p73 = scmp.eq.s32.totalorder %s17, 0
      %p74 = por %p72, %p73
      %p75 = scmp.ne.s32.totalorder %s67, %s69
      %p76 = scmp.eq.s32.totalorder %s22, 2
      %p77 = por %p75, %p76
      %p78 = scmp.ne.s32.totalorder %s69, %s70
      %p79 = scmp.eq.s32.totalorder %s22, 0
      %p80 = por %p78, %p79
      %p81 = scmp.ne.s32.totalorder %s69, %s70
      %p82 = scmp.eq.s32.totalorder %s23, 2
      %p83 = por %p81, %p82
      %p85 = scmp.ne.s32.totalorder %s70, %s84
      %p86 = scmp.eq.s32.totalorder %s23, 0
      %p87 = por %p85, %p86
      %s89 = sadd.s32 %s88, 1
      %p92 = scmp.eq.s32.totalorder %s17, 2
      %p93 = scmp.ne.s32.totalorder %s88, %s90
      %p94 = scmp.eq.s32.totalorder %s17, 0
      %p95 = por %p93, %p94
      %p96 = scmp.ne.s32.totalorder %s88, %s90
      %p97 = scmp.eq.s32.totalorder %s22, 2
      %p98 = por %p96, %p97
      %p99 = scmp.ne.s32.totalorder %s90, %s91
      %p100 = scmp.eq.s32.totalorder %s22, 0
      %p101 = por %p99, %p100
      %p102 = scmp.ne.s32.totalorder %s90, %s91
      %p103 = scmp.eq.s32.totalorder %s23, 2
      %p104 = por %p102, %p103
      %p106 = scmp.ne.s32.totalorder %s91, %s105
      %p107 = scmp.eq.s32.totalorder %s23, 0
      %p108 = por %p106, %p107
      %s110 = sadd.s32 %s109, 1
      %p113 = scmp.eq.s32.totalorder %s17, 2
      %p114 = scmp.ne.s32.totalorder %s109, %s111
      %p115 = scmp.eq.s32.totalorder %s17, 0
      %p116 = por %p114, %p115
      %p117 = scmp.ne.s32.totalorder %s109, %s111
      %p118 = scmp.eq.s32.totalorder %s22, 2
      %p119 = por %p117, %p118
      %p120 = scmp.ne.s32.totalorder %s111, %s112
      %p121 = scmp.eq.s32.totalorder %s22, 0
      %p122 = por %p120, %p121
      %p123 = scmp.ne.s32.totalorder %s111, %s112
      %p124 = scmp.eq.s32.totalorder %s23, 2
      %p125 = por %p123, %p124
      %p127 = scmp.ne.s32.totalorder %s112, %s126
      %p128 = scmp.eq.s32.totalorder %s23, 0
      %p129 = por %p127, %p128
      %s131 = sadd.s32 %s130, 1
      %p134 = scmp.eq.s32.totalorder %s17, 2
      %p135 = scmp.ne.s32.totalorder %s130, %s132
      %p136 = scmp.eq.s32.totalorder %s17, 0
      %p137 = por %p135, %p136
      %p138 = scmp.ne.s32.totalorder %s130, %s132
      %p139 = scmp.eq.s32.totalorder %s22, 2
      %p140 = por %p138, %p139
      %p141 = scmp.ne.s32.totalorder %s132, %s133
      %p142 = scmp.eq.s32.totalorder %s22, 0
      %p143 = por %p141, %p142
      %p144 = scmp.ne.s32.totalorder %s132, %s133
      %p145 = scmp.eq.s32.totalorder %s23, 2
      %p146 = por %p144, %p145
      %p148 = scmp.ne.s32.totalorder %s133, %s147
      %p149 = scmp.eq.s32.totalorder %s23, 0
      %p150 = por %p148, %p149
      %s151 = ssub.s32 %s17, %s24
      %p152 = scmp.eq.s32.totalorder %s151, 0
      %s154 = sadd.s32 %s153, 1
      %s155 = scalar_select %p152, %s153, %s154
      %p158 = pneg %p152
      %p159 = scmp.eq.s32.totalorder %s17, 2
      %p160 = por %p158, %p159
      %p161 = scmp.ne.s32.totalorder %s153, %s156
      %p162 = scmp.eq.s32.totalorder %s17, 0
      %p163 = por %p161, %p162
      %p164 = scmp.ne.s32.totalorder %s153, %s156
      %p165 = scmp.eq.s32.totalorder %s22, 2
      %p166 = por %p164, %p165
      %p167 = scmp.ne.s32.totalorder %s156, %s157
      %p168 = scmp.eq.s32.totalorder %s22, 0
      %p169 = por %p167, %p168
      %p170 = scmp.ne.s32.totalorder %s156, %s157
      %p171 = scmp.eq.s32.totalorder %s23, 2
      %p172 = por %p170, %p171
      %p174 = scmp.ne.s32.totalorder %s157, %s173
      %p175 = scmp.eq.s32.totalorder %s23, 0
      %p176 = por %p174, %p175
      %s177 = ssub.s32 %s17, %s24
      %p178 = scmp.eq.s32.totalorder %s177, 0
      %s180 = sadd.s32 %s179, 1
      %s181 = scalar_select %p178, %s179, %s180
      %p184 = pneg %p178
      %p185 = scmp.eq.s32.totalorder %s17, 2
      %p186 = por %p184, %p185
      %p187 = scmp.ne.s32.totalorder %s179, %s182
      %p188 = scmp.eq.s32.totalorder %s17, 0
      %p189 = por %p187, %p188
      %p190 = scmp.ne.s32.totalorder %s179, %s182
      %p191 = scmp.eq.s32.totalorder %s22, 2
      %p192 = por %p190, %p191
      %p193 = scmp.ne.s32.totalorder %s182, %s183
      %p194 = scmp.eq.s32.totalorder %s22, 0
      %p195 = por %p193, %p194
      %p196 = scmp.ne.s32.totalorder %s182, %s183
      %p197 = scmp.eq.s32.totalorder %s23, 2
      %p198 = por %p196, %p197
      %p200 = scmp.ne.s32.totalorder %s183, %s199
      %p201 = scmp.eq.s32.totalorder %s23, 0
      %p202 = por %p200, %p201
      %p203 = scmp.le.s32.totalorder 1, %s17
      %p204 = scmp.lt.s32.totalorder %s17, 4
      %p205 = pnand %p203, %p204
      %p206 = pneg %p205
      // Predicated region
      $region9: #{mlp_forward.1} parent=5 // pred_check
        _
      $region10: #{mlp_forward.1} parent=5 // pred_check_branch
        %208 = sbr.rel (%p205) target = $region12
      $region11: #{mlp_forward.1} parent=5 // pred_region
        %s209 = ssub.s32 %s17, 1
        // Predicated region
        $region13: #{mlp_forward.1} parent=11 // pred_check
          %p210 = pneg %p38
        $region14: #{mlp_forward.1} parent=11 // pred_check_branch
          %212 = sbr.rel (%p210) target = $region16
        $region15: #{mlp_forward.1} parent=11 // pred_region
          %s214 = ssub.s32 128, 128
          %215 = vsyncadd [#allocation4], %s214
          %s217 = sshll.u32 %s0, 4
          %s218 = int_to_ptr.vmem [resolvable:$true] %s217
          %220 = dma.vmem_to_smem %s218, 128, [#allocation3], [#allocation4]
        $region16: #{mlp_forward.1} parent=11 // pred_fallthru
          _
        // Predicated region
        $region17: #{mlp_forward.1} parent=11 // pred_check
          %p221 = pneg %p59
        $region18: #{mlp_forward.1} parent=11 // pred_check_branch
          %223 = sbr.rel (%p221) target = $region20
        $region19: #{mlp_forward.1} parent=11 // pred_region
          %s225 = ssub.s32 16, 16
          %226 = vsyncadd [#allocation6], %s225
          %s228 = sshll.u32 %s1, 4
          %s229 = int_to_ptr.vmem [resolvable:$true] %s228
          %231 = dma.vmem_to_smem %s229, 16, [#allocation5], [#allocation6]
        $region20: #{mlp_forward.1} parent=11 // pred_fallthru
          _
        // Predicated region
        $region21: #{mlp_forward.1} parent=11 // pred_check
          %p232 = pneg %p80
        $region22: #{mlp_forward.1} parent=11 // pred_check_branch
          %234 = sbr.rel (%p232) target = $region24
        $region23: #{mlp_forward.1} parent=11 // pred_region
          %s236 = ssub.s32 128, 128
          %237 = vsyncadd [#allocation6], %s236
          %s239 = sshll.u32 %s2, 4
          %s240 = int_to_ptr.vmem [resolvable:$true] %s239
          %242 = dma.vmem_to_smem %s240, 128, [#allocation7], [#allocation6]
        $region24: #{mlp_forward.1} parent=11 // pred_fallthru
          _
        // Predicated region
        $region25: #{mlp_forward.1} parent=11 // pred_check
          %p243 = pneg %p101
        $region26: #{mlp_forward.1} parent=11 // pred_check_branch
          %245 = sbr.rel (%p243) target = $region28
        $region27: #{mlp_forward.1} parent=11 // pred_region
          %s247 = ssub.s32 16, 16
          %248 = vsyncadd [#allocation9], %s247
          %s250 = sshll.u32 %s3, 4
          %s251 = int_to_ptr.vmem [resolvable:$true] %s250
          %253 = dma.vmem_to_smem %s251, 16, [#allocation8], [#allocation9]
        $region28: #{mlp_forward.1} parent=11 // pred_fallthru
          _
        // Predicated region
        $region29: #{mlp_forward.1} parent=11 // pred_check
          %p254 = pneg %p122
        $region30: #{mlp_forward.1} parent=11 // pred_check_branch
          %256 = sbr.rel (%p254) target = $region32
        $region31: #{mlp_forward.1} parent=11 // pred_region
          %s258 = ssub.s32 16, 16
          %259 = vsyncadd [#allocation9], %s258
          %s261 = sshll.u32 %s4, 4
          %s262 = int_to_ptr.vmem [resolvable:$true] %s261
          %264 = dma.vmem_to_smem %s262, 16, [#allocation10], [#allocation9]
        $region32: #{mlp_forward.1} parent=11 // pred_fallthru
          _
        // Predicated region
        $region33: #{mlp_forward.1} parent=11 // pred_check
          %p265 = pneg %p143
        $region34: #{mlp_forward.1} parent=11 // pred_check_branch
          %267 = sbr.rel (%p265) target = $region36
        $region35: #{mlp_forward.1} parent=11 // pred_region
          _
        $region36: #{mlp_forward.1} parent=11 // pred_fallthru
          _
      $region12: #{mlp_forward.1} parent=5 // pred_fallthru
        _
      %p268 = scmp.lt.s32.totalorder %s17, 3
      // Predicated region
      $region37: #{mlp_forward.1} parent=5 // pred_check
        %p269 = pneg %p268
      $region38: #{mlp_forward.1} parent=5 // pred_check_branch
        %271 = sbr.rel (%p269) target = $region40
      $region39: #{mlp_forward.1} parent=5 // pred_region
        // Predicated region
        $region41: #{mlp_forward.1} parent=39 // pred_check
          %p272 = pneg %p163
        $region42: #{mlp_forward.1} parent=39 // pred_check_branch
          %274 = sbr.rel (%p272) target = $region44
        $region43: #{mlp_forward.1} parent=39 // pred_region
          %s275 = sand.u32 %s153, 1
          %s276 = sand.u32 %s153, 1
          %s277 = smul.addr %s276, 512
          %s278 = scalar_lea.vmem [#allocation11], %s277
          %s279 = smul.u32 8, %s17
          %s280 = ssub.s32 18, %s279
          %p281 = scmp.lt.s32.totalorder %s280, 8
          %s282 = scalar_select %p281, %s280, 8
          %s283 = smul.u32 256, %s282
          %s284 = smul.u32 %s283, 4
          %p285 = scmp.ne.s32.totalorder 0, %s284
          %s286 = smul.addr %s279, 4
          %s287 = smul.addr %s286, 8
          %s288 = scalar_lea.vmem %s6, %s287
          // Predicated region
          $region45: #{mlp_forward.1} parent=43 // pred_check
            %p289 = pneg %p285
          $region46: #{mlp_forward.1} parent=43 // pred_check_branch
            %291 = sbr.rel (%p289) target = $region48
          $region47: #{mlp_forward.1} parent=43 // pred_region
            // Predicated region
            $region49: #{mlp_forward.1} parent=47 // pred_check
              _
            $region50: #{mlp_forward.1} parent=47 // pred_check_branch
              %293 = sbr.rel (0) target = $region52
            $region51: #{mlp_forward.1} parent=47 // pred_region
              %s294 = sshrl.u32 %s282, 3
              // While loop
              $region53: #{mlp_forward.1} parent=51 // loop_pre_header
                _
              $region54: #{mlp_forward.1} parent=51 // loop_header
                %s296 = sphi 0, %s298
                %p297 = scmp.ge.s32.totalorder %s296, %s294
                %s301 = sphi 0, %s434
                %s302 = sphi %s288, %s437
                %s303 = sphi %s278, %s438
              $region55: #{mlp_forward.1} parent=51 // loop_header_branch
                %300 = sbr.rel (%p297) target = $region59
              $region56: #{mlp_forward.1} parent=51 // loop_body
                %v304 = vld [vmem:[%s302] sm:$0xff]
                %305 = vst [vmem:[%s303] sm:$0xff] %v304
                %v306 = vld [vmem:[%s302 + $0x20] sm:$0xff]
                %307 = vst [vmem:[%s303 + $0x20] sm:$0xff] %v306
                %v308 = vld [vmem:[%s302 + $0x40] sm:$0xff]
                %309 = vst [vmem:[%s303 + $0x40] sm:$0xff] %v308
                %v310 = vld [vmem:[%s302 + $0x60] sm:$0xff]
                %311 = vst [vmem:[%s303 + $0x60] sm:$0xff] %v310
                %v312 = vld [vmem:[%s302 + $0x80] sm:$0xff]
                %313 = vst [vmem:[%s303 + $0x80] sm:$0xff] %v312
                %v314 = vld [vmem:[%s302 + $0xa0] sm:$0xff]
                %315 = vst [vmem:[%s303 + $0xa0] sm:$0xff] %v314
                %v316 = vld [vmem:[%s302 + $0xc0] sm:$0xff]
                %317 = vst [vmem:[%s303 + $0xc0] sm:$0xff] %v316
                %v318 = vld [vmem:[%s302 + $0xe0] sm:$0xff]
                %319 = vst [vmem:[%s303 + $0xe0] sm:$0xff] %v318
                %v320 = vld [vmem:[%s302 + $0x8] sm:$0xff]
                %321 = vst [vmem:[%s303 + $0x8] sm:$0xff] %v320
                %v322 = vld [vmem:[%s302 + $0x28] sm:$0xff]
                %323 = vst [vmem:[%s303 + $0x28] sm:$0xff] %v322
                %v324 = vld [vmem:[%s302 + $0x48] sm:$0xff]
                %325 = vst [vmem:[%s303 + $0x48] sm:$0xff] %v324
                %v326 = vld [vmem:[%s302 + $0x68] sm:$0xff]
                %327 = vst [vmem:[%s303 + $0x68] sm:$0xff] %v326
                %v328 = vld [vmem:[%s302 + $0x88] sm:$0xff]
                %329 = vst [vmem:[%s303 + $0x88] sm:$0xff] %v328
                %v330 = vld [vmem:[%s302 + $0xa8] sm:$0xff]
                %331 = vst [vmem:[%s303 + $0xa8] sm:$0xff] %v330
                %v332 = vld [vmem:[%s302 + $0xc8] sm:$0xff]
                %333 = vst [vmem:[%s303 + $0xc8] sm:$0xff] %v332
                %v334 = vld [vmem:[%s302 + $0xe8] sm:$0xff]
                %335 = vst [vmem:[%s303 + $0xe8] sm:$0xff] %v334
                %v336 = vld [vmem:[%s302 + $0x10] sm:$0xff]
                %337 = vst [vmem:[%s303 + $0x10] sm:$0xff] %v336
                %v338 = vld [vmem:[%s302 + $0x30] sm:$0xff]
                %339 = vst [vmem:[%s303 + $0x30] sm:$0xff] %v338
                %v340 = vld [vmem:[%s302 + $0x50] sm:$0xff]
                %341 = vst [vmem:[%s303 + $0x50] sm:$0xff] %v340
                %v342 = vld [vmem:[%s302 + $0x70] sm:$0xff]
                %343 = vst [vmem:[%s303 + $0x70] sm:$0xff] %v342
                %v344 = vld [vmem:[%s302 + $0x90] sm:$0xff]
                %345 = vst [vmem:[%s303 + $0x90] sm:$0xff] %v344
                %v346 = vld [vmem:[%s302 + $0xb0] sm:$0xff]
                %347 = vst [vmem:[%s303 + $0xb0] sm:$0xff] %v346
                %v348 = vld [vmem:[%s302 + $0xd0] sm:$0xff]
                %349 = vst [vmem:[%s303 + $0xd0] sm:$0xff] %v348
                %v350 = vld [vmem:[%s302 + $0xf0] sm:$0xff]
                %351 = vst [vmem:[%s303 + $0xf0] sm:$0xff] %v350
                %v352 = vld [vmem:[%s302 + $0x18] sm:$0xff]
                %353 = vst [vmem:[%s303 + $0x18] sm:$0xff] %v352
                %v354 = vld [vmem:[%s302 + $0x38] sm:$0xff]
                %355 = vst [vmem:[%s303 + $0x38] sm:$0xff] %v354
                %v356 = vld [vmem:[%s302 + $0x58] sm:$0xff]
                %357 = vst [vmem:[%s303 + $0x58] sm:$0xff] %v356
                %v358 = vld [vmem:[%s302 + $0x78] sm:$0xff]
                %359 = vst [vmem:[%s303 + $0x78] sm:$0xff] %v358
                %v360 = vld [vmem:[%s302 + $0x98] sm:$0xff]
                %361 = vst [vmem:[%s303 + $0x98] sm:$0xff] %v360
                %v362 = vld [vmem:[%s302 + $0xb8] sm:$0xff]
                %363 = vst [vmem:[%s303 + $0xb8] sm:$0xff] %v362
                %v364 = vld [vmem:[%s302 + $0xd8] sm:$0xff]
                %365 = vst [vmem:[%s303 + $0xd8] sm:$0xff] %v364
                %v366 = vld [vmem:[%s302 + $0xf8] sm:$0xff]
                %367 = vst [vmem:[%s303 + $0xf8] sm:$0xff] %v366
                %v368 = vld [vmem:[%s302 + $0x240] sm:$0xff]
                %369 = vst [vmem:[%s303 + $0x100] sm:$0xff] %v368
                %v370 = vld [vmem:[%s302 + $0x260] sm:$0xff]
                %371 = vst [vmem:[%s303 + $0x120] sm:$0xff] %v370
                %v372 = vld [vmem:[%s302 + $0x280] sm:$0xff]
                %373 = vst [vmem:[%s303 + $0x140] sm:$0xff] %v372
                %v374 = vld [vmem:[%s302 + $0x2a0] sm:$0xff]
                %375 = vst [vmem:[%s303 + $0x160] sm:$0xff] %v374
                %v376 = vld [vmem:[%s302 + $0x2c0] sm:$0xff]
                %377 = vst [vmem:[%s303 + $0x180] sm:$0xff] %v376
                %v378 = vld [vmem:[%s302 + $0x2e0] sm:$0xff]
                %379 = vst [vmem:[%s303 + $0x1a0] sm:$0xff] %v378
                %v380 = vld [vmem:[%s302 + $0x300] sm:$0xff]
                %381 = vst [vmem:[%s303 + $0x1c0] sm:$0xff] %v380
                %v382 = vld [vmem:[%s302 + $0x320] sm:$0xff]
                %383 = vst [vmem:[%s303 + $0x1e0] sm:$0xff] %v382
                %v384 = vld [vmem:[%s302 + $0x248] sm:$0xff]
                %385 = vst [vmem:[%s303 + $0x108] sm:$0xff] %v384
                %v386 = vld [vmem:[%s302 + $0x268] sm:$0xff]
                %387 = vst [vmem:[%s303 + $0x128] sm:$0xff] %v386
                %v388 = vld [vmem:[%s302 + $0x288] sm:$0xff]
                %389 = vst [vmem:[%s303 + $0x148] sm:$0xff] %v388
                %v390 = vld [vmem:[%s302 + $0x2a8] sm:$0xff]
                %391 = vst [vmem:[%s303 + $0x168] sm:$0xff] %v390
                %v392 = vld [vmem:[%s302 + $0x2c8] sm:$0xff]
                %393 = vst [vmem:[%s303 + $0x188] sm:$0xff] %v392
                %v394 = vld [vmem:[%s302 + $0x2e8] sm:$0xff]
                %395 = vst [vmem:[%s303 + $0x1a8] sm:$0xff] %v394
                %v396 = vld [vmem:[%s302 + $0x308] sm:$0xff]
                %397 = vst [vmem:[%s303 + $0x1c8] sm:$0xff] %v396
                %v398 = vld [vmem:[%s302 + $0x328] sm:$0xff]
                %399 = vst [vmem:[%s303 + $0x1e8] sm:$0xff] %v398
                %v400 = vld [vmem:[%s302 + $0x250] sm:$0xff]
                %401 = vst [vmem:[%s303 + $0x110] sm:$0xff] %v400
                %v402 = vld [vmem:[%s302 + $0x270] sm:$0xff]
                %403 = vst [vmem:[%s303 + $0x130] sm:$0xff] %v402
                %v404 = vld [vmem:[%s302 + $0x290] sm:$0xff]
                %405 = vst [vmem:[%s303 + $0x150] sm:$0xff] %v404
                %v406 = vld [vmem:[%s302 + $0x2b0] sm:$0xff]
                %407 = vst [vmem:[%s303 + $0x170] sm:$0xff] %v406
                %v408 = vld [vmem:[%s302 + $0x2d0] sm:$0xff]
                %409 = vst [vmem:[%s303 + $0x190] sm:$0xff] %v408
                %v410 = vld [vmem:[%s302 + $0x2f0] sm:$0xff]
                %411 = vst [vmem:[%s303 + $0x1b0] sm:$0xff] %v410
                %v412 = vld [vmem:[%s302 + $0x310] sm:$0xff]
                %413 = vst [vmem:[%s303 + $0x1d0] sm:$0xff] %v412
                %v414 = vld [vmem:[%s302 + $0x330] sm:$0xff]
                %415 = vst [vmem:[%s303 + $0x1f0] sm:$0xff] %v414
                %v416 = vld [vmem:[%s302 + $0x258] sm:$0xff]
                %417 = vst [vmem:[%s303 + $0x118] sm:$0xff] %v416
                %v418 = vld [vmem:[%s302 + $0x278] sm:$0xff]
                %419 = vst [vmem:[%s303 + $0x138] sm:$0xff] %v418
                %v420 = vld [vmem:[%s302 + $0x298] sm:$0xff]
                %421 = vst [vmem:[%s303 + $0x158] sm:$0xff] %v420
                %v422 = vld [vmem:[%s302 + $0x2b8] sm:$0xff]
                %423 = vst [vmem:[%s303 + $0x178] sm:$0xff] %v422
                %v424 = vld [vmem:[%s302 + $0x2d8] sm:$0xff]
                %425 = vst [vmem:[%s303 + $0x198] sm:$0xff] %v424
                %v426 = vld [vmem:[%s302 + $0x2f8] sm:$0xff]
                %427 = vst [vmem:[%s303 + $0x1b8] sm:$0xff] %v426
                %v428 = vld [vmem:[%s302 + $0x318] sm:$0xff]
                %429 = vst [vmem:[%s303 + $0x1d8] sm:$0xff] %v428
                %v430 = vld [vmem:[%s302 + $0x338] sm:$0xff]
                %431 = vst [vmem:[%s303 + $0x1f8] sm:$0xff] %v430
                %s432 = sadd.s32 1, %s301
                %p433 = scmp.ge.s32.totalorder %s432, %s294
                %s434 = scalar_select %p433, 0, %s432
                %s435 = smul.u32 %s434, 256
                %s436 = smul.u32 %s434, 256
                %s437 = scalar_lea.vmem %s288, %s435
                %s438 = scalar_lea.vmem %s278, %s436 [#allocation11]
              $region57: #{mlp_forward.1} parent=51 // loop_footer
                %s298 = sadd.s32 %s296, 1
              $region58: #{mlp_forward.1} parent=51 // loop_footer_branch
                %295 = sbr.rel target = $region54
              $region59: #{mlp_forward.1} parent=51 // loop_exit
                _
              %s439 = sshrl.u32 %s282, 3
              %s440 = sand.u32 %s282, 7
              %s441 = smul.u32 %s439, 8
              %s442 = smul.u32 32, %s441
              %s443 = scalar_lea.vmem %s288, %s442
              %s444 = smul.u32 32, %s441
              %s445 = scalar_lea.vmem %s278, %s444 [#allocation11]
              // While loop
              $region60: #{mlp_forward.1} parent=51 // loop_pre_header
                _
              $region61: #{mlp_forward.1} parent=51 // loop_header
                %s447 = sphi 0, %s449
                %p448 = scmp.ge.s32.totalorder %s447, %s440
                %s452 = sphi 0, %s473
                %s453 = sphi %s443, %s476
                %s454 = sphi %s445, %s477
              $region62: #{mlp_forward.1} parent=51 // loop_header_branch
                %451 = sbr.rel (%p448) target = $region66
              $region63: #{mlp_forward.1} parent=51 // loop_body
                %v455 = vld [vmem:[%s453] sm:$0xff]
                %456 = vst [vmem:[%s454] sm:$0xff] %v455
                %v457 = vld [vmem:[%s453 + $0x8] sm:$0xff]
                %458 = vst [vmem:[%s454 + $0x8] sm:$0xff] %v457
                %v459 = vld [vmem:[%s453 + $0x10] sm:$0xff]
                %460 = vst [vmem:[%s454 + $0x10] sm:$0xff] %v459
                %v461 = vld [vmem:[%s453 + $0x18] sm:$0xff]
                %462 = vst [vmem:[%s454 + $0x18] sm:$0xff] %v461
                %v463 = vld [vmem:[%s453 + $0x240] sm:$0xff]
                %464 = vst [vmem:[%s454 + $0x100] sm:$0xff] %v463
                %v465 = vld [vmem:[%s453 + $0x248] sm:$0xff]
                %466 = vst [vmem:[%s454 + $0x108] sm:$0xff] %v465
                %v467 = vld [vmem:[%s453 + $0x250] sm:$0xff]
                %468 = vst [vmem:[%s454 + $0x110] sm:$0xff] %v467
                %v469 = vld [vmem:[%s453 + $0x258] sm:$0xff]
                %470 = vst [vmem:[%s454 + $0x118] sm:$0xff] %v469
                %s471 = sadd.s32 1, %s452
                %p472 = scmp.ge.s32.totalorder %s471, %s440
                %s473 = scalar_select %p472, 0, %s471
                %s474 = smul.u32 %s473, 32
                %s475 = smul.u32 %s473, 32
                %s476 = scalar_lea.vmem %s443, %s474
                %s477 = scalar_lea.vmem %s445, %s475 [#allocation11]
              $region64: #{mlp_forward.1} parent=51 // loop_footer
                %s449 = sadd.s32 %s447, 1
              $region65: #{mlp_forward.1} parent=51 // loop_footer_branch
                %446 = sbr.rel target = $region61
              $region66: #{mlp_forward.1} parent=51 // loop_exit
                _
            $region52: #{mlp_forward.1} parent=47 // pred_fallthru
              _
            // Predicated region
            $region67: #{mlp_forward.1} parent=47 // pred_check
              _
            $region68: #{mlp_forward.1} parent=47 // pred_check_branch
              %479 = sbr.rel target = $region70
            $region69: #{mlp_forward.1} parent=47 // pred_region
              _
            $region70: #{mlp_forward.1} parent=47 // pred_fallthru
              _
          $region48: #{mlp_forward.1} parent=43 // pred_fallthru
            _
          %480 = vnop
        $region44: #{mlp_forward.1} parent=39 // pred_fallthru
          _
      $region40: #{mlp_forward.1} parent=5 // pred_fallthru
        _
      %p481 = scmp.le.s32.totalorder 1, %s17
      %p482 = scmp.lt.s32.totalorder %s17, 4
      %p483 = pnand %p481, %p482
      %p484 = pneg %p483
      // Predicated region
      $region71: #{mlp_forward.1} parent=5 // pred_check
        _
      $region72: #{mlp_forward.1} parent=5 // pred_check_branch
        %486 = sbr.rel (%p483) target = $region74
      $region73: #{mlp_forward.1} parent=5 // pred_region
        %s487 = ssub.s32 %s17, 1
        // Predicated region
        $region75: #{mlp_forward.1} parent=73 // pred_check
          %p488 = pneg %p38
        $region76: #{mlp_forward.1} parent=73 // pred_check_branch
          %490 = sbr.rel (%p488) target = $region78
        $region77: #{mlp_forward.1} parent=73 // pred_region
          %491 = dma.done [#allocation4], 128
        $region78: #{mlp_forward.1} parent=73 // pred_fallthru
          _
        // Predicated region
        $region79: #{mlp_forward.1} parent=73 // pred_check
          %p492 = pneg %p59
        $region80: #{mlp_forward.1} parent=73 // pred_check_branch
          %494 = sbr.rel (%p492) target = $region82
        $region81: #{mlp_forward.1} parent=73 // pred_region
          %495 = dma.done [#allocation6], 16
        $region82: #{mlp_forward.1} parent=73 // pred_fallthru
          _
        // Predicated region
        $region83: #{mlp_forward.1} parent=73 // pred_check
          %p496 = pneg %p80
        $region84: #{mlp_forward.1} parent=73 // pred_check_branch
          %498 = sbr.rel (%p496) target = $region86
        $region85: #{mlp_forward.1} parent=73 // pred_region
          %499 = dma.done [#allocation6], 128
        $region86: #{mlp_forward.1} parent=73 // pred_fallthru
          _
        // Predicated region
        $region87: #{mlp_forward.1} parent=73 // pred_check
          %p500 = pneg %p101
        $region88: #{mlp_forward.1} parent=73 // pred_check_branch
          %502 = sbr.rel (%p500) target = $region90
        $region89: #{mlp_forward.1} parent=73 // pred_region
          %503 = dma.done [#allocation9], 16
        $region90: #{mlp_forward.1} parent=73 // pred_fallthru
          _
        // Predicated region
        $region91: #{mlp_forward.1} parent=73 // pred_check
          %p504 = pneg %p122
        $region92: #{mlp_forward.1} parent=73 // pred_check_branch
          %506 = sbr.rel (%p504) target = $region94
        $region93: #{mlp_forward.1} parent=73 // pred_region
          %507 = dma.done [#allocation9], 16
        $region94: #{mlp_forward.1} parent=73 // pred_fallthru
          _
        %s508 = sand.u32 %s156, 1
        %s509 = sand.u32 %s156, 1
        %s510 = smul.addr %s509, 512
        %s511 = scalar_lea.vmem [#allocation11], %s510
        // Predicated region
        $region95: #{mlp_forward.1} parent=73 // pred_check
          %p512 = pneg %p169
        $region96: #{mlp_forward.1} parent=73 // pred_check_branch
          %514 = sbr.rel (%p512) target = $region98
        $region97: #{mlp_forward.1} parent=73 // pred_region
          _
        $region98: #{mlp_forward.1} parent=73 // pred_fallthru
          _
        %515 = sfence
        %p516 = pneg %p38
        %p517 = pneg %p35
        %p518 = pneg %p59
        %p519 = pneg %p56
        %p520 = pneg %p80
        %p521 = pneg %p77
        %p522 = pneg %p101
        %p523 = pneg %p98
        %p524 = pneg %p122
        %p525 = pneg %p119
        %p526 = pneg %p143
        %p527 = pneg %p140
        %s528 = sand.u32 %s156, 1
        %s529 = sand.u32 %s156, 1
        %s530 = smul.addr %s529, 512
        %s531 = scalar_lea.vmem [#allocation11], %s530
        %p532 = pneg %p169
        %p533 = pneg %p166
        %p534 = pneg %p195
        %p535 = pneg %p192
        %s536 = sand.u32 %s182, 1
        %s537 = sand.u32 %s182, 1
        %s538 = smul.addr %s537, 256
        %s539 = scalar_lea.vmem [#allocation12], %s538
        %s540 = smul.u32 8, %s22
        %s541 = ssub.s32 18, %s540
        %p542 = scmp.lt.s32.totalorder %s541, 8
        %s543 = scalar_select %p542, %s541, 8
        %s544 = smul.u32 256, %s543
        %s545 = smul.u32 %s544, 4
        %s546 = smul.u32 8, %s22
        %s547 = ssub.s32 18, %s546
        %p548 = scmp.lt.s32.totalorder %s547, 8
        %s549 = scalar_select %p548, %s547, 8
        %s550 = smul.u32 128, %s549
        %s551 = smul.u32 %s550, 4
        loop: start=0, step=1, limit=8
        $region99: #{mlp_forward.1} parent=73 // loop_pre_header
          _
        $region100: #{mlp_forward.1} parent=73 // loop_header
          %s553 = sphi 0, %s557
          %p554 = scmp.ge.s32.totalorder %s553, 8
        $region101: #{mlp_forward.1} parent=73 // loop_header_branch
          %556 = sbr.rel (%p554) target = $region105
        $region102: #{mlp_forward.1} parent=73 // loop_body
          %s558 = smul.u32 %s553, 8
          %s559 = sshra.s32 %s558, 3
          %s560 = sand.u32 %s558, 7
          %s561 = smul.u32 %s559, 4
          %s562 = smul.addr %s561, 8
          %s563 = scalar_lea.vmem %s511, %s562 [#allocation11]
          %v564 = vld [vmem:[%s563] sm:$0xff]
          %v565 = vld [vmem:[%s563 + $0x8] sm:$0xff]
          %s566 = sadd.s32 %s561, 32
          %s567 = smul.addr %s566, 8
          %s568 = scalar_lea.vmem %s511, %s567 [#allocation11]
          %v569 = vld [vmem:[%s568] sm:$0xff]
          %v570 = vld [vmem:[%s568 + $0x8] sm:$0xff]
          %s571 = sld [smem:[#allocation3]]
          %v572 = vstv %s571
          %v573 = vmul.f32 %v572, %v564
          %v574 = vmul.f32 %v572, %v565
          %s575 = sld [smem:[#allocation3 + $0x1]]
          %v576 = vstv %s575
          %v577 = vmul.f32 %v576, %v569
          %v578 = vmul.f32 %v576, %v570
          %v579 = vadd.f32 %v573, %v577
          %v580 = vadd.f32 %v574, %v578
          %s581 = sld [smem:[#allocation5]]
          %v582 = vstv %s581
          %v583 = vadd.f32 %v579, %v582
          %v584 = vadd.f32 %v580, %v582
          %v585 = vtanh.pop %v583
          %v586 = vtanh.pop %v584
          %s587 = sld [smem:[#allocation3 + $0x80]]
          %v588 = vstv %s587
          %v589 = vmul.f32 %v588, %v564
          %v590 = vmul.f32 %v588, %v565
          %s591 = sld [smem:[#allocation3 + $0x81]]
          %v592 = vstv %s591
          %v593 = vmul.f32 %v592, %v569
          %v594 = vmul.f32 %v592, %v570
          %v595 = vadd.f32 %v589, %v593
          %v596 = vadd.f32 %v590, %v594
          %s597 = sld [smem:[#allocation5 + $0x1]]
          %v598 = vstv %s597
          %v599 = vadd.f32 %v595, %v598
          %v600 = vadd.f32 %v596, %v598
          %v601 = vtanh.pop %v599
          %v602 = vtanh.pop %v600
          %s603 = sld [smem:[#allocation3 + $0x100]]
          %v604 = vstv %s603
          %v605 = vmul.f32 %v604, %v564
          %v606 = vmul.f32 %v604, %v565
          %s607 = sld [smem:[#allocation3 + $0x101]]
          %v608 = vstv %s607
          %v609 = vmul.f32 %v608, %v569
          %v610 = vmul.f32 %v608, %v570
          %v611 = vadd.f32 %v605, %v609
          %v612 = vadd.f32 %v606, %v610
          %s613 = sld [smem:[#allocation5 + $0x2]]
          %v614 = vstv %s613
          %v615 = vadd.f32 %v611, %v614
          %v616 = vadd.f32 %v612, %v614
          %v617 = vtanh.pop %v615
          %v618 = vtanh.pop %v616
          %s619 = sld [smem:[#allocation3 + $0x180]]
          %v620 = vstv %s619
          %v621 = vmul.f32 %v620, %v564
          %v622 = vmul.f32 %v620, %v565
          %s623 = sld [smem:[#allocation3 + $0x181]]
          %v624 = vstv %s623
          %v625 = vmul.f32 %v624, %v569
          %v626 = vmul.f32 %v624, %v570
          %v627 = vadd.f32 %v621, %v625
          %v628 = vadd.f32 %v622, %v626
          %s629 = sld [smem:[#allocation5 + $0x3]]
          %v630 = vstv %s629
          %v631 = vadd.f32 %v627, %v630
          %v632 = vadd.f32 %v628, %v630
          %v633 = vtanh.pop %v631
          %v634 = vtanh.pop %v632
          %s635 = sld [smem:[#allocation3 + $0x200]]
          %v636 = vstv %s635
          %v637 = vmul.f32 %v636, %v564
          %v638 = vmul.f32 %v636, %v565
          %s639 = sld [smem:[#allocation3 + $0x201]]
          %v640 = vstv %s639
          %v641 = vmul.f32 %v640, %v569
          %v642 = vmul.f32 %v640, %v570
          %v643 = vadd.f32 %v637, %v641
          %v644 = vadd.f32 %v638, %v642
          %s645 = sld [smem:[#allocation5 + $0x4]]
          %v646 = vstv %s645
          %v647 = vadd.f32 %v643, %v646
          %v648 = vadd.f32 %v644, %v646
          %v649 = vtanh.pop %v647
          %v650 = vtanh.pop %v648
          %s651 = sld [smem:[#allocation3 + $0x280]]
          %v652 = vstv %s651
          %v653 = vmul.f32 %v652, %v564
          %v654 = vmul.f32 %v652, %v565
          %s655 = sld [smem:[#allocation3 + $0x281]]
          %v656 = vstv %s655
          %v657 = vmul.f32 %v656, %v569
          %v658 = vmul.f32 %v656, %v570
          %v659 = vadd.f32 %v653, %v657
          %v660 = vadd.f32 %v654, %v658
          %s661 = sld [smem:[#allocation5 + $0x5]]
          %v662 = vstv %s661
          %v663 = vadd.f32 %v659, %v662
          %v664 = vadd.f32 %v660, %v662
          %v665 = vtanh.pop %v663
          %v666 = vtanh.pop %v664
          %s667 = sld [smem:[#allocation3 + $0x300]]
          %v668 = vstv %s667
          %v669 = vmul.f32 %v668, %v564
          %v670 = vmul.f32 %v668, %v565
          %s671 = sld [smem:[#allocation3 + $0x301]]
          %v672 = vstv %s671
          %v673 = vmul.f32 %v672, %v569
          %v674 = vmul.f32 %v672, %v570
          %v675 = vadd.f32 %v669, %v673
          %v676 = vadd.f32 %v670, %v674
          %s677 = sld [smem:[#allocation5 + $0x6]]
          %v678 = vstv %s677
          %v679 = vadd.f32 %v675, %v678
          %v680 = vadd.f32 %v676, %v678
          %v681 = vtanh.pop %v679
          %v682 = vtanh.pop %v680
          %s683 = sld [smem:[#allocation3 + $0x380]]
          %v684 = vstv %s683
          %v685 = vmul.f32 %v684, %v564
          %v686 = vmul.f32 %v684, %v565
          %s687 = sld [smem:[#allocation3 + $0x381]]
          %v688 = vstv %s687
          %v689 = vmul.f32 %v688, %v569
          %v690 = vmul.f32 %v688, %v570
          %v691 = vadd.f32 %v685, %v689
          %v692 = vadd.f32 %v686, %v690
          %s693 = sld [smem:[#allocation5 + $0x7]]
          %v694 = vstv %s693
          %v695 = vadd.f32 %v691, %v694
          %v696 = vadd.f32 %v692, %v694
          %v697 = vtanh.pop %v695
          %v698 = vtanh.pop %v696
          %s699 = sld [smem:[#allocation7]]
          %v700 = vstv %s699
          %v701 = vmul.f32 %v700, %v585
          %v702 = vmul.f32 %v700, %v586
          %s703 = sld [smem:[#allocation8]]
          %v704 = vstv %s703
          %v705 = vadd.f32 %v701, %v704
          %v706 = vadd.f32 %v702, %v704
          %s707 = sld [smem:[#allocation7 + $0x1]]
          %v708 = vstv %s707
          %v709 = vmul.f32 %v708, %v601
          %v710 = vmul.f32 %v708, %v602
          %v711 = vadd.f32 %v705, %v709
          %v712 = vadd.f32 %v706, %v710
          %s713 = sld [smem:[#allocation7 + $0x2]]
          %v714 = vstv %s713
          %v715 = vmul.f32 %v714, %v617
          %v716 = vmul.f32 %v714, %v618
          %v717 = vadd.f32 %v711, %v715
          %v718 = vadd.f32 %v712, %v716
          %s719 = sld [smem:[#allocation7 + $0x3]]
          %v720 = vstv %s719
          %v721 = vmul.f32 %v720, %v633
          %v722 = vmul.f32 %v720, %v634
          %v723 = vadd.f32 %v717, %v721
          %v724 = vadd.f32 %v718, %v722
          %s725 = sld [smem:[#allocation7 + $0x4]]
          %v726 = vstv %s725
          %v727 = vmul.f32 %v726, %v649
          %v728 = vmul.f32 %v726, %v650
          %v729 = vadd.f32 %v723, %v727
          %v730 = vadd.f32 %v724, %v728
          %s731 = sld [smem:[#allocation7 + $0x5]]
          %v732 = vstv %s731
          %v733 = vmul.f32 %v732, %v665
          %v734 = vmul.f32 %v732, %v666
          %v735 = vadd.f32 %v729, %v733
          %v736 = vadd.f32 %v730, %v734
          %s737 = sld [smem:[#allocation7 + $0x6]]
          %v738 = vstv %s737
          %v739 = vmul.f32 %v738, %v681
          %v740 = vmul.f32 %v738, %v682
          %v741 = vadd.f32 %v735, %v739
          %v742 = vadd.f32 %v736, %v740
          %s743 = sld [smem:[#allocation7 + $0x7]]
          %v744 = vstv %s743
          %v745 = vmul.f32 %v744, %v697
          %v746 = vmul.f32 %v744, %v698
          %v747 = vadd.f32 %v741, %v745
          %v748 = vadd.f32 %v742, %v746
          %v749 = vtanh.pop %v747
          %v750 = vtanh.pop %v748
          %s751 = sld [smem:[#allocation10]]
          %v752 = vstv %s751
          %v753 = vmul.f32 %v752, %v749
          %v754 = vmul.f32 %v752, %v750
          %s755 = sld [smem:[#allocation7 + $0x80]]
          %v756 = vstv %s755
          %v757 = vmul.f32 %v756, %v585
          %v758 = vmul.f32 %v756, %v586
          %s759 = sld [smem:[#allocation8 + $0x1]]
          %v760 = vstv %s759
          %v761 = vadd.f32 %v757, %v760
          %v762 = vadd.f32 %v758, %v760
          %s763 = sld [smem:[#allocation7 + $0x81]]
          %v764 = vstv %s763
          %v765 = vmul.f32 %v764, %v601
          %v766 = vmul.f32 %v764, %v602
          %v767 = vadd.f32 %v761, %v765
          %v768 = vadd.f32 %v762, %v766
          %s769 = sld [smem:[#allocation7 + $0x82]]
          %v770 = vstv %s769
          %v771 = vmul.f32 %v770, %v617
          %v772 = vmul.f32 %v770, %v618
          %v773 = vadd.f32 %v767, %v771
          %v774 = vadd.f32 %v768, %v772
          %s775 = sld [smem:[#allocation7 + $0x83]]
          %v776 = vstv %s775
          %v777 = vmul.f32 %v776, %v633
          %v778 = vmul.f32 %v776, %v634
          %v779 = vadd.f32 %v773, %v777
          %v780 = vadd.f32 %v774, %v778
          %s781 = sld [smem:[#allocation7 + $0x84]]
          %v782 = vstv %s781
          %v783 = vmul.f32 %v782, %v649
          %v784 = vmul.f32 %v782, %v650
          %v785 = vadd.f32 %v779, %v783
          %v786 = vadd.f32 %v780, %v784
          %s787 = sld [smem:[#allocation7 + $0x85]]
          %v788 = vstv %s787
          %v789 = vmul.f32 %v788, %v665
          %v790 = vmul.f32 %v788, %v666
          %v791 = vadd.f32 %v785, %v789
          %v792 = vadd.f32 %v786, %v790
          %s793 = sld [smem:[#allocation7 + $0x86]]
          %v794 = vstv %s793
          %v795 = vmul.f32 %v794, %v681
          %v796 = vmul.f32 %v794, %v682
          %v797 = vadd.f32 %v791, %v795
          %v798 = vadd.f32 %v792, %v796
          %s799 = sld [smem:[#allocation7 + $0x87]]
          %v800 = vstv %s799
          %v801 = vmul.f32 %v800, %v697
          %v802 = vmul.f32 %v800, %v698
          %v803 = vadd.f32 %v797, %v801
          %v804 = vadd.f32 %v798, %v802
          %v805 = vtanh.pop %v803
          %v806 = vtanh.pop %v804
          %s807 = sld [smem:[#allocation10 + $0x1]]
          %v808 = vstv %s807
          %v809 = vmul.f32 %v808, %v805
          %v810 = vmul.f32 %v808, %v806
          %v811 = vadd.f32 %v753, %v809
          %v812 = vadd.f32 %v754, %v810
          %s813 = sld [smem:[#allocation7 + $0x100]]
          %v814 = vstv %s813
          %v815 = vmul.f32 %v814, %v585
          %v816 = vmul.f32 %v814, %v586
          %s817 = sld [smem:[#allocation8 + $0x2]]
          %v818 = vstv %s817
          %v819 = vadd.f32 %v815, %v818
          %v820 = vadd.f32 %v816, %v818
          %s821 = sld [smem:[#allocation7 + $0x101]]
          %v822 = vstv %s821
          %v823 = vmul.f32 %v822, %v601
          %v824 = vmul.f32 %v822, %v602
          %v825 = vadd.f32 %v819, %v823
          %v826 = vadd.f32 %v820, %v824
          %s827 = sld [smem:[#allocation7 + $0x102]]
          %v828 = vstv %s827
          %v829 = vmul.f32 %v828, %v617
          %v830 = vmul.f32 %v828, %v618
          %v831 = vadd.f32 %v825, %v829
          %v832 = vadd.f32 %v826, %v830
          %s833 = sld [smem:[#allocation7 + $0x103]]
          %v834 = vstv %s833
          %v835 = vmul.f32 %v834, %v633
          %v836 = vmul.f32 %v834, %v634
          %v837 = vadd.f32 %v831, %v835
          %v838 = vadd.f32 %v832, %v836
          %s839 = sld [smem:[#allocation7 + $0x104]]
          %v840 = vstv %s839
          %v841 = vmul.f32 %v840, %v649
          %v842 = vmul.f32 %v840, %v650
          %v843 = vadd.f32 %v837, %v841
          %v844 = vadd.f32 %v838, %v842
          %s845 = sld [smem:[#allocation7 + $0x105]]
          %v846 = vstv %s845
          %v847 = vmul.f32 %v846, %v665
          %v848 = vmul.f32 %v846, %v666
          %v849 = vadd.f32 %v843, %v847
          %v850 = vadd.f32 %v844, %v848
          %s851 = sld [smem:[#allocation7 + $0x106]]
          %v852 = vstv %s851
          %v853 = vmul.f32 %v852, %v681
          %v854 = vmul.f32 %v852, %v682
          %v855 = vadd.f32 %v849, %v853
          %v856 = vadd.f32 %v850, %v854
          %s857 = sld [smem:[#allocation7 + $0x107]]
          %v858 = vstv %s857
          %v859 = vmul.f32 %v858, %v697
          %v860 = vmul.f32 %v858, %v698
          %v861 = vadd.f32 %v855, %v859
          %v862 = vadd.f32 %v856, %v860
          %v863 = vtanh.pop %v861
          %v864 = vtanh.pop %v862
          %s865 = sld [smem:[#allocation10 + $0x2]]
          %v866 = vstv %s865
          %v867 = vmul.f32 %v866, %v863
          %v868 = vmul.f32 %v866, %v864
          %v869 = vadd.f32 %v811, %v867
          %v870 = vadd.f32 %v812, %v868
          %s871 = sld [smem:[#allocation7 + $0x180]]
          %v872 = vstv %s871
          %v873 = vmul.f32 %v872, %v585
          %v874 = vmul.f32 %v872, %v586
          %s875 = sld [smem:[#allocation8 + $0x3]]
          %v876 = vstv %s875
          %v877 = vadd.f32 %v873, %v876
          %v878 = vadd.f32 %v874, %v876
          %s879 = sld [smem:[#allocation7 + $0x181]]
          %v880 = vstv %s879
          %v881 = vmul.f32 %v880, %v601
          %v882 = vmul.f32 %v880, %v602
          %v883 = vadd.f32 %v877, %v881
          %v884 = vadd.f32 %v878, %v882
          %s885 = sld [smem:[#allocation7 + $0x182]]
          %v886 = vstv %s885
          %v887 = vmul.f32 %v886, %v617
          %v888 = vmul.f32 %v886, %v618
          %v889 = vadd.f32 %v883, %v887
          %v890 = vadd.f32 %v884, %v888
          %s891 = sld [smem:[#allocation7 + $0x183]]
          %v892 = vstv %s891
          %v893 = vmul.f32 %v892, %v633
          %v894 = vmul.f32 %v892, %v634
          %v895 = vadd.f32 %v889, %v893
          %v896 = vadd.f32 %v890, %v894
          %s897 = sld [smem:[#allocation7 + $0x184]]
          %v898 = vstv %s897
          %v899 = vmul.f32 %v898, %v649
          %v900 = vmul.f32 %v898, %v650
          %v901 = vadd.f32 %v895, %v899
          %v902 = vadd.f32 %v896, %v900
          %s903 = sld [smem:[#allocation7 + $0x185]]
          %v904 = vstv %s903
          %v905 = vmul.f32 %v904, %v665
          %v906 = vmul.f32 %v904, %v666
          %v907 = vadd.f32 %v901, %v905
          %v908 = vadd.f32 %v902, %v906
          %s909 = sld [smem:[#allocation7 + $0x186]]
          %v910 = vstv %s909
          %v911 = vmul.f32 %v910, %v681
          %v912 = vmul.f32 %v910, %v682
          %v913 = vadd.f32 %v907, %v911
          %v914 = vadd.f32 %v908, %v912
          %s915 = sld [smem:[#allocation7 + $0x187]]
          %v916 = vstv %s915
          %v917 = vmul.f32 %v916, %v697
          %v918 = vmul.f32 %v916, %v698
          %v919 = vadd.f32 %v913, %v917
          %v920 = vadd.f32 %v914, %v918
          %v921 = vtanh.pop %v919
          %v922 = vtanh.pop %v920
          %s923 = sld [smem:[#allocation10 + $0x3]]
          %v924 = vstv %s923
          %v925 = vmul.f32 %v924, %v921
          %v926 = vmul.f32 %v924, %v922
          %v927 = vadd.f32 %v869, %v925
          %v928 = vadd.f32 %v870, %v926
          %s929 = sld [smem:[#allocation7 + $0x200]]
          %v930 = vstv %s929
          %v931 = vmul.f32 %v930, %v585
          %v932 = vmul.f32 %v930, %v586
          %s933 = sld [smem:[#allocation8 + $0x4]]
          %v934 = vstv %s933
          %v935 = vadd.f32 %v931, %v934
          %v936 = vadd.f32 %v932, %v934
          %s937 = sld [smem:[#allocation7 + $0x201]]
          %v938 = vstv %s937
          %v939 = vmul.f32 %v938, %v601
          %v940 = vmul.f32 %v938, %v602
          %v941 = vadd.f32 %v935, %v939
          %v942 = vadd.f32 %v936, %v940
          %s943 = sld [smem:[#allocation7 + $0x202]]
          %v944 = vstv %s943
          %v945 = vmul.f32 %v944, %v617
          %v946 = vmul.f32 %v944, %v618
          %v947 = vadd.f32 %v941, %v945
          %v948 = vadd.f32 %v942, %v946
          %s949 = sld [smem:[#allocation7 + $0x203]]
          %v950 = vstv %s949
          %v951 = vmul.f32 %v950, %v633
          %v952 = vmul.f32 %v950, %v634
          %v953 = vadd.f32 %v947, %v951
          %v954 = vadd.f32 %v948, %v952
          %s955 = sld [smem:[#allocation7 + $0x204]]
          %v956 = vstv %s955
          %v957 = vmul.f32 %v956, %v649
          %v958 = vmul.f32 %v956, %v650
          %v959 = vadd.f32 %v953, %v957
          %v960 = vadd.f32 %v954, %v958
          %s961 = sld [smem:[#allocation7 + $0x205]]
          %v962 = vstv %s961
          %v963 = vmul.f32 %v962, %v665
          %v964 = vmul.f32 %v962, %v666
          %v965 = vadd.f32 %v959, %v963
          %v966 = vadd.f32 %v960, %v964
          %s967 = sld [smem:[#allocation7 + $0x206]]
          %v968 = vstv %s967
          %v969 = vmul.f32 %v968, %v681
          %v970 = vmul.f32 %v968, %v682
          %v971 = vadd.f32 %v965, %v969
          %v972 = vadd.f32 %v966, %v970
          %s973 = sld [smem:[#allocation7 + $0x207]]
          %v974 = vstv %s973
          %v975 = vmul.f32 %v974, %v697
          %v976 = vmul.f32 %v974, %v698
          %v977 = vadd.f32 %v971, %v975
          %v978 = vadd.f32 %v972, %v976
          %v979 = vtanh.pop %v977
          %v980 = vtanh.pop %v978
          %s981 = sld [smem:[#allocation10 + $0x4]]
          %v982 = vstv %s981
          %v983 = vmul.f32 %v982, %v979
          %v984 = vmul.f32 %v982, %v980
          %v985 = vadd.f32 %v927, %v983
          %v986 = vadd.f32 %v928, %v984
          %s987 = sld [smem:[#allocation7 + $0x280]]
          %v988 = vstv %s987
          %v989 = vmul.f32 %v988, %v585
          %v990 = vmul.f32 %v988, %v586
          %s991 = sld [smem:[#allocation8 + $0x5]]
          %v992 = vstv %s991
          %v993 = vadd.f32 %v989, %v992
          %v994 = vadd.f32 %v990, %v992
          %s995 = sld [smem:[#allocation7 + $0x281]]
          %v996 = vstv %s995
          %v997 = vmul.f32 %v996, %v601
          %v998 = vmul.f32 %v996, %v602
          %v999 = vadd.f32 %v993, %v997
          %v1000 = vadd.f32 %v994, %v998
          %s1001 = sld [smem:[#allocation7 + $0x282]]
          %v1002 = vstv %s1001
          %v1003 = vmul.f32 %v1002, %v617
          %v1004 = vmul.f32 %v1002, %v618
          %v1005 = vadd.f32 %v999, %v1003
          %v1006 = vadd.f32 %v1000, %v1004
          %s1007 = sld [smem:[#allocation7 + $0x283]]
          %v1008 = vstv %s1007
          %v1009 = vmul.f32 %v1008, %v633
          %v1010 = vmul.f32 %v1008, %v634
          %v1011 = vadd.f32 %v1005, %v1009
          %v1012 = vadd.f32 %v1006, %v1010
          %s1013 = sld [smem:[#allocation7 + $0x284]]
          %v1014 = vstv %s1013
          %v1015 = vmul.f32 %v1014, %v649
          %v1016 = vmul.f32 %v1014, %v650
          %v1017 = vadd.f32 %v1011, %v1015
          %v1018 = vadd.f32 %v1012, %v1016
          %s1019 = sld [smem:[#allocation7 + $0x285]]
          %v1020 = vstv %s1019
          %v1021 = vmul.f32 %v1020, %v665
          %v1022 = vmul.f32 %v1020, %v666
          %v1023 = vadd.f32 %v1017, %v1021
          %v1024 = vadd.f32 %v1018, %v1022
          %s1025 = sld [smem:[#allocation7 + $0x286]]
          %v1026 = vstv %s1025
          %v1027 = vmul.f32 %v1026, %v681
          %v1028 = vmul.f32 %v1026, %v682
          %v1029 = vadd.f32 %v1023, %v1027
          %v1030 = vadd.f32 %v1024, %v1028
          %s1031 = sld [smem:[#allocation7 + $0x287]]
          %v1032 = vstv %s1031
          %v1033 = vmul.f32 %v1032, %v697
          %v1034 = vmul.f32 %v1032, %v698
          %v1035 = vadd.f32 %v1029, %v1033
          %v1036 = vadd.f32 %v1030, %v1034
          %v1037 = vtanh.pop %v1035
          %v1038 = vtanh.pop %v1036
          %s1039 = sld [smem:[#allocation10 + $0x5]]
          %v1040 = vstv %s1039
          %v1041 = vmul.f32 %v1040, %v1037
          %v1042 = vmul.f32 %v1040, %v1038
          %v1043 = vadd.f32 %v985, %v1041
          %v1044 = vadd.f32 %v986, %v1042
          %s1045 = sld [smem:[#allocation7 + $0x300]]
          %v1046 = vstv %s1045
          %v1047 = vmul.f32 %v1046, %v585
          %v1048 = vmul.f32 %v1046, %v586
          %s1049 = sld [smem:[#allocation8 + $0x6]]
          %v1050 = vstv %s1049
          %v1051 = vadd.f32 %v1047, %v1050
          %v1052 = vadd.f32 %v1048, %v1050
          %s1053 = sld [smem:[#allocation7 + $0x301]]
          %v1054 = vstv %s1053
          %v1055 = vmul.f32 %v1054, %v601
          %v1056 = vmul.f32 %v1054, %v602
          %v1057 = vadd.f32 %v1051, %v1055
          %v1058 = vadd.f32 %v1052, %v1056
          %s1059 = sld [smem:[#allocation7 + $0x302]]
          %v1060 = vstv %s1059
          %v1061 = vmul.f32 %v1060, %v617
          %v1062 = vmul.f32 %v1060, %v618
          %v1063 = vadd.f32 %v1057, %v1061
          %v1064 = vadd.f32 %v1058, %v1062
          %s1065 = sld [smem:[#allocation7 + $0x303]]
          %v1066 = vstv %s1065
          %v1067 = vmul.f32 %v1066, %v633
          %v1068 = vmul.f32 %v1066, %v634
          %v1069 = vadd.f32 %v1063, %v1067
          %v1070 = vadd.f32 %v1064, %v1068
          %s1071 = sld [smem:[#allocation7 + $0x304]]
          %v1072 = vstv %s1071
          %v1073 = vmul.f32 %v1072, %v649
          %v1074 = vmul.f32 %v1072, %v650
          %v1075 = vadd.f32 %v1069, %v1073
          %v1076 = vadd.f32 %v1070, %v1074
          %s1077 = sld [smem:[#allocation7 + $0x305]]
          %v1078 = vstv %s1077
          %v1079 = vmul.f32 %v1078, %v665
          %v1080 = vmul.f32 %v1078, %v666
          %v1081 = vadd.f32 %v1075, %v1079
          %v1082 = vadd.f32 %v1076, %v1080
          %s1083 = sld [smem:[#allocation7 + $0x306]]
          %v1084 = vstv %s1083
          %v1085 = vmul.f32 %v1084, %v681
          %v1086 = vmul.f32 %v1084, %v682
          %v1087 = vadd.f32 %v1081, %v1085
          %v1088 = vadd.f32 %v1082, %v1086
          %s1089 = sld [smem:[#allocation7 + $0x307]]
          %v1090 = vstv %s1089
          %v1091 = vmul.f32 %v1090, %v697
          %v1092 = vmul.f32 %v1090, %v698
          %v1093 = vadd.f32 %v1087, %v1091
          %v1094 = vadd.f32 %v1088, %v1092
          %v1095 = vtanh.pop %v1093
          %v1096 = vtanh.pop %v1094
          %s1097 = sld [smem:[#allocation10 + $0x6]]
          %v1098 = vstv %s1097
          %v1099 = vmul.f32 %v1098, %v1095
          %v1100 = vmul.f32 %v1098, %v1096
          %v1101 = vadd.f32 %v1043, %v1099
          %v1102 = vadd.f32 %v1044, %v1100
          %s1103 = sld [smem:[#allocation7 + $0x380]]
          %v1104 = vstv %s1103
          %v1105 = vmul.f32 %v1104, %v585
          %v1106 = vmul.f32 %v1104, %v586
          %s1107 = sld [smem:[#allocation8 + $0x7]]
          %v1108 = vstv %s1107
          %v1109 = vadd.f32 %v1105, %v1108
          %v1110 = vadd.f32 %v1106, %v1108
          %s1111 = sld [smem:[#allocation7 + $0x381]]
          %v1112 = vstv %s1111
          %v1113 = vmul.f32 %v1112, %v601
          %v1114 = vmul.f32 %v1112, %v602
          %v1115 = vadd.f32 %v1109, %v1113
          %v1116 = vadd.f32 %v1110, %v1114
          %s1117 = sld [smem:[#allocation7 + $0x382]]
          %v1118 = vstv %s1117
          %v1119 = vmul.f32 %v1118, %v617
          %v1120 = vmul.f32 %v1118, %v618
          %v1121 = vadd.f32 %v1115, %v1119
          %v1122 = vadd.f32 %v1116, %v1120
          %s1123 = sld [smem:[#allocation7 + $0x383]]
          %v1124 = vstv %s1123
          %v1125 = vmul.f32 %v1124, %v633
          %v1126 = vmul.f32 %v1124, %v634
          %v1127 = vadd.f32 %v1121, %v1125
          %v1128 = vadd.f32 %v1122, %v1126
          %s1129 = sld [smem:[#allocation7 + $0x384]]
          %v1130 = vstv %s1129
          %v1131 = vmul.f32 %v1130, %v649
          %v1132 = vmul.f32 %v1130, %v650
          %v1133 = vadd.f32 %v1127, %v1131
          %v1134 = vadd.f32 %v1128, %v1132
          %s1135 = sld [smem:[#allocation7 + $0x385]]
          %v1136 = vstv %s1135
          %v1137 = vmul.f32 %v1136, %v665
          %v1138 = vmul.f32 %v1136, %v666
          %v1139 = vadd.f32 %v1133, %v1137
          %v1140 = vadd.f32 %v1134, %v1138
          %s1141 = sld [smem:[#allocation7 + $0x386]]
          %v1142 = vstv %s1141
          %v1143 = vmul.f32 %v1142, %v681
          %v1144 = vmul.f32 %v1142, %v682
          %v1145 = vadd.f32 %v1139, %v1143
          %v1146 = vadd.f32 %v1140, %v1144
          %s1147 = sld [smem:[#allocation7 + $0x387]]
          %v1148 = vstv %s1147
          %v1149 = vmul.f32 %v1148, %v697
          %v1150 = vmul.f32 %v1148, %v698
          %v1151 = vadd.f32 %v1145, %v1149
          %v1152 = vadd.f32 %v1146, %v1150
          %v1153 = vtanh.pop %v1151
          %v1154 = vtanh.pop %v1152
          %s1155 = sld [smem:[#allocation10 + $0x7]]
          %v1156 = vstv %s1155
          %v1157 = vmul.f32 %v1156, %v1153
          %v1158 = vmul.f32 %v1156, %v1154
          %v1159 = vadd.f32 %v1101, %v1157
          %v1160 = vadd.f32 %v1102, %v1158
          %s1161 = sld [smem:[#allocation2]]
          %v1162 = vstv %s1161
          %v1163 = vadd.f32 %v1159, %v1162
          %v1164 = vadd.f32 %v1160, %v1162
          %s1165 = smul.addr %s561, 8
          %s1166 = scalar_lea.vmem %s539, %s1165 [#allocation12]
          %1167 = vst [vmem:[%s1166] sm:$0xff] %v1163
          %1168 = vst [vmem:[%s1166 + $0x8] sm:$0xff] %v1164
          %v1169 = vld [vmem:[%s563 + $0x10] sm:$0xff]
          %v1170 = vld [vmem:[%s563 + $0x18] sm:$0xff]
          %v1171 = vld [vmem:[%s568 + $0x10] sm:$0xff]
          %v1172 = vld [vmem:[%s568 + $0x18] sm:$0xff]
          %s1173 = sld [smem:[#allocation3]]
          %v1174 = vstv %s1173
          %v1175 = vmul.f32 %v1174, %v1169
          %v1176 = vmul.f32 %v1174, %v1170
          %s1177 = sld [smem:[#allocation3 + $0x1]]
          %v1178 = vstv %s1177
          %v1179 = vmul.f32 %v1178, %v1171
          %v1180 = vmul.f32 %v1178, %v1172
          %v1181 = vadd.f32 %v1175, %v1179
          %v1182 = vadd.f32 %v1176, %v1180
          %s1183 = sld [smem:[#allocation5]]
          %v1184 = vstv %s1183
          %v1185 = vadd.f32 %v1181, %v1184
          %v1186 = vadd.f32 %v1182, %v1184
          %v1187 = vtanh.pop %v1185
          %v1188 = vtanh.pop %v1186
          %s1189 = sld [smem:[#allocation3 + $0x80]]
          %v1190 = vstv %s1189
          %v1191 = vmul.f32 %v1190, %v1169
          %v1192 = vmul.f32 %v1190, %v1170
          %s1193 = sld [smem:[#allocation3 + $0x81]]
          %v1194 = vstv %s1193
          %v1195 = vmul.f32 %v1194, %v1171
          %v1196 = vmul.f32 %v1194, %v1172
          %v1197 = vadd.f32 %v1191, %v1195
          %v1198 = vadd.f32 %v1192, %v1196
          %s1199 = sld [smem:[#allocation5 + $0x1]]
          %v1200 = vstv %s1199
          %v1201 = vadd.f32 %v1197, %v1200
          %v1202 = vadd.f32 %v1198, %v1200
          %v1203 = vtanh.pop %v1201
          %v1204 = vtanh.pop %v1202
          %s1205 = sld [smem:[#allocation3 + $0x100]]
          %v1206 = vstv %s1205
          %v1207 = vmul.f32 %v1206, %v1169
          %v1208 = vmul.f32 %v1206, %v1170
          %s1209 = sld [smem:[#allocation3 + $0x101]]
          %v1210 = vstv %s1209
          %v1211 = vmul.f32 %v1210, %v1171
          %v1212 = vmul.f32 %v1210, %v1172
          %v1213 = vadd.f32 %v1207, %v1211
          %v1214 = vadd.f32 %v1208, %v1212
          %s1215 = sld [smem:[#allocation5 + $0x2]]
          %v1216 = vstv %s1215
          %v1217 = vadd.f32 %v1213, %v1216
          %v1218 = vadd.f32 %v1214, %v1216
          %v1219 = vtanh.pop %v1217
          %v1220 = vtanh.pop %v1218
          %s1221 = sld [smem:[#allocation3 + $0x180]]
          %v1222 = vstv %s1221
          %v1223 = vmul.f32 %v1222, %v1169
          %v1224 = vmul.f32 %v1222, %v1170
          %s1225 = sld [smem:[#allocation3 + $0x181]]
          %v1226 = vstv %s1225
          %v1227 = vmul.f32 %v1226, %v1171
          %v1228 = vmul.f32 %v1226, %v1172
          %v1229 = vadd.f32 %v1223, %v1227
          %v1230 = vadd.f32 %v1224, %v1228
          %s1231 = sld [smem:[#allocation5 + $0x3]]
          %v1232 = vstv %s1231
          %v1233 = vadd.f32 %v1229, %v1232
          %v1234 = vadd.f32 %v1230, %v1232
          %v1235 = vtanh.pop %v1233
          %v1236 = vtanh.pop %v1234
          %s1237 = sld [smem:[#allocation3 + $0x200]]
          %v1238 = vstv %s1237
          %v1239 = vmul.f32 %v1238, %v1169
          %v1240 = vmul.f32 %v1238, %v1170
          %s1241 = sld [smem:[#allocation3 + $0x201]]
          %v1242 = vstv %s1241
          %v1243 = vmul.f32 %v1242, %v1171
          %v1244 = vmul.f32 %v1242, %v1172
          %v1245 = vadd.f32 %v1239, %v1243
          %v1246 = vadd.f32 %v1240, %v1244
          %s1247 = sld [smem:[#allocation5 + $0x4]]
          %v1248 = vstv %s1247
          %v1249 = vadd.f32 %v1245, %v1248
          %v1250 = vadd.f32 %v1246, %v1248
          %v1251 = vtanh.pop %v1249
          %v1252 = vtanh.pop %v1250
          %s1253 = sld [smem:[#allocation3 + $0x280]]
          %v1254 = vstv %s1253
          %v1255 = vmul.f32 %v1254, %v1169
          %v1256 = vmul.f32 %v1254, %v1170
          %s1257 = sld [smem:[#allocation3 + $0x281]]
          %v1258 = vstv %s1257
          %v1259 = vmul.f32 %v1258, %v1171
          %v1260 = vmul.f32 %v1258, %v1172
          %v1261 = vadd.f32 %v1255, %v1259
          %v1262 = vadd.f32 %v1256, %v1260
          %s1263 = sld [smem:[#allocation5 + $0x5]]
          %v1264 = vstv %s1263
          %v1265 = vadd.f32 %v1261, %v1264
          %v1266 = vadd.f32 %v1262, %v1264
          %v1267 = vtanh.pop %v1265
          %v1268 = vtanh.pop %v1266
          %s1269 = sld [smem:[#allocation3 + $0x300]]
          %v1270 = vstv %s1269
          %v1271 = vmul.f32 %v1270, %v1169
          %v1272 = vmul.f32 %v1270, %v1170
          %s1273 = sld [smem:[#allocation3 + $0x301]]
          %v1274 = vstv %s1273
          %v1275 = vmul.f32 %v1274, %v1171
          %v1276 = vmul.f32 %v1274, %v1172
          %v1277 = vadd.f32 %v1271, %v1275
          %v1278 = vadd.f32 %v1272, %v1276
          %s1279 = sld [smem:[#allocation5 + $0x6]]
          %v1280 = vstv %s1279
          %v1281 = vadd.f32 %v1277, %v1280
          %v1282 = vadd.f32 %v1278, %v1280
          %v1283 = vtanh.pop %v1281
          %v1284 = vtanh.pop %v1282
          %s1285 = sld [smem:[#allocation3 + $0x380]]
          %v1286 = vstv %s1285
          %v1287 = vmul.f32 %v1286, %v1169
          %v1288 = vmul.f32 %v1286, %v1170
          %s1289 = sld [smem:[#allocation3 + $0x381]]
          %v1290 = vstv %s1289
          %v1291 = vmul.f32 %v1290, %v1171
          %v1292 = vmul.f32 %v1290, %v1172
          %v1293 = vadd.f32 %v1287, %v1291
          %v1294 = vadd.f32 %v1288, %v1292
          %s1295 = sld [smem:[#allocation5 + $0x7]]
          %v1296 = vstv %s1295
          %v1297 = vadd.f32 %v1293, %v1296
          %v1298 = vadd.f32 %v1294, %v1296
          %v1299 = vtanh.pop %v1297
          %v1300 = vtanh.pop %v1298
          %s1301 = sld [smem:[#allocation7]]
          %v1302 = vstv %s1301
          %v1303 = vmul.f32 %v1302, %v1187
          %v1304 = vmul.f32 %v1302, %v1188
          %s1305 = sld [smem:[#allocation8]]
          %v1306 = vstv %s1305
          %v1307 = vadd.f32 %v1303, %v1306
          %v1308 = vadd.f32 %v1304, %v1306
          %s1309 = sld [smem:[#allocation7 + $0x1]]
          %v1310 = vstv %s1309
          %v1311 = vmul.f32 %v1310, %v1203
          %v1312 = vmul.f32 %v1310, %v1204
          %v1313 = vadd.f32 %v1307, %v1311
          %v1314 = vadd.f32 %v1308, %v1312
          %s1315 = sld [smem:[#allocation7 + $0x2]]
          %v1316 = vstv %s1315
          %v1317 = vmul.f32 %v1316, %v1219
          %v1318 = vmul.f32 %v1316, %v1220
          %v1319 = vadd.f32 %v1313, %v1317
          %v1320 = vadd.f32 %v1314, %v1318
          %s1321 = sld [smem:[#allocation7 + $0x3]]
          %v1322 = vstv %s1321
          %v1323 = vmul.f32 %v1322, %v1235
          %v1324 = vmul.f32 %v1322, %v1236
          %v1325 = vadd.f32 %v1319, %v1323
          %v1326 = vadd.f32 %v1320, %v1324
          %s1327 = sld [smem:[#allocation7 + $0x4]]
          %v1328 = vstv %s1327
          %v1329 = vmul.f32 %v1328, %v1251
          %v1330 = vmul.f32 %v1328, %v1252
          %v1331 = vadd.f32 %v1325, %v1329
          %v1332 = vadd.f32 %v1326, %v1330
          %s1333 = sld [smem:[#allocation7 + $0x5]]
          %v1334 = vstv %s1333
          %v1335 = vmul.f32 %v1334, %v1267
          %v1336 = vmul.f32 %v1334, %v1268
          %v1337 = vadd.f32 %v1331, %v1335
          %v1338 = vadd.f32 %v1332, %v1336
          %s1339 = sld [smem:[#allocation7 + $0x6]]
          %v1340 = vstv %s1339
          %v1341 = vmul.f32 %v1340, %v1283
          %v1342 = vmul.f32 %v1340, %v1284
          %v1343 = vadd.f32 %v1337, %v1341
          %v1344 = vadd.f32 %v1338, %v1342
          %s1345 = sld [smem:[#allocation7 + $0x7]]
          %v1346 = vstv %s1345
          %v1347 = vmul.f32 %v1346, %v1299
          %v1348 = vmul.f32 %v1346, %v1300
          %v1349 = vadd.f32 %v1343, %v1347
          %v1350 = vadd.f32 %v1344, %v1348
          %v1351 = vtanh.pop %v1349
          %v1352 = vtanh.pop %v1350
          %s1353 = sld [smem:[#allocation10]]
          %v1354 = vstv %s1353
          %v1355 = vmul.f32 %v1354, %v1351
          %v1356 = vmul.f32 %v1354, %v1352
          %s1357 = sld [smem:[#allocation7 + $0x80]]
          %v1358 = vstv %s1357
          %v1359 = vmul.f32 %v1358, %v1187
          %v1360 = vmul.f32 %v1358, %v1188
          %s1361 = sld [smem:[#allocation8 + $0x1]]
          %v1362 = vstv %s1361
          %v1363 = vadd.f32 %v1359, %v1362
          %v1364 = vadd.f32 %v1360, %v1362
          %s1365 = sld [smem:[#allocation7 + $0x81]]
          %v1366 = vstv %s1365
          %v1367 = vmul.f32 %v1366, %v1203
          %v1368 = vmul.f32 %v1366, %v1204
          %v1369 = vadd.f32 %v1363, %v1367
          %v1370 = vadd.f32 %v1364, %v1368
          %s1371 = sld [smem:[#allocation7 + $0x82]]
          %v1372 = vstv %s1371
          %v1373 = vmul.f32 %v1372, %v1219
          %v1374 = vmul.f32 %v1372, %v1220
          %v1375 = vadd.f32 %v1369, %v1373
          %v1376 = vadd.f32 %v1370, %v1374
          %s1377 = sld [smem:[#allocation7 + $0x83]]
          %v1378 = vstv %s1377
          %v1379 = vmul.f32 %v1378, %v1235
          %v1380 = vmul.f32 %v1378, %v1236
          %v1381 = vadd.f32 %v1375, %v1379
          %v1382 = vadd.f32 %v1376, %v1380
          %s1383 = sld [smem:[#allocation7 + $0x84]]
          %v1384 = vstv %s1383
          %v1385 = vmul.f32 %v1384, %v1251
          %v1386 = vmul.f32 %v1384, %v1252
          %v1387 = vadd.f32 %v1381, %v1385
          %v1388 = vadd.f32 %v1382, %v1386
          %s1389 = sld [smem:[#allocation7 + $0x85]]
          %v1390 = vstv %s1389
          %v1391 = vmul.f32 %v1390, %v1267
          %v1392 = vmul.f32 %v1390, %v1268
          %v1393 = vadd.f32 %v1387, %v1391
          %v1394 = vadd.f32 %v1388, %v1392
          %s1395 = sld [smem:[#allocation7 + $0x86]]
          %v1396 = vstv %s1395
          %v1397 = vmul.f32 %v1396, %v1283
          %v1398 = vmul.f32 %v1396, %v1284
          %v1399 = vadd.f32 %v1393, %v1397
          %v1400 = vadd.f32 %v1394, %v1398
          %s1401 = sld [smem:[#allocation7 + $0x87]]
          %v1402 = vstv %s1401
          %v1403 = vmul.f32 %v1402, %v1299
          %v1404 = vmul.f32 %v1402, %v1300
          %v1405 = vadd.f32 %v1399, %v1403
          %v1406 = vadd.f32 %v1400, %v1404
          %v1407 = vtanh.pop %v1405
          %v1408 = vtanh.pop %v1406
          %s1409 = sld [smem:[#allocation10 + $0x1]]
          %v1410 = vstv %s1409
          %v1411 = vmul.f32 %v1410, %v1407
          %v1412 = vmul.f32 %v1410, %v1408
          %v1413 = vadd.f32 %v1355, %v1411
          %v1414 = vadd.f32 %v1356, %v1412
          %s1415 = sld [smem:[#allocation7 + $0x100]]
          %v1416 = vstv %s1415
          %v1417 = vmul.f32 %v1416, %v1187
          %v1418 = vmul.f32 %v1416, %v1188
          %s1419 = sld [smem:[#allocation8 + $0x2]]
          %v1420 = vstv %s1419
          %v1421 = vadd.f32 %v1417, %v1420
          %v1422 = vadd.f32 %v1418, %v1420
          %s1423 = sld [smem:[#allocation7 + $0x101]]
          %v1424 = vstv %s1423
          %v1425 = vmul.f32 %v1424, %v1203
          %v1426 = vmul.f32 %v1424, %v1204
          %v1427 = vadd.f32 %v1421, %v1425
          %v1428 = vadd.f32 %v1422, %v1426
          %s1429 = sld [smem:[#allocation7 + $0x102]]
          %v1430 = vstv %s1429
          %v1431 = vmul.f32 %v1430, %v1219
          %v1432 = vmul.f32 %v1430, %v1220
          %v1433 = vadd.f32 %v1427, %v1431
          %v1434 = vadd.f32 %v1428, %v1432
          %s1435 = sld [smem:[#allocation7 + $0x103]]
          %v1436 = vstv %s1435
          %v1437 = vmul.f32 %v1436, %v1235
          %v1438 = vmul.f32 %v1436, %v1236
          %v1439 = vadd.f32 %v1433, %v1437
          %v1440 = vadd.f32 %v1434, %v1438
          %s1441 = sld [smem:[#allocation7 + $0x104]]
          %v1442 = vstv %s1441
          %v1443 = vmul.f32 %v1442, %v1251
          %v1444 = vmul.f32 %v1442, %v1252
          %v1445 = vadd.f32 %v1439, %v1443
          %v1446 = vadd.f32 %v1440, %v1444
          %s1447 = sld [smem:[#allocation7 + $0x105]]
          %v1448 = vstv %s1447
          %v1449 = vmul.f32 %v1448, %v1267
          %v1450 = vmul.f32 %v1448, %v1268
          %v1451 = vadd.f32 %v1445, %v1449
          %v1452 = vadd.f32 %v1446, %v1450
          %s1453 = sld [smem:[#allocation7 + $0x106]]
          %v1454 = vstv %s1453
          %v1455 = vmul.f32 %v1454, %v1283
          %v1456 = vmul.f32 %v1454, %v1284
          %v1457 = vadd.f32 %v1451, %v1455
          %v1458 = vadd.f32 %v1452, %v1456
          %s1459 = sld [smem:[#allocation7 + $0x107]]
          %v1460 = vstv %s1459
          %v1461 = vmul.f32 %v1460, %v1299
          %v1462 = vmul.f32 %v1460, %v1300
          %v1463 = vadd.f32 %v1457, %v1461
          %v1464 = vadd.f32 %v1458, %v1462
          %v1465 = vtanh.pop %v1463
          %v1466 = vtanh.pop %v1464
          %s1467 = sld [smem:[#allocation10 + $0x2]]
          %v1468 = vstv %s1467
          %v1469 = vmul.f32 %v1468, %v1465
          %v1470 = vmul.f32 %v1468, %v1466
          %v1471 = vadd.f32 %v1413, %v1469
          %v1472 = vadd.f32 %v1414, %v1470
          %s1473 = sld [smem:[#allocation7 + $0x180]]
          %v1474 = vstv %s1473
          %v1475 = vmul.f32 %v1474, %v1187
          %v1476 = vmul.f32 %v1474, %v1188
          %s1477 = sld [smem:[#allocation8 + $0x3]]
          %v1478 = vstv %s1477
          %v1479 = vadd.f32 %v1475, %v1478
          %v1480 = vadd.f32 %v1476, %v1478
          %s1481 = sld [smem:[#allocation7 + $0x181]]
          %v1482 = vstv %s1481
          %v1483 = vmul.f32 %v1482, %v1203
          %v1484 = vmul.f32 %v1482, %v1204
          %v1485 = vadd.f32 %v1479, %v1483
          %v1486 = vadd.f32 %v1480, %v1484
          %s1487 = sld [smem:[#allocation7 + $0x182]]
          %v1488 = vstv %s1487
          %v1489 = vmul.f32 %v1488, %v1219
          %v1490 = vmul.f32 %v1488, %v1220
          %v1491 = vadd.f32 %v1485, %v1489
          %v1492 = vadd.f32 %v1486, %v1490
          %s1493 = sld [smem:[#allocation7 + $0x183]]
          %v1494 = vstv %s1493
          %v1495 = vmul.f32 %v1494, %v1235
          %v1496 = vmul.f32 %v1494, %v1236
          %v1497 = vadd.f32 %v1491, %v1495
          %v1498 = vadd.f32 %v1492, %v1496
          %s1499 = sld [smem:[#allocation7 + $0x184]]
          %v1500 = vstv %s1499
          %v1501 = vmul.f32 %v1500, %v1251
          %v1502 = vmul.f32 %v1500, %v1252
          %v1503 = vadd.f32 %v1497, %v1501
          %v1504 = vadd.f32 %v1498, %v1502
          %s1505 = sld [smem:[#allocation7 + $0x185]]
          %v1506 = vstv %s1505
          %v1507 = vmul.f32 %v1506, %v1267
          %v1508 = vmul.f32 %v1506, %v1268
          %v1509 = vadd.f32 %v1503, %v1507
          %v1510 = vadd.f32 %v1504, %v1508
          %s1511 = sld [smem:[#allocation7 + $0x186]]
          %v1512 = vstv %s1511
          %v1513 = vmul.f32 %v1512, %v1283
          %v1514 = vmul.f32 %v1512, %v1284
          %v1515 = vadd.f32 %v1509, %v1513
          %v1516 = vadd.f32 %v1510, %v1514
          %s1517 = sld [smem:[#allocation7 + $0x187]]
          %v1518 = vstv %s1517
          %v1519 = vmul.f32 %v1518, %v1299
          %v1520 = vmul.f32 %v1518, %v1300
          %v1521 = vadd.f32 %v1515, %v1519
          %v1522 = vadd.f32 %v1516, %v1520
          %v1523 = vtanh.pop %v1521
          %v1524 = vtanh.pop %v1522
          %s1525 = sld [smem:[#allocation10 + $0x3]]
          %v1526 = vstv %s1525
          %v1527 = vmul.f32 %v1526, %v1523
          %v1528 = vmul.f32 %v1526, %v1524
          %v1529 = vadd.f32 %v1471, %v1527
          %v1530 = vadd.f32 %v1472, %v1528
          %s1531 = sld [smem:[#allocation7 + $0x200]]
          %v1532 = vstv %s1531
          %v1533 = vmul.f32 %v1532, %v1187
          %v1534 = vmul.f32 %v1532, %v1188
          %s1535 = sld [smem:[#allocation8 + $0x4]]
          %v1536 = vstv %s1535
          %v1537 = vadd.f32 %v1533, %v1536
          %v1538 = vadd.f32 %v1534, %v1536
          %s1539 = sld [smem:[#allocation7 + $0x201]]
          %v1540 = vstv %s1539
          %v1541 = vmul.f32 %v1540, %v1203
          %v1542 = vmul.f32 %v1540, %v1204
          %v1543 = vadd.f32 %v1537, %v1541
          %v1544 = vadd.f32 %v1538, %v1542
          %s1545 = sld [smem:[#allocation7 + $0x202]]
          %v1546 = vstv %s1545
          %v1547 = vmul.f32 %v1546, %v1219
          %v1548 = vmul.f32 %v1546, %v1220
          %v1549 = vadd.f32 %v1543, %v1547
          %v1550 = vadd.f32 %v1544, %v1548
          %s1551 = sld [smem:[#allocation7 + $0x203]]
          %v1552 = vstv %s1551
          %v1553 = vmul.f32 %v1552, %v1235
          %v1554 = vmul.f32 %v1552, %v1236
          %v1555 = vadd.f32 %v1549, %v1553
          %v1556 = vadd.f32 %v1550, %v1554
          %s1557 = sld [smem:[#allocation7 + $0x204]]
          %v1558 = vstv %s1557
          %v1559 = vmul.f32 %v1558, %v1251
          %v1560 = vmul.f32 %v1558, %v1252
          %v1561 = vadd.f32 %v1555, %v1559
          %v1562 = vadd.f32 %v1556, %v1560
          %s1563 = sld [smem:[#allocation7 + $0x205]]
          %v1564 = vstv %s1563
          %v1565 = vmul.f32 %v1564, %v1267
          %v1566 = vmul.f32 %v1564, %v1268
          %v1567 = vadd.f32 %v1561, %v1565
          %v1568 = vadd.f32 %v1562, %v1566
          %s1569 = sld [smem:[#allocation7 + $0x206]]
          %v1570 = vstv %s1569
          %v1571 = vmul.f32 %v1570, %v1283
          %v1572 = vmul.f32 %v1570, %v1284
          %v1573 = vadd.f32 %v1567, %v1571
          %v1574 = vadd.f32 %v1568, %v1572
          %s1575 = sld [smem:[#allocation7 + $0x207]]
          %v1576 = vstv %s1575
          %v1577 = vmul.f32 %v1576, %v1299
          %v1578 = vmul.f32 %v1576, %v1300
          %v1579 = vadd.f32 %v1573, %v1577
          %v1580 = vadd.f32 %v1574, %v1578
          %v1581 = vtanh.pop %v1579
          %v1582 = vtanh.pop %v1580
          %s1583 = sld [smem:[#allocation10 + $0x4]]
          %v1584 = vstv %s1583
          %v1585 = vmul.f32 %v1584, %v1581
          %v1586 = vmul.f32 %v1584, %v1582
          %v1587 = vadd.f32 %v1529, %v1585
          %v1588 = vadd.f32 %v1530, %v1586
          %s1589 = sld [smem:[#allocation7 + $0x280]]
          %v1590 = vstv %s1589
          %v1591 = vmul.f32 %v1590, %v1187
          %v1592 = vmul.f32 %v1590, %v1188
          %s1593 = sld [smem:[#allocation8 + $0x5]]
          %v1594 = vstv %s1593
          %v1595 = vadd.f32 %v1591, %v1594
          %v1596 = vadd.f32 %v1592, %v1594
          %s1597 = sld [smem:[#allocation7 + $0x281]]
          %v1598 = vstv %s1597
          %v1599 = vmul.f32 %v1598, %v1203
          %v1600 = vmul.f32 %v1598, %v1204
          %v1601 = vadd.f32 %v1595, %v1599
          %v1602 = vadd.f32 %v1596, %v1600
          %s1603 = sld [smem:[#allocation7 + $0x282]]
          %v1604 = vstv %s1603
          %v1605 = vmul.f32 %v1604, %v1219
          %v1606 = vmul.f32 %v1604, %v1220
          %v1607 = vadd.f32 %v1601, %v1605
          %v1608 = vadd.f32 %v1602, %v1606
          %s1609 = sld [smem:[#allocation7 + $0x283]]
          %v1610 = vstv %s1609
          %v1611 = vmul.f32 %v1610, %v1235
          %v1612 = vmul.f32 %v1610, %v1236
          %v1613 = vadd.f32 %v1607, %v1611
          %v1614 = vadd.f32 %v1608, %v1612
          %s1615 = sld [smem:[#allocation7 + $0x284]]
          %v1616 = vstv %s1615
          %v1617 = vmul.f32 %v1616, %v1251
          %v1618 = vmul.f32 %v1616, %v1252
          %v1619 = vadd.f32 %v1613, %v1617
          %v1620 = vadd.f32 %v1614, %v1618
          %s1621 = sld [smem:[#allocation7 + $0x285]]
          %v1622 = vstv %s1621
          %v1623 = vmul.f32 %v1622, %v1267
          %v1624 = vmul.f32 %v1622, %v1268
          %v1625 = vadd.f32 %v1619, %v1623
          %v1626 = vadd.f32 %v1620, %v1624
          %s1627 = sld [smem:[#allocation7 + $0x286]]
          %v1628 = vstv %s1627
          %v1629 = vmul.f32 %v1628, %v1283
          %v1630 = vmul.f32 %v1628, %v1284
          %v1631 = vadd.f32 %v1625, %v1629
          %v1632 = vadd.f32 %v1626, %v1630
          %s1633 = sld [smem:[#allocation7 + $0x287]]
          %v1634 = vstv %s1633
          %v1635 = vmul.f32 %v1634, %v1299
          %v1636 = vmul.f32 %v1634, %v1300
          %v1637 = vadd.f32 %v1631, %v1635
          %v1638 = vadd.f32 %v1632, %v1636
          %v1639 = vtanh.pop %v1637
          %v1640 = vtanh.pop %v1638
          %s1641 = sld [smem:[#allocation10 + $0x5]]
          %v1642 = vstv %s1641
          %v1643 = vmul.f32 %v1642, %v1639
          %v1644 = vmul.f32 %v1642, %v1640
          %v1645 = vadd.f32 %v1587, %v1643
          %v1646 = vadd.f32 %v1588, %v1644
          %s1647 = sld [smem:[#allocation7 + $0x300]]
          %v1648 = vstv %s1647
          %v1649 = vmul.f32 %v1648, %v1187
          %v1650 = vmul.f32 %v1648, %v1188
          %s1651 = sld [smem:[#allocation8 + $0x6]]
          %v1652 = vstv %s1651
          %v1653 = vadd.f32 %v1649, %v1652
          %v1654 = vadd.f32 %v1650, %v1652
          %s1655 = sld [smem:[#allocation7 + $0x301]]
          %v1656 = vstv %s1655
          %v1657 = vmul.f32 %v1656, %v1203
          %v1658 = vmul.f32 %v1656, %v1204
          %v1659 = vadd.f32 %v1653, %v1657
          %v1660 = vadd.f32 %v1654, %v1658
          %s1661 = sld [smem:[#allocation7 + $0x302]]
          %v1662 = vstv %s1661
          %v1663 = vmul.f32 %v1662, %v1219
          %v1664 = vmul.f32 %v1662, %v1220
          %v1665 = vadd.f32 %v1659, %v1663
          %v1666 = vadd.f32 %v1660, %v1664
          %s1667 = sld [smem:[#allocation7 + $0x303]]
          %v1668 = vstv %s1667
          %v1669 = vmul.f32 %v1668, %v1235
          %v1670 = vmul.f32 %v1668, %v1236
          %v1671 = vadd.f32 %v1665, %v1669
          %v1672 = vadd.f32 %v1666, %v1670
          %s1673 = sld [smem:[#allocation7 + $0x304]]
          %v1674 = vstv %s1673
          %v1675 = vmul.f32 %v1674, %v1251
          %v1676 = vmul.f32 %v1674, %v1252
          %v1677 = vadd.f32 %v1671, %v1675
          %v1678 = vadd.f32 %v1672, %v1676
          %s1679 = sld [smem:[#allocation7 + $0x305]]
          %v1680 = vstv %s1679
          %v1681 = vmul.f32 %v1680, %v1267
          %v1682 = vmul.f32 %v1680, %v1268
          %v1683 = vadd.f32 %v1677, %v1681
          %v1684 = vadd.f32 %v1678, %v1682
          %s1685 = sld [smem:[#allocation7 + $0x306]]
          %v1686 = vstv %s1685
          %v1687 = vmul.f32 %v1686, %v1283
          %v1688 = vmul.f32 %v1686, %v1284
          %v1689 = vadd.f32 %v1683, %v1687
          %v1690 = vadd.f32 %v1684, %v1688
          %s1691 = sld [smem:[#allocation7 + $0x307]]
          %v1692 = vstv %s1691
          %v1693 = vmul.f32 %v1692, %v1299
          %v1694 = vmul.f32 %v1692, %v1300
          %v1695 = vadd.f32 %v1689, %v1693
          %v1696 = vadd.f32 %v1690, %v1694
          %v1697 = vtanh.pop %v1695
          %v1698 = vtanh.pop %v1696
          %s1699 = sld [smem:[#allocation10 + $0x6]]
          %v1700 = vstv %s1699
          %v1701 = vmul.f32 %v1700, %v1697
          %v1702 = vmul.f32 %v1700, %v1698
          %v1703 = vadd.f32 %v1645, %v1701
          %v1704 = vadd.f32 %v1646, %v1702
          %s1705 = sld [smem:[#allocation7 + $0x380]]
          %v1706 = vstv %s1705
          %v1707 = vmul.f32 %v1706, %v1187
          %v1708 = vmul.f32 %v1706, %v1188
          %s1709 = sld [smem:[#allocation8 + $0x7]]
          %v1710 = vstv %s1709
          %v1711 = vadd.f32 %v1707, %v1710
          %v1712 = vadd.f32 %v1708, %v1710
          %s1713 = sld [smem:[#allocation7 + $0x381]]
          %v1714 = vstv %s1713
          %v1715 = vmul.f32 %v1714, %v1203
          %v1716 = vmul.f32 %v1714, %v1204
          %v1717 = vadd.f32 %v1711, %v1715
          %v1718 = vadd.f32 %v1712, %v1716
          %s1719 = sld [smem:[#allocation7 + $0x382]]
          %v1720 = vstv %s1719
          %v1721 = vmul.f32 %v1720, %v1219
          %v1722 = vmul.f32 %v1720, %v1220
          %v1723 = vadd.f32 %v1717, %v1721
          %v1724 = vadd.f32 %v1718, %v1722
          %s1725 = sld [smem:[#allocation7 + $0x383]]
          %v1726 = vstv %s1725
          %v1727 = vmul.f32 %v1726, %v1235
          %v1728 = vmul.f32 %v1726, %v1236
          %v1729 = vadd.f32 %v1723, %v1727
          %v1730 = vadd.f32 %v1724, %v1728
          %s1731 = sld [smem:[#allocation7 + $0x384]]
          %v1732 = vstv %s1731
          %v1733 = vmul.f32 %v1732, %v1251
          %v1734 = vmul.f32 %v1732, %v1252
          %v1735 = vadd.f32 %v1729, %v1733
          %v1736 = vadd.f32 %v1730, %v1734
          %s1737 = sld [smem:[#allocation7 + $0x385]]
          %v1738 = vstv %s1737
          %v1739 = vmul.f32 %v1738, %v1267
          %v1740 = vmul.f32 %v1738, %v1268
          %v1741 = vadd.f32 %v1735, %v1739
          %v1742 = vadd.f32 %v1736, %v1740
          %s1743 = sld [smem:[#allocation7 + $0x386]]
          %v1744 = vstv %s1743
          %v1745 = vmul.f32 %v1744, %v1283
          %v1746 = vmul.f32 %v1744, %v1284
          %v1747 = vadd.f32 %v1741, %v1745
          %v1748 = vadd.f32 %v1742, %v1746
          %s1749 = sld [smem:[#allocation7 + $0x387]]
          %v1750 = vstv %s1749
          %v1751 = vmul.f32 %v1750, %v1299
          %v1752 = vmul.f32 %v1750, %v1300
          %v1753 = vadd.f32 %v1747, %v1751
          %v1754 = vadd.f32 %v1748, %v1752
          %v1755 = vtanh.pop %v1753
          %v1756 = vtanh.pop %v1754
          %s1757 = sld [smem:[#allocation10 + $0x7]]
          %v1758 = vstv %s1757
          %v1759 = vmul.f32 %v1758, %v1755
          %v1760 = vmul.f32 %v1758, %v1756
          %v1761 = vadd.f32 %v1703, %v1759
          %v1762 = vadd.f32 %v1704, %v1760
          %s1763 = sld [smem:[#allocation2]]
          %v1764 = vstv %s1763
          %v1765 = vadd.f32 %v1761, %v1764
          %v1766 = vadd.f32 %v1762, %v1764
          %1767 = vst [vmem:[%s1166 + $0x10] sm:$0xff] %v1765
          %1768 = vst [vmem:[%s1166 + $0x18] sm:$0xff] %v1766
        $region103: #{mlp_forward.1} parent=73 // loop_footer
          %s557 = sadd.s32 1, %s553
        $region104: #{mlp_forward.1} parent=73 // loop_footer_branch
          %552 = sbr.rel target = $region100
        $region105: #{mlp_forward.1} parent=73 // loop_exit
          _
        %s1769 = sand.u32 %s182, 1
        %s1770 = sand.u32 %s182, 1
        %s1771 = smul.addr %s1770, 256
        %s1772 = scalar_lea.vmem [#allocation12], %s1771
        // Predicated region
        $region106: #{mlp_forward.1} parent=73 // pred_check
          %p1773 = pneg %p192
        $region107: #{mlp_forward.1} parent=73 // pred_check_branch
          %1775 = sbr.rel (%p1773) target = $region109
        $region108: #{mlp_forward.1} parent=73 // pred_region
          %s1776 = smul.u32 8, %s22
          %s1777 = ssub.s32 18, %s1776
          %p1778 = scmp.lt.s32.totalorder %s1777, 8
          %s1779 = scalar_select %p1778, %s1777, 8
          %s1780 = smul.u32 128, %s1779
          %s1781 = smul.u32 %s1780, 4
          %p1782 = scmp.ne.s32.totalorder 0, %s1781
          %s1783 = smul.addr %s1776, 4
          %s1784 = smul.addr %s1783, 8
          %s1785 = scalar_lea.vmem %s7, %s1784
          // Predicated region
          $region110: #{mlp_forward.1} parent=108 // pred_check
            %p1786 = pneg %p1782
          $region111: #{mlp_forward.1} parent=108 // pred_check_branch
            %1788 = sbr.rel (%p1786) target = $region113
          $region112: #{mlp_forward.1} parent=108 // pred_region
            // Predicated region
            $region114: #{mlp_forward.1} parent=112 // pred_check
              _
            $region115: #{mlp_forward.1} parent=112 // pred_check_branch
              %1790 = sbr.rel (0) target = $region117
            $region116: #{mlp_forward.1} parent=112 // pred_region
              %s1791 = sshrl.u32 %s1779, 3
              // While loop
              $region118: #{mlp_forward.1} parent=116 // loop_pre_header
                _
              $region119: #{mlp_forward.1} parent=116 // loop_header
                %s1793 = sphi 0, %s1795
                %p1794 = scmp.ge.s32.totalorder %s1793, %s1791
                %s1798 = sphi 0, %s1867
                %s1799 = sphi %s1772, %s1870
                %s1800 = sphi %s1785, %s1871
              $region120: #{mlp_forward.1} parent=116 // loop_header_branch
                %1797 = sbr.rel (%p1794) target = $region124
              $region121: #{mlp_forward.1} parent=116 // loop_body
                %v1801 = vld [vmem:[%s1799] sm:$0xff]
                %1802 = vst [vmem:[%s1800] sm:$0xff] %v1801
                %v1803 = vld [vmem:[%s1799 + $0x20] sm:$0xff]
                %1804 = vst [vmem:[%s1800 + $0x20] sm:$0xff] %v1803
                %v1805 = vld [vmem:[%s1799 + $0x40] sm:$0xff]
                %1806 = vst [vmem:[%s1800 + $0x40] sm:$0xff] %v1805
                %v1807 = vld [vmem:[%s1799 + $0x60] sm:$0xff]
                %1808 = vst [vmem:[%s1800 + $0x60] sm:$0xff] %v1807
                %v1809 = vld [vmem:[%s1799 + $0x80] sm:$0xff]
                %1810 = vst [vmem:[%s1800 + $0x80] sm:$0xff] %v1809
                %v1811 = vld [vmem:[%s1799 + $0xa0] sm:$0xff]
                %1812 = vst [vmem:[%s1800 + $0xa0] sm:$0xff] %v1811
                %v1813 = vld [vmem:[%s1799 + $0xc0] sm:$0xff]
                %1814 = vst [vmem:[%s1800 + $0xc0] sm:$0xff] %v1813
                %v1815 = vld [vmem:[%s1799 + $0xe0] sm:$0xff]
                %1816 = vst [vmem:[%s1800 + $0xe0] sm:$0xff] %v1815
                %v1817 = vld [vmem:[%s1799 + $0x8] sm:$0xff]
                %1818 = vst [vmem:[%s1800 + $0x8] sm:$0xff] %v1817
                %v1819 = vld [vmem:[%s1799 + $0x28] sm:$0xff]
                %1820 = vst [vmem:[%s1800 + $0x28] sm:$0xff] %v1819
                %v1821 = vld [vmem:[%s1799 + $0x48] sm:$0xff]
                %1822 = vst [vmem:[%s1800 + $0x48] sm:$0xff] %v1821
                %v1823 = vld [vmem:[%s1799 + $0x68] sm:$0xff]
                %1824 = vst [vmem:[%s1800 + $0x68] sm:$0xff] %v1823
                %v1825 = vld [vmem:[%s1799 + $0x88] sm:$0xff]
                %1826 = vst [vmem:[%s1800 + $0x88] sm:$0xff] %v1825
                %v1827 = vld [vmem:[%s1799 + $0xa8] sm:$0xff]
                %1828 = vst [vmem:[%s1800 + $0xa8] sm:$0xff] %v1827
                %v1829 = vld [vmem:[%s1799 + $0xc8] sm:$0xff]
                %1830 = vst [vmem:[%s1800 + $0xc8] sm:$0xff] %v1829
                %v1831 = vld [vmem:[%s1799 + $0xe8] sm:$0xff]
                %1832 = vst [vmem:[%s1800 + $0xe8] sm:$0xff] %v1831
                %v1833 = vld [vmem:[%s1799 + $0x10] sm:$0xff]
                %1834 = vst [vmem:[%s1800 + $0x10] sm:$0xff] %v1833
                %v1835 = vld [vmem:[%s1799 + $0x30] sm:$0xff]
                %1836 = vst [vmem:[%s1800 + $0x30] sm:$0xff] %v1835
                %v1837 = vld [vmem:[%s1799 + $0x50] sm:$0xff]
                %1838 = vst [vmem:[%s1800 + $0x50] sm:$0xff] %v1837
                %v1839 = vld [vmem:[%s1799 + $0x70] sm:$0xff]
                %1840 = vst [vmem:[%s1800 + $0x70] sm:$0xff] %v1839
                %v1841 = vld [vmem:[%s1799 + $0x90] sm:$0xff]
                %1842 = vst [vmem:[%s1800 + $0x90] sm:$0xff] %v1841
                %v1843 = vld [vmem:[%s1799 + $0xb0] sm:$0xff]
                %1844 = vst [vmem:[%s1800 + $0xb0] sm:$0xff] %v1843
                %v1845 = vld [vmem:[%s1799 + $0xd0] sm:$0xff]
                %1846 = vst [vmem:[%s1800 + $0xd0] sm:$0xff] %v1845
                %v1847 = vld [vmem:[%s1799 + $0xf0] sm:$0xff]
                %1848 = vst [vmem:[%s1800 + $0xf0] sm:$0xff] %v1847
                %v1849 = vld [vmem:[%s1799 + $0x18] sm:$0xff]
                %1850 = vst [vmem:[%s1800 + $0x18] sm:$0xff] %v1849
                %v1851 = vld [vmem:[%s1799 + $0x38] sm:$0xff]
                %1852 = vst [vmem:[%s1800 + $0x38] sm:$0xff] %v1851
                %v1853 = vld [vmem:[%s1799 + $0x58] sm:$0xff]
                %1854 = vst [vmem:[%s1800 + $0x58] sm:$0xff] %v1853
                %v1855 = vld [vmem:[%s1799 + $0x78] sm:$0xff]
                %1856 = vst [vmem:[%s1800 + $0x78] sm:$0xff] %v1855
                %v1857 = vld [vmem:[%s1799 + $0x98] sm:$0xff]
                %1858 = vst [vmem:[%s1800 + $0x98] sm:$0xff] %v1857
                %v1859 = vld [vmem:[%s1799 + $0xb8] sm:$0xff]
                %1860 = vst [vmem:[%s1800 + $0xb8] sm:$0xff] %v1859
                %v1861 = vld [vmem:[%s1799 + $0xd8] sm:$0xff]
                %1862 = vst [vmem:[%s1800 + $0xd8] sm:$0xff] %v1861
                %v1863 = vld [vmem:[%s1799 + $0xf8] sm:$0xff]
                %1864 = vst [vmem:[%s1800 + $0xf8] sm:$0xff] %v1863
                %s1865 = sadd.s32 1, %s1798
                %p1866 = scmp.ge.s32.totalorder %s1865, %s1791
                %s1867 = scalar_select %p1866, 0, %s1865
                %s1868 = smul.u32 %s1867, 256
                %s1869 = smul.u32 %s1867, 256
                %s1870 = scalar_lea.vmem %s1772, %s1868 [#allocation12]
                %s1871 = scalar_lea.vmem %s1785, %s1869
              $region122: #{mlp_forward.1} parent=116 // loop_footer
                %s1795 = sadd.s32 %s1793, 1
              $region123: #{mlp_forward.1} parent=116 // loop_footer_branch
                %1792 = sbr.rel target = $region119
              $region124: #{mlp_forward.1} parent=116 // loop_exit
                _
              %s1872 = sshrl.u32 %s1779, 3
              %s1873 = sand.u32 %s1779, 7
              %s1874 = smul.u32 %s1872, 8
              %s1875 = smul.u32 32, %s1874
              %s1876 = scalar_lea.vmem %s1772, %s1875 [#allocation12]
              %s1877 = smul.u32 32, %s1874
              %s1878 = scalar_lea.vmem %s1785, %s1877
              // While loop
              $region125: #{mlp_forward.1} parent=116 // loop_pre_header
                _
              $region126: #{mlp_forward.1} parent=116 // loop_header
                %s1880 = sphi 0, %s1882
                %p1881 = scmp.ge.s32.totalorder %s1880, %s1873
                %s1885 = sphi 0, %s1898
                %s1886 = sphi %s1876, %s1901
                %s1887 = sphi %s1878, %s1902
              $region127: #{mlp_forward.1} parent=116 // loop_header_branch
                %1884 = sbr.rel (%p1881) target = $region131
              $region128: #{mlp_forward.1} parent=116 // loop_body
                %v1888 = vld [vmem:[%s1886] sm:$0xff]
                %1889 = vst [vmem:[%s1887] sm:$0xff] %v1888
                %v1890 = vld [vmem:[%s1886 + $0x8] sm:$0xff]
                %1891 = vst [vmem:[%s1887 + $0x8] sm:$0xff] %v1890
                %v1892 = vld [vmem:[%s1886 + $0x10] sm:$0xff]
                %1893 = vst [vmem:[%s1887 + $0x10] sm:$0xff] %v1892
                %v1894 = vld [vmem:[%s1886 + $0x18] sm:$0xff]
                %1895 = vst [vmem:[%s1887 + $0x18] sm:$0xff] %v1894
                %s1896 = sadd.s32 1, %s1885
                %p1897 = scmp.ge.s32.totalorder %s1896, %s1873
                %s1898 = scalar_select %p1897, 0, %s1896
                %s1899 = smul.u32 %s1898, 32
                %s1900 = smul.u32 %s1898, 32
                %s1901 = scalar_lea.vmem %s1876, %s1899 [#allocation12]
                %s1902 = scalar_lea.vmem %s1878, %s1900
              $region129: #{mlp_forward.1} parent=116 // loop_footer
                %s1882 = sadd.s32 %s1880, 1
              $region130: #{mlp_forward.1} parent=116 // loop_footer_branch
                %1879 = sbr.rel target = $region126
              $region131: #{mlp_forward.1} parent=116 // loop_exit
                _
            $region117: #{mlp_forward.1} parent=112 // pred_fallthru
              _
            // Predicated region
            $region132: #{mlp_forward.1} parent=112 // pred_check
              _
            $region133: #{mlp_forward.1} parent=112 // pred_check_branch
              %1904 = sbr.rel target = $region135
            $region134: #{mlp_forward.1} parent=112 // pred_region
              _
            $region135: #{mlp_forward.1} parent=112 // pred_fallthru
              _
          $region113: #{mlp_forward.1} parent=108 // pred_fallthru
            _
          %1905 = vnop
        $region109: #{mlp_forward.1} parent=73 // pred_fallthru
          _
      $region74: #{mlp_forward.1} parent=5 // pred_fallthru
        _
      %p1906 = scmp.le.s32.totalorder 2, %s17
      // Predicated region
      $region136: #{mlp_forward.1} parent=5 // pred_check
        %p1907 = pneg %p1906
      $region137: #{mlp_forward.1} parent=5 // pred_check_branch
        %1909 = sbr.rel (%p1907) target = $region139
      $region138: #{mlp_forward.1} parent=5 // pred_region
        %s1910 = ssub.s32 %s17, 2
        // Predicated region
        $region140: #{mlp_forward.1} parent=138 // pred_check
          %p1911 = pneg %p198
        $region141: #{mlp_forward.1} parent=138 // pred_check_branch
          %1913 = sbr.rel (%p1911) target = $region143
        $region142: #{mlp_forward.1} parent=138 // pred_region
          %s1914 = sand.u32 %s183, 1
          %s1915 = sand.u32 %s183, 1
          %s1916 = smul.addr %s1915, 256
          %s1917 = scalar_lea.vmem [#allocation12], %s1916
        $region143: #{mlp_forward.1} parent=138 // pred_fallthru
          _
      $region139: #{mlp_forward.1} parent=5 // pred_fallthru
        _
    $region6: #{mlp_forward.1} parent=1 // loop_footer
      %s21 = sadd.s32 1, %s17
    $region7: #{mlp_forward.1} parent=1 // loop_footer_branch
      %16 = sbr.rel target = $region3
    $region8: #{mlp_forward.1} parent=1 // loop_exit
      _
    %1918 = vsyncpa [#allocation4], 1
    %s1919 = scalar_lea.sflag [#allocation4], 1
    %1920 = vsyncpa %s1919, 1
    %1921 = vsyncpa [#allocation6], 1
    %1922 = vsyncpa [#allocation9], 1

</llo_original>
